<compile_context>
chip_gen: v5e
topology: v5e:2x2
jax: 0.10.0
libtpu: 0.0.40
codegen_flags: <defaults>
</compile_context>

<pallas_src>
import functools

import jax
import jax.numpy as jnp
from jax.experimental import pallas as pl
from jax.experimental.pallas import tpu as pltpu

KH = KW = 7
PAD = 3
CIN = 3
COUT = 8
EPS = 1e-6  # nn.PairwiseDistance default eps, added to the difference


def _round_up(x, m):
    return (x + m - 1) // m * m


def _pa_kernel(xp_ref, band_ref, bias_ref, o_ref, prev_ref, *, H, Wpad):
    """One grid step = conv features of ONE frame + distance vs. previous frame.

    xp_ref:   (1, 1, Hpad, Kpad)      zero-haloed frame, channels folded into
                                      the lane axis (bf16)
    band_ref: (KH, Kpad, COUT*Wpad)   banded conv weights, one block per ky (bf16)
    bias_ref: (1, COUT*Wpad)          conv bias broadcast per output column (f32)
    o_ref:    (1, 1, H, Wpad)         PA output for frame pair (t-1, t)
    prev_ref: (H, COUT*Wpad) VMEM     previous frame's features (carry, f32)
    """
    t = pl.program_id(1)
    CWpad = COUT * Wpad

    # Conv(3->8, 7x7, pad 3) for this frame: KH MXU matmuls, one per ky tap.
    # LHS is the narrow sublane-shifted (H, Kpad) slice; RHS is (Kpad, CWpad).
    acc = jnp.dot(xp_ref[0, 0, pl.ds(0, H), :], band_ref[0],
                  preferred_element_type=jnp.float32)
    for ky in range(1, KH):
        acc = acc + jnp.dot(xp_ref[0, 0, pl.ds(ky, H), :], band_ref[ky],
                            preferred_element_type=jnp.float32)
    cur = acc + bias_ref[...]                       # (H, COUT*Wpad) f32

    # Pairwise L2 distance against the carried previous frame.  Channel slices
    # are 128-lane aligned (Wpad % 128 == 0) -> 7 VPU adds, sqrt on the EUP.
    @pl.when(t > 0)
    def _():
        diff = prev_ref[...] - cur + EPS
        sq = diff * diff
        s = sq[:, 0:Wpad]
        for co in range(1, COUT):
            s = s + sq[:, co * Wpad:(co + 1) * Wpad]
        o_ref[0, 0] = jnp.sqrt(s)                   # full-lane (H, Wpad) store

    prev_ref[...] = cur
    del CWpad


@functools.partial(jax.jit, static_argnames=("n_length",))
def pa_forward(x, weight, bias, n_length):
    """x: (B, n_length*3, H, W) f32 (NCHW); weight: (8,3,7,7); bias: (8,)."""
    B = x.shape[0]
    H, W = x.shape[-2], x.shape[-1]
    T = n_length
    assert x.shape[1] == T * CIN, x.shape

    Hp = H + 2 * PAD
    Wp = W + 2 * PAD
    Hpad = _round_up(Hp, 8)                 # sublane-aligned frame slab
    Kraw = CIN * Wp
    Kpad = _round_up(Kraw, 128)             # full-width MXU contraction
    Wpad = _round_up(W, 128)                # lane-dense features / output
    CWpad = COUT * Wpad

    # ---- one-time, input-sized operand prep (pure JAX, outside the kernel) ---
    # Fold channels next to W (the lane axis), add the zero conv halo, pad to
    # aligned (Hpad, Kpad) per frame, cast to bf16 for the MXU.
    xf = x.reshape(B, T, CIN, H, W)
    xf = jnp.transpose(xf, (0, 1, 3, 2, 4))                       # (B,T,H,CIN,W)
    xf = jnp.pad(xf, ((0, 0),) * 4 + ((PAD, PAD),))               # pad W halo
    xf = xf.reshape(B, T, H, Kraw)
    xf = jnp.pad(xf, ((0, 0), (0, 0), (PAD, Hpad - H - PAD), (0, Kpad - Kraw)))
    xf = xf.astype(jnp.bfloat16)                                  # (B,T,Hpad,Kpad)

    # Banded conv-weight matrix, split per ky:
    #   band[ky, ci*Wp + (w+kx), co*Wpad + w] = weight[co, ci, ky, kx]
    shift = jax.nn.one_hot(jnp.arange(W)[None, :] + jnp.arange(KW)[:, None],
                           Wp, dtype=jnp.float32)                 # (KW, W, Wp)
    band = jnp.einsum('ocyk,kwp->ycpow', weight.astype(jnp.float32), shift)
    band = band.reshape(KH, Kraw, COUT, W)
    band = jnp.pad(band, ((0, 0), (0, Kpad - Kraw), (0, 0), (0, Wpad - W)))
    band = band.reshape(KH, Kpad, CWpad).astype(jnp.bfloat16)

    # Bias per output column (co*Wpad + w).
    bias_row = jnp.repeat(bias.astype(jnp.float32), Wpad).reshape(1, CWpad)

    # VMEM budget from actual block sizes (+ headroom for compiler temporaries).
    blk_bytes = (2 * Hpad * Kpad * 2          # frame input, double-buffered
                 + 2 * KH * Kpad * CWpad * 2  # band (invariant; dbl-buffered)
                 + 2 * CWpad * 4              # bias
                 + 2 * H * Wpad * 4           # output block
                 + H * CWpad * 4)             # previous-frame carry scratch
    vmem_limit = int(min(max(blk_bytes + 8 * H * CWpad * 4 + (2 << 20),
                             16 << 20), 56 << 20))

    kernel = functools.partial(_pa_kernel, H=H, Wpad=Wpad)

    grid_spec = pltpu.PrefetchScalarGridSpec(
        num_scalar_prefetch=0,
        grid=(B, T),
        in_specs=[
            pl.BlockSpec((1, 1, Hpad, Kpad), lambda b, t: (b, t, 0, 0)),
            pl.BlockSpec((KH, Kpad, CWpad), lambda b, t: (0, 0, 0)),
            pl.BlockSpec((1, CWpad), lambda b, t: (0, 0)),
        ],
        out_specs=pl.BlockSpec(
            (1, 1, H, Wpad), lambda b, t: (b, jnp.maximum(t - 1, 0), 0, 0)),
        scratch_shapes=[pltpu.VMEM((H, CWpad), jnp.float32)],
    )

    out_pad = pl.pallas_call(
        kernel,
        out_shape=jax.ShapeDtypeStruct((B, T - 1, H, Wpad), jnp.float32),
        grid_spec=grid_spec,
        compiler_params=pltpu.CompilerParams(
            dimension_semantics=("parallel", "arbitrary"),
            vmem_limit_bytes=vmem_limit),
    )(xf, band, bias_row)

    return out_pad[..., :W]                       # drop the lane padding


def _reference(x, weight, bias, n_length):
    """Pure-JAX f32 reference mirroring the PyTorch forward."""
    B = x.shape[0]
    H, W = x.shape[-2], x.shape[-1]
    frames = x.reshape(B * n_length, CIN, H, W)
    conv = jax.lax.conv_general_dilated(
        frames, weight, window_strides=(1, 1),
        padding=((PAD, PAD), (PAD, PAD)),
        dimension_numbers=("NCHW", "OIHW", "NCHW"))
    conv = conv + bias.reshape(1, COUT, 1, 1)
    feats = conv.reshape(B, n_length, COUT, H * W)
    diffs = feats[:, :-1] - feats[:, 1:] + EPS                    # (B,T-1,8,H*W)
    d = jnp.sqrt(jnp.sum(diffs * diffs, axis=2))                  # (B,T-1,H*W)
    return d.reshape(B, n_length - 1, H, W)


if __name__ == "__main__":
    B, n_length, H, W = 2, 4, 16, 16

    key = jax.random.PRNGKey(0)
    k_x, k_w = jax.random.split(key)
    x = jax.random.normal(k_x, (B, n_length * CIN, H, W), jnp.float32)
    # nn.init.normal_(weight, 0, 0.001); nn.init.constant_(bias, 0)
    weight = 0.001 * jax.random.normal(k_w, (COUT, CIN, KH, KW), jnp.float32)
    bias = jnp.zeros((COUT,), jnp.float32)

    out = jax.block_until_ready(pa_forward(x, weight, bias, n_length))
    assert out.shape == (B, n_length - 1, H, W), out.shape

    ref = _reference(x, weight, bias, n_length)
    err = float(jnp.max(jnp.abs(out - ref)))
    # bf16 MXU inputs, f32 accumulation -> small relative error vs f32 reference
    assert bool(jnp.allclose(out, ref, rtol=2e-2, atol=1e-3)), err

    print("KERNEL_OK")
</pallas_src>

<mosaic_0001>
module attributes {stable_mosaic.version = 11 : i64} {
  func.func @_pa_kernel(%arg0: i32, %arg1: i32, %arg2: memref<1x1x24x128xbf16, #tpu.memory_space<vmem>>, %arg3: memref<7x128x1024xbf16, #tpu.memory_space<vmem>>, %arg4: memref<1x1024xf32, #tpu.memory_space<vmem>>, %arg5: memref<1x1x16x128xf32, #tpu.memory_space<vmem>>, %arg6: memref<16x1024xf32, #tpu.memory_space<vmem>>) attributes {dimension_semantics = [#tpu.dimension_semantics<parallel>, #tpu.dimension_semantics<arbitrary>], iteration_bounds = array<i64: 2, 4>, scalar_prefetch = 0 : i64, scratch_operands = 1 : i64, tpu.core_type = #tpu.core_type<tc>, window_params = [{transform_indices = @transform_0, window_bounds = array<i64: 1, 1, 24, 128>}, {pipeline_mode = #tpu.pipeline_mode<synchronous>, transform_indices = @transform_1, window_bounds = array<i64: 7, 128, 1024>}, {pipeline_mode = #tpu.pipeline_mode<synchronous>, transform_indices = @transform_2, window_bounds = array<i64: 1, 1024>}, {transform_indices = @transform_3, window_bounds = array<i64: 1, 1, 16, 128>}]} {
    %c0 = arith.constant 0 : index
    %c0_0 = arith.constant 0 : index
    %c0_1 = arith.constant 0 : index
    %c0_2 = arith.constant 0 : index
    %0 = vector.load %arg2[%c0, %c0_0, %c0_1, %c0_2] : memref<1x1x24x128xbf16, #tpu.memory_space<vmem>>, vector<1x1x16x128xbf16>
    %1 = vector.shape_cast %0 : vector<1x1x16x128xbf16> to vector<16x128xbf16>
    %c0_3 = arith.constant 0 : index
    %c0_4 = arith.constant 0 : index
    %c0_5 = arith.constant 0 : index
    %2 = vector.load %arg3[%c0_3, %c0_4, %c0_5] : memref<7x128x1024xbf16, #tpu.memory_space<vmem>>, vector<1x128x1024xbf16>
    %3 = vector.shape_cast %2 : vector<1x128x1024xbf16> to vector<128x1024xbf16>
    %cst = arith.constant dense<0.000000e+00> : vector<16x1024xf32>
    %4 = tpu.matmul %1, %3, %cst {dimension_numbers = #tpu.dot_dimension_numbers<[1], [0], [0], [1], [0, 0, 1, 1], [], []>} : vector<16x128xbf16>, vector<128x1024xbf16>, vector<16x1024xf32> -> vector<16x1024xf32>
    %c0_6 = arith.constant 0 : index
    %c0_7 = arith.constant 0 : index
    %c1 = arith.constant 1 : index
    %c0_8 = arith.constant 0 : index
    %5 = vector.load %arg2[%c0_6, %c0_7, %c1, %c0_8] : memref<1x1x24x128xbf16, #tpu.memory_space<vmem>>, vector<1x1x16x128xbf16>
    %6 = vector.shape_cast %5 : vector<1x1x16x128xbf16> to vector<16x128xbf16>
    %c1_9 = arith.constant 1 : index
    %c0_10 = arith.constant 0 : index
    %c0_11 = arith.constant 0 : index
    %7 = vector.load %arg3[%c1_9, %c0_10, %c0_11] : memref<7x128x1024xbf16, #tpu.memory_space<vmem>>, vector<1x128x1024xbf16>
    %8 = vector.shape_cast %7 : vector<1x128x1024xbf16> to vector<128x1024xbf16>
    %cst_12 = arith.constant dense<0.000000e+00> : vector<16x1024xf32>
    %9 = tpu.matmul %6, %8, %cst_12 {dimension_numbers = #tpu.dot_dimension_numbers<[1], [0], [0], [1], [0, 0, 1, 1], [], []>} : vector<16x128xbf16>, vector<128x1024xbf16>, vector<16x1024xf32> -> vector<16x1024xf32>
    %10 = arith.addf %4, %9 : vector<16x1024xf32>
    %c0_13 = arith.constant 0 : index
    %c0_14 = arith.constant 0 : index
    %c2 = arith.constant 2 : index
    %c0_15 = arith.constant 0 : index
    %11 = vector.load %arg2[%c0_13, %c0_14, %c2, %c0_15] : memref<1x1x24x128xbf16, #tpu.memory_space<vmem>>, vector<1x1x16x128xbf16>
    %12 = vector.shape_cast %11 : vector<1x1x16x128xbf16> to vector<16x128xbf16>
    %c2_16 = arith.constant 2 : index
    %c0_17 = arith.constant 0 : index
    %c0_18 = arith.constant 0 : index
    %13 = vector.load %arg3[%c2_16, %c0_17, %c0_18] : memref<7x128x1024xbf16, #tpu.memory_space<vmem>>, vector<1x128x1024xbf16>
    %14 = vector.shape_cast %13 : vector<1x128x1024xbf16> to vector<128x1024xbf16>
    %cst_19 = arith.constant dense<0.000000e+00> : vector<16x1024xf32>
    %15 = tpu.matmul %12, %14, %cst_19 {dimension_numbers = #tpu.dot_dimension_numbers<[1], [0], [0], [1], [0, 0, 1, 1], [], []>} : vector<16x128xbf16>, vector<128x1024xbf16>, vector<16x1024xf32> -> vector<16x1024xf32>
    %16 = arith.addf %10, %15 : vector<16x1024xf32>
    %c0_20 = arith.constant 0 : index
    %c0_21 = arith.constant 0 : index
    %c3 = arith.constant 3 : index
    %c0_22 = arith.constant 0 : index
    %17 = vector.load %arg2[%c0_20, %c0_21, %c3, %c0_22] : memref<1x1x24x128xbf16, #tpu.memory_space<vmem>>, vector<1x1x16x128xbf16>
    %18 = vector.shape_cast %17 : vector<1x1x16x128xbf16> to vector<16x128xbf16>
    %c3_23 = arith.constant 3 : index
    %c0_24 = arith.constant 0 : index
    %c0_25 = arith.constant 0 : index
    %19 = vector.load %arg3[%c3_23, %c0_24, %c0_25] : memref<7x128x1024xbf16, #tpu.memory_space<vmem>>, vector<1x128x1024xbf16>
    %20 = vector.shape_cast %19 : vector<1x128x1024xbf16> to vector<128x1024xbf16>
    %cst_26 = arith.constant dense<0.000000e+00> : vector<16x1024xf32>
    %21 = tpu.matmul %18, %20, %cst_26 {dimension_numbers = #tpu.dot_dimension_numbers<[1], [0], [0], [1], [0, 0, 1, 1], [], []>} : vector<16x128xbf16>, vector<128x1024xbf16>, vector<16x1024xf32> -> vector<16x1024xf32>
    %22 = arith.addf %16, %21 : vector<16x1024xf32>
    %c0_27 = arith.constant 0 : index
    %c0_28 = arith.constant 0 : index
    %c4 = arith.constant 4 : index
    %c0_29 = arith.constant 0 : index
    %23 = vector.load %arg2[%c0_27, %c0_28, %c4, %c0_29] : memref<1x1x24x128xbf16, #tpu.memory_space<vmem>>, vector<1x1x16x128xbf16>
    %24 = vector.shape_cast %23 : vector<1x1x16x128xbf16> to vector<16x128xbf16>
    %c4_30 = arith.constant 4 : index
    %c0_31 = arith.constant 0 : index
    %c0_32 = arith.constant 0 : index
    %25 = vector.load %arg3[%c4_30, %c0_31, %c0_32] : memref<7x128x1024xbf16, #tpu.memory_space<vmem>>, vector<1x128x1024xbf16>
    %26 = vector.shape_cast %25 : vector<1x128x1024xbf16> to vector<128x1024xbf16>
    %cst_33 = arith.constant dense<0.000000e+00> : vector<16x1024xf32>
    %27 = tpu.matmul %24, %26, %cst_33 {dimension_numbers = #tpu.dot_dimension_numbers<[1], [0], [0], [1], [0, 0, 1, 1], [], []>} : vector<16x128xbf16>, vector<128x1024xbf16>, vector<16x1024xf32> -> vector<16x1024xf32>
    %28 = arith.addf %22, %27 : vector<16x1024xf32>
    %c0_34 = arith.constant 0 : index
    %c0_35 = arith.constant 0 : index
    %c5 = arith.constant 5 : index
    %c0_36 = arith.constant 0 : index
    %29 = vector.load %arg2[%c0_34, %c0_35, %c5, %c0_36] : memref<1x1x24x128xbf16, #tpu.memory_space<vmem>>, vector<1x1x16x128xbf16>
    %30 = vector.shape_cast %29 : vector<1x1x16x128xbf16> to vector<16x128xbf16>
    %c5_37 = arith.constant 5 : index
    %c0_38 = arith.constant 0 : index
    %c0_39 = arith.constant 0 : index
    %31 = vector.load %arg3[%c5_37, %c0_38, %c0_39] : memref<7x128x1024xbf16, #tpu.memory_space<vmem>>, vector<1x128x1024xbf16>
    %32 = vector.shape_cast %31 : vector<1x128x1024xbf16> to vector<128x1024xbf16>
    %cst_40 = arith.constant dense<0.000000e+00> : vector<16x1024xf32>
    %33 = tpu.matmul %30, %32, %cst_40 {dimension_numbers = #tpu.dot_dimension_numbers<[1], [0], [0], [1], [0, 0, 1, 1], [], []>} : vector<16x128xbf16>, vector<128x1024xbf16>, vector<16x1024xf32> -> vector<16x1024xf32>
    %34 = arith.addf %28, %33 : vector<16x1024xf32>
    %c0_41 = arith.constant 0 : index
    %c0_42 = arith.constant 0 : index
    %c6 = arith.constant 6 : index
    %c0_43 = arith.constant 0 : index
    %35 = vector.load %arg2[%c0_41, %c0_42, %c6, %c0_43] : memref<1x1x24x128xbf16, #tpu.memory_space<vmem>>, vector<1x1x16x128xbf16>
    %36 = vector.shape_cast %35 : vector<1x1x16x128xbf16> to vector<16x128xbf16>
    %c6_44 = arith.constant 6 : index
    %c0_45 = arith.constant 0 : index
    %c0_46 = arith.constant 0 : index
    %37 = vector.load %arg3[%c6_44, %c0_45, %c0_46] : memref<7x128x1024xbf16, #tpu.memory_space<vmem>>, vector<1x128x1024xbf16>
    %38 = vector.shape_cast %37 : vector<1x128x1024xbf16> to vector<128x1024xbf16>
    %cst_47 = arith.constant dense<0.000000e+00> : vector<16x1024xf32>
    %39 = tpu.matmul %36, %38, %cst_47 {dimension_numbers = #tpu.dot_dimension_numbers<[1], [0], [0], [1], [0, 0, 1, 1], [], []>} : vector<16x128xbf16>, vector<128x1024xbf16>, vector<16x1024xf32> -> vector<16x1024xf32>
    %40 = arith.addf %34, %39 : vector<16x1024xf32>
    %c0_48 = arith.constant 0 : index
    %c0_49 = arith.constant 0 : index
    %41 = vector.load %arg4[%c0_48, %c0_49] : memref<1x1024xf32, #tpu.memory_space<vmem>>, vector<1x1024xf32>
    %42 = vector.broadcast %41 : vector<1x1024xf32> to vector<16x1024xf32>
    %43 = arith.addf %40, %42 : vector<16x1024xf32>
    %c0_i32 = arith.constant 0 : i32
    %44 = arith.cmpi sgt, %arg1, %c0_i32 : i32
    %45 = arith.extui %44 : i1 to i32
    %c0_i32_50 = arith.constant 0 : i32
    %46 = arith.cmpi ne, %45, %c0_i32_50 : i32
    scf.if %46 {
      %c0_53 = arith.constant 0 : index
      %c0_54 = arith.constant 0 : index
      %48 = vector.load %arg6[%c0_53, %c0_54] : memref<16x1024xf32, #tpu.memory_space<vmem>>, vector<16x1024xf32>
      %49 = arith.subf %48, %43 : vector<16x1024xf32>
      %cst_55 = arith.constant 9.99999997E-7 : f32
      %50 = vector.broadcast %cst_55 : f32 to vector<16x1024xf32>
      %51 = arith.addf %49, %50 : vector<16x1024xf32>
      %52 = arith.mulf %51, %51 : vector<16x1024xf32>
      %53 = vector.extract_strided_slice %52 {offsets = [0, 0], sizes = [16, 128], strides = [1, 1]} : vector<16x1024xf32> to vector<16x128xf32>
      %54 = vector.extract_strided_slice %52 {offsets = [0, 128], sizes = [16, 128], strides = [1, 1]} : vector<16x1024xf32> to vector<16x128xf32>
      %55 = arith.addf %53, %54 : vector<16x128xf32>
      %56 = vector.extract_strided_slice %52 {offsets = [0, 256], sizes = [16, 128], strides = [1, 1]} : vector<16x1024xf32> to vector<16x128xf32>
      %57 = arith.addf %55, %56 : vector<16x128xf32>
      %58 = vector.extract_strided_slice %52 {offsets = [0, 384], sizes = [16, 128], strides = [1, 1]} : vector<16x1024xf32> to vector<16x128xf32>
      %59 = arith.addf %57, %58 : vector<16x128xf32>
      %60 = vector.extract_strided_slice %52 {offsets = [0, 512], sizes = [16, 128], strides = [1, 1]} : vector<16x1024xf32> to vector<16x128xf32>
      %61 = arith.addf %59, %60 : vector<16x128xf32>
      %62 = vector.extract_strided_slice %52 {offsets = [0, 640], sizes = [16, 128], strides = [1, 1]} : vector<16x1024xf32> to vector<16x128xf32>
      %63 = arith.addf %61, %62 : vector<16x128xf32>
      %64 = vector.extract_strided_slice %52 {offsets = [0, 768], sizes = [16, 128], strides = [1, 1]} : vector<16x1024xf32> to vector<16x128xf32>
      %65 = arith.addf %63, %64 : vector<16x128xf32>
      %66 = vector.extract_strided_slice %52 {offsets = [0, 896], sizes = [16, 128], strides = [1, 1]} : vector<16x1024xf32> to vector<16x128xf32>
      %67 = arith.addf %65, %66 : vector<16x128xf32>
      %68 = math.sqrt %67 : vector<16x128xf32>
      %c0_56 = arith.constant 0 : index
      %c0_57 = arith.constant 0 : index
      %c0_58 = arith.constant 0 : index
      %c0_59 = arith.constant 0 : index
      %69 = vector.load %arg5[%c0_56, %c0_57, %c0_58, %c0_59] : memref<1x1x16x128xf32, #tpu.memory_space<vmem>>, vector<1x1x16x128xf32>
      %70 = vector.shape_cast %69 : vector<1x1x16x128xf32> to vector<16x128xf32>
      %71 = vector.shape_cast %68 : vector<16x128xf32> to vector<1x1x16x128xf32>
      tpu.vector_store %arg5[%c0_56, %c0_57, %c0_58, %c0_59], %71 {strides = array<i32>} : memref<1x1x16x128xf32, #tpu.memory_space<vmem>>, vector<1x1x16x128xf32>,
    } else {
    }
    %c0_51 = arith.constant 0 : index
    %c0_52 = arith.constant 0 : index
    %47 = vector.load %arg6[%c0_51, %c0_52] : memref<16x1024xf32, #tpu.memory_space<vmem>>, vector<16x1024xf32>
    tpu.vector_store %arg6[%c0_51, %c0_52], %43 {strides = array<i32>} : memref<16x1024xf32, #tpu.memory_space<vmem>>, vector<16x1024xf32>,
    return
  }
  func.func @transform_0(%arg0: i32, %arg1: i32) -> (i32, i32, i32, i32) {
    %c0_i32 = arith.constant 0 : i32
    %c0_i32_0 = arith.constant 0 : i32
    %c0_i32_1 = arith.constant 0 : i32
    return %arg0, %arg1, %c0_i32, %c0_i32_0 : i32, i32, i32, i32
  }
  func.func @transform_1(%arg0: i32, %arg1: i32) -> (i32, i32, i32) {
    %c0_i32 = arith.constant 0 : i32
    %c0_i32_0 = arith.constant 0 : i32
    %c0_i32_1 = arith.constant 0 : i32
    %c0_i32_2 = arith.constant 0 : i32
    return %c0_i32, %c0_i32_0, %c0_i32_1 : i32, i32, i32
  }
  func.func @transform_2(%arg0: i32, %arg1: i32) -> (i32, i32) {
    %c0_i32 = arith.constant 0 : i32
    %c0_i32_0 = arith.constant 0 : i32
    %c0_i32_1 = arith.constant 0 : i32
    return %c0_i32, %c0_i32_0 : i32, i32
  }
  func.func @transform_3(%arg0: i32, %arg1: i32) -> (i32, i32, i32, i32) {
    %c1_i32 = arith.constant 1 : i32
    %0 = arith.subi %arg1, %c1_i32 : i32
    %c0_i32 = arith.constant 0 : i32
    %1 = arith.maxsi %0, %c0_i32 : i32
    %c0_i32_0 = arith.constant 0 : i32
    %c0_i32_1 = arith.constant 0 : i32
    %c0_i32_2 = arith.constant 0 : i32
    return %arg0, %1, %c0_i32_0, %c0_i32_1 : i32, i32, i32, i32
  }
}

</mosaic_0001>

<llo_original>
// kernel: pa_forward.1
$region0: #{pa_forward.1}
  #allocation0 [shape = 'u32[]', space=smem, size = 0x4, offset = 0x4, fixed_abs, tag = 'smem constant byte address 0x4 - core index']
  #allocation1 [shape = 'u32[72,128]{1,0:T(1,128)}', space=vmem, size = 0x9000, scoped, tag = 'internal scratch']
  #allocation2 [shape = 'f32[16,1024]{1,0:T(8,128)}', space=vmem, size = 0x10000, scoped, tag = 'scratch operand']
  %s0 = inlined_call_operand.vmem [shape: bf16[2,4,24,128], index: 0, kind: input, shape index: {}]
  %s1 = inlined_call_operand.vmem [shape: bf16[7,128,1024], index: 1, kind: input, shape index: {}]
  %s2 = inlined_call_operand.vmem [shape: f32[1,1024], index: 2, kind: input, shape index: {}]
  %s3 = inlined_call_operand.hbm [shape: f32[2,3,16,128], index: 3, kind: output, shape index: {}]
  %s4 = sld [smem:[#allocation0]]
  $region49: #{pa_forward.1} parent=0
    _
  %s6 = ssub.s32 1, %s4
  %s7 = scalar_select 0, %s6, %s4
  $region1: #{pa_forward.1} parent=0
    #allocation3 [shape = 'u8[16384]{0}', space=vmem, size = 0x4000, scoped, tag = 'output window, operand 0']
    #allocation4 [shape = 's32[2]{0}', space=sflag, size = 0x8, scoped, tag = 'scoped memory for pa_forward.1']
    %8 = vsyncpa [#allocation4], 0
    %s9 = scalar_lea.sflag [#allocation4], 1
    %10 = vsyncpa %s9, 0
    loop: start=0, step=1, limit=10
    $region2: #{pa_forward.1} parent=1 // loop_pre_header
      _
    $region3: #{pa_forward.1} parent=1 // loop_header
      %s12 = sphi 0, %s16
      %p13 = scmp.ge.s32.totalorder %s12, 10
      %s19 = sphi 0, %s31
      %s20 = sphi 0, %s27
      %s21 = sphi 0, %s19
      %s22 = sphi 0, %s20
      %s23 = sphi 0, %s21
      %s24 = sphi 0, %s22
      %s36 = sphi 0, %s38
      %s39 = sphi 0, %s36
      %s40 = sphi 0, %s39
      %s56 = sphi 0, %s40
      %s60 = sphi 0, %s60
      %s62 = sphi 0, %s60
      %s63 = sphi 0, %s62
      %s77 = sphi 0, %s63
      %s81 = sphi 0, %s81
      %s83 = sphi 0, %s81
      %s84 = sphi 0, %s83
      %s98 = sphi 0, %s84
      %s112 = sphi 0, %s114
      %s115 = sphi 0, %s112
      %s116 = sphi 0, %s115
      %s132 = sphi 0, %s116
    $region4: #{pa_forward.1} parent=1 // loop_header_branch
      %15 = sbr.rel (%p13) target = $region8
    $region5: #{pa_forward.1} parent=1 // loop_body
      %s17 = ssub.s32 %s12, 1
      %s18 = ssub.s32 %s12, 2
      %s25 = sadd.s32 1, %s20
      %p26 = scmp.ge.s32.totalorder %s25, 4
      %s27 = scalar_select %p26, 0, %s25
      %s28 = sadd.s32 1, %s19
      %s29 = scalar_select %p26, %s28, %s19
      %p30 = scmp.ge.s32.totalorder %s29, 2
      %s31 = scalar_select %p30, 0, %s29
      %s32 = ssub.s32 %s19, %s31
      %s33 = ssub.s32 %s20, %s27
      %s34 = sor.u32 %s32, %s33
      %p35 = scmp.eq.s32.totalorder %s34, 0
      %s37 = sadd.s32 %s36, 1
      %s38 = scalar_select %p35, %s36, %s37
      %p41 = pneg %p35
      %p42 = scmp.eq.s32.totalorder %s12, 7
      %p43 = por %p41, %p42
      %p44 = scmp.ne.s32.totalorder %s36, %s39
      %p45 = scmp.eq.s32.totalorder %s12, 0
      %p46 = por %p44, %p45
      %p47 = scmp.ne.s32.totalorder %s36, %s39
      %p48 = scmp.eq.s32.totalorder %s17, 7
      %p49 = por %p47, %p48
      %p50 = scmp.ne.s32.totalorder %s39, %s40
      %p51 = scmp.eq.s32.totalorder %s17, 0
      %p52 = por %p50, %p51
      %p53 = scmp.ne.s32.totalorder %s39, %s40
      %p54 = scmp.eq.s32.totalorder %s18, 7
      %p55 = por %p53, %p54
      %p57 = scmp.ne.s32.totalorder %s40, %s56
      %p58 = scmp.eq.s32.totalorder %s18, 0
      %p59 = por %p57, %p58
      %s61 = sadd.s32 %s60, 1
      %p64 = scmp.eq.s32.totalorder %s12, 7
      %p65 = scmp.ne.s32.totalorder %s60, %s62
      %p66 = scmp.eq.s32.totalorder %s12, 0
      %p67 = por %p65, %p66
      %p68 = scmp.ne.s32.totalorder %s60, %s62
      %p69 = scmp.eq.s32.totalorder %s17, 7
      %p70 = por %p68, %p69
      %p71 = scmp.ne.s32.totalorder %s62, %s63
      %p72 = scmp.eq.s32.totalorder %s17, 0
      %p73 = por %p71, %p72
      %p74 = scmp.ne.s32.totalorder %s62, %s63
      %p75 = scmp.eq.s32.totalorder %s18, 7
      %p76 = por %p74, %p75
      %p78 = scmp.ne.s32.totalorder %s63, %s77
      %p79 = scmp.eq.s32.totalorder %s18, 0
      %p80 = por %p78, %p79
      %s82 = sadd.s32 %s81, 1
      %p85 = scmp.eq.s32.totalorder %s12, 7
      %p86 = scmp.ne.s32.totalorder %s81, %s83
      %p87 = scmp.eq.s32.totalorder %s12, 0
      %p88 = por %p86, %p87
      %p89 = scmp.ne.s32.totalorder %s81, %s83
      %p90 = scmp.eq.s32.totalorder %s17, 7
      %p91 = por %p89, %p90
      %p92 = scmp.ne.s32.totalorder %s83, %s84
      %p93 = scmp.eq.s32.totalorder %s17, 0
      %p94 = por %p92, %p93
      %p95 = scmp.ne.s32.totalorder %s83, %s84
      %p96 = scmp.eq.s32.totalorder %s18, 7
      %p97 = por %p95, %p96
      %p99 = scmp.ne.s32.totalorder %s84, %s98
      %p100 = scmp.eq.s32.totalorder %s18, 0
      %p101 = por %p99, %p100
      %s102 = ssub.s32 %s20, 1
      %p103 = scmp.gt.s32.totalorder %s102, 0
      %s104 = scalar_select %p103, %s102, 0
      %s105 = ssub.s32 %s27, 1
      %p106 = scmp.gt.s32.totalorder %s105, 0
      %s107 = scalar_select %p106, %s105, 0
      %s108 = ssub.s32 %s19, %s31
      %s109 = ssub.s32 %s104, %s107
      %s110 = sor.u32 %s108, %s109
      %p111 = scmp.eq.s32.totalorder %s110, 0
      %s113 = sadd.s32 %s112, 1
      %s114 = scalar_select %p111, %s112, %s113
      %p117 = pneg %p111
      %p118 = scmp.eq.s32.totalorder %s12, 7
      %p119 = por %p117, %p118
      %p120 = scmp.ne.s32.totalorder %s112, %s115
      %p121 = scmp.eq.s32.totalorder %s12, 0
      %p122 = por %p120, %p121
      %p123 = scmp.ne.s32.totalorder %s112, %s115
      %p124 = scmp.eq.s32.totalorder %s17, 7
      %p125 = por %p123, %p124
      %p126 = scmp.ne.s32.totalorder %s115, %s116
      %p127 = scmp.eq.s32.totalorder %s17, 0
      %p128 = por %p126, %p127
      %p129 = scmp.ne.s32.totalorder %s115, %s116
      %p130 = scmp.eq.s32.totalorder %s18, 7
      %p131 = por %p129, %p130
      %p133 = scmp.ne.s32.totalorder %s116, %s132
      %p134 = scmp.eq.s32.totalorder %s18, 0
      %p135 = por %p133, %p134
      %p136 = scmp.le.s32.totalorder 1, %s12
      %p137 = scmp.lt.s32.totalorder %s12, 9
      %p138 = pnand %p136, %p137
      %p139 = pneg %p138
      // Predicated region
      $region9: #{pa_forward.1} parent=5 // pred_check
        _
      $region10: #{pa_forward.1} parent=5 // pred_check_branch
        %141 = sbr.rel (%p138) target = $region12
      $region11: #{pa_forward.1} parent=5 // pred_region
        %s142 = ssub.s32 %s12, 1
        // Predicated region
        $region13: #{pa_forward.1} parent=11 // pred_check
          %p143 = pneg %p73
        $region14: #{pa_forward.1} parent=11 // pred_check_branch
          %145 = sbr.rel (%p143) target = $region16
        $region15: #{pa_forward.1} parent=11 // pred_region
          _
        $region16: #{pa_forward.1} parent=11 // pred_fallthru
          _
        // Predicated region
        $region17: #{pa_forward.1} parent=11 // pred_check
          %p146 = pneg %p94
        $region18: #{pa_forward.1} parent=11 // pred_check_branch
          %148 = sbr.rel (%p146) target = $region20
        $region19: #{pa_forward.1} parent=11 // pred_region
          _
        $region20: #{pa_forward.1} parent=11 // pred_fallthru
          _
      $region12: #{pa_forward.1} parent=5 // pred_fallthru
        _
      %p149 = scmp.lt.s32.totalorder %s12, 8
      // Predicated region
      $region21: #{pa_forward.1} parent=5 // pred_check
        %p150 = pneg %p149
      $region22: #{pa_forward.1} parent=5 // pred_check_branch
        %152 = sbr.rel (%p150) target = $region24
      $region23: #{pa_forward.1} parent=5 // pred_region
        // Predicated region
        $region25: #{pa_forward.1} parent=23 // pred_check
          %p153 = pneg %p46
        $region26: #{pa_forward.1} parent=23 // pred_check_branch
          %155 = sbr.rel (%p153) target = $region28
        $region27: #{pa_forward.1} parent=23 // pred_region
          %p156 = scmp.lt.s32.totalorder %s19, 1
          %s157 = scalar_select %p156, %s19, 1
          %p158 = scmp.lt.s32.totalorder %s20, 3
          %s159 = scalar_select %p158, %s20, 3
          %s160 = smul.addr %s159, 3
          %s161 = smul.addr %s157, 12
          %s162 = sadd.s32 %s160, %s161
          %s163 = smul.addr %s162, 4
          %s164 = scalar_lea.vmem %s0, %s163
        $region28: #{pa_forward.1} parent=23 // pred_fallthru
          _
      $region24: #{pa_forward.1} parent=5 // pred_fallthru
        _
      %p165 = scmp.le.s32.totalorder 1, %s12
      %p166 = scmp.lt.s32.totalorder %s12, 9
      %p167 = pnand %p165, %p166
      %p168 = pneg %p167
      // Predicated region
      $region29: #{pa_forward.1} parent=5 // pred_check
        _
      $region30: #{pa_forward.1} parent=5 // pred_check_branch
        %170 = sbr.rel (%p167) target = $region32
      $region31: #{pa_forward.1} parent=5 // pred_region
        %s171 = ssub.s32 %s12, 1
        %p172 = scmp.lt.s32.totalorder %s21, 1
        %s173 = scalar_select %p172, %s21, 1
        %p174 = scmp.lt.s32.totalorder %s22, 3
        %s175 = scalar_select %p174, %s22, 3
        %s176 = smul.addr %s175, 3
        %s177 = smul.addr %s173, 12
        %s178 = sadd.s32 %s176, %s177
        %s179 = smul.addr %s178, 4
        %s180 = scalar_lea.vmem %s0, %s179
        %p181 = pneg %p52
        %p182 = pneg %p49
        %p183 = pneg %p73
        %p184 = pneg %p70
        %p185 = pneg %p94
        %p186 = pneg %p91
        %p187 = pneg %p128
        %p188 = pneg %p125
        %s189 = sand.u32 %s115, 1
        %s190 = scalar_lea.sflag [#allocation4], %s189
        %s191 = sand.u32 %s115, 1
        %s192 = smul.addr %s191, 16
        %s193 = scalar_lea.vmem [#allocation3], %s192
        %p194 = scmp.lt.s32.totalorder %s21, 1
        %s195 = scalar_select %p194, %s21, 1
        %p196 = scmp.lt.s32.totalorder %s22, 3
        %s197 = scalar_select %p196, %s22, 3
        %s198 = smul.addr %s197, 3
        %s199 = smul.addr %s195, 12
        %s200 = sadd.s32 %s198, %s199
        %s201 = smul.addr %s200, 4
        %s202 = scalar_lea.vmem %s0, %s201
        %s203 = ssub.s32 %s22, 1
        %p204 = scmp.gt.s32.totalorder %s203, 0
        %s205 = scalar_select %p204, %s203, 0
        %v206 = vld [vmem:[%s202] sm:$0xf]
        %v207 = vld [vmem:[%s202 + $0x4] sm:$0xf]
        %v208 = vld [vmem:[%s1] sm:$0xff]
        %v209 = vld [vmem:[%s1 + $0x8] sm:$0xff]
        %v210 = vld [vmem:[%s1 + $0x10] sm:$0xff]
        %v211 = vld [vmem:[%s1 + $0x18] sm:$0xff]
        %v212 = vld [vmem:[%s1 + $0x20] sm:$0xff]
        %v213 = vld [vmem:[%s1 + $0x28] sm:$0xff]
        %v214 = vld [vmem:[%s1 + $0x30] sm:$0xff]
        %v215 = vld [vmem:[%s1 + $0x38] sm:$0xff]
        %v216 = vld [vmem:[%s1 + $0x40] sm:$0xff]
        %v217 = vld [vmem:[%s1 + $0x48] sm:$0xff]
        %v218 = vld [vmem:[%s1 + $0x50] sm:$0xff]
        %v219 = vld [vmem:[%s1 + $0x58] sm:$0xff]
        %v220 = vld [vmem:[%s1 + $0x60] sm:$0xff]
        %v221 = vld [vmem:[%s1 + $0x68] sm:$0xff]
        %v222 = vld [vmem:[%s1 + $0x70] sm:$0xff]
        %v223 = vld [vmem:[%s1 + $0x78] sm:$0xff]
        %v224 = vld [vmem:[%s1 + $0x80] sm:$0xff]
        %v225 = vld [vmem:[%s1 + $0x88] sm:$0xff]
        %v226 = vld [vmem:[%s1 + $0x90] sm:$0xff]
        %v227 = vld [vmem:[%s1 + $0x98] sm:$0xff]
        %v228 = vld [vmem:[%s1 + $0xa0] sm:$0xff]
        %v229 = vld [vmem:[%s1 + $0xa8] sm:$0xff]
        %v230 = vld [vmem:[%s1 + $0xb0] sm:$0xff]
        %v231 = vld [vmem:[%s1 + $0xb8] sm:$0xff]
        %v232 = vld [vmem:[%s1 + $0xc0] sm:$0xff]
        %v233 = vld [vmem:[%s1 + $0xc8] sm:$0xff]
        %v234 = vld [vmem:[%s1 + $0xd0] sm:$0xff]
        %v235 = vld [vmem:[%s1 + $0xd8] sm:$0xff]
        %v236 = vld [vmem:[%s1 + $0xe0] sm:$0xff]
        %v237 = vld [vmem:[%s1 + $0xe8] sm:$0xff]
        %v238 = vld [vmem:[%s1 + $0xf0] sm:$0xff]
        %v239 = vld [vmem:[%s1 + $0xf8] sm:$0xff]
        %v240 = vld [vmem:[%s1 + $0x100] sm:$0xff]
        %v241 = vld [vmem:[%s1 + $0x108] sm:$0xff]
        %v242 = vld [vmem:[%s1 + $0x110] sm:$0xff]
        %v243 = vld [vmem:[%s1 + $0x118] sm:$0xff]
        %v244 = vld [vmem:[%s1 + $0x120] sm:$0xff]
        %v245 = vld [vmem:[%s1 + $0x128] sm:$0xff]
        %v246 = vld [vmem:[%s1 + $0x130] sm:$0xff]
        %v247 = vld [vmem:[%s1 + $0x138] sm:$0xff]
        %v248 = vld [vmem:[%s1 + $0x140] sm:$0xff]
        %v249 = vld [vmem:[%s1 + $0x148] sm:$0xff]
        %v250 = vld [vmem:[%s1 + $0x150] sm:$0xff]
        %v251 = vld [vmem:[%s1 + $0x158] sm:$0xff]
        %v252 = vld [vmem:[%s1 + $0x160] sm:$0xff]
        %v253 = vld [vmem:[%s1 + $0x168] sm:$0xff]
        %v254 = vld [vmem:[%s1 + $0x170] sm:$0xff]
        %v255 = vld [vmem:[%s1 + $0x178] sm:$0xff]
        %v256 = vld [vmem:[%s1 + $0x180] sm:$0xff]
        %v257 = vld [vmem:[%s1 + $0x188] sm:$0xff]
        %v258 = vld [vmem:[%s1 + $0x190] sm:$0xff]
        %v259 = vld [vmem:[%s1 + $0x198] sm:$0xff]
        %v260 = vld [vmem:[%s1 + $0x1a0] sm:$0xff]
        %v261 = vld [vmem:[%s1 + $0x1a8] sm:$0xff]
        %v262 = vld [vmem:[%s1 + $0x1b0] sm:$0xff]
        %v263 = vld [vmem:[%s1 + $0x1b8] sm:$0xff]
        %v264 = vld [vmem:[%s1 + $0x1c0] sm:$0xff]
        %v265 = vld [vmem:[%s1 + $0x1c8] sm:$0xff]
        %v266 = vld [vmem:[%s1 + $0x1d0] sm:$0xff]
        %v267 = vld [vmem:[%s1 + $0x1d8] sm:$0xff]
        %v268 = vld [vmem:[%s1 + $0x1e0] sm:$0xff]
        %v269 = vld [vmem:[%s1 + $0x1e8] sm:$0xff]
        %v270 = vld [vmem:[%s1 + $0x1f0] sm:$0xff]
        %v271 = vld [vmem:[%s1 + $0x1f8] sm:$0xff]
        %v272 = vld [vmem:[%s202] sm:$0xf]
        %v273 = vld [vmem:[%s202 + $0x4] sm:$0xf]
        %v274 = vld [vmem:[%s202 + $0x8] sm:$0x1]
        %s275 = scalar_lea.vmem %s1, 512
        %v276 = vld [vmem:[%s275] sm:$0xff]
        %v277 = vld [vmem:[%s275 + $0x8] sm:$0xff]
        %v278 = vld [vmem:[%s275 + $0x10] sm:$0xff]
        %v279 = vld [vmem:[%s275 + $0x18] sm:$0xff]
        %v280 = vld [vmem:[%s275 + $0x20] sm:$0xff]
        %v281 = vld [vmem:[%s275 + $0x28] sm:$0xff]
        %v282 = vld [vmem:[%s275 + $0x30] sm:$0xff]
        %v283 = vld [vmem:[%s275 + $0x38] sm:$0xff]
        %v284 = vld [vmem:[%s275 + $0x40] sm:$0xff]
        %v285 = vld [vmem:[%s275 + $0x48] sm:$0xff]
        %v286 = vld [vmem:[%s275 + $0x50] sm:$0xff]
        %v287 = vld [vmem:[%s275 + $0x58] sm:$0xff]
        %v288 = vld [vmem:[%s275 + $0x60] sm:$0xff]
        %v289 = vld [vmem:[%s275 + $0x68] sm:$0xff]
        %v290 = vld [vmem:[%s275 + $0x70] sm:$0xff]
        %v291 = vld [vmem:[%s275 + $0x78] sm:$0xff]
        %v292 = vld [vmem:[%s275 + $0x80] sm:$0xff]
        %v293 = vld [vmem:[%s275 + $0x88] sm:$0xff]
        %v294 = vld [vmem:[%s275 + $0x90] sm:$0xff]
        %v295 = vld [vmem:[%s275 + $0x98] sm:$0xff]
        %v296 = vld [vmem:[%s275 + $0xa0] sm:$0xff]
        %v297 = vld [vmem:[%s275 + $0xa8] sm:$0xff]
        %v298 = vld [vmem:[%s275 + $0xb0] sm:$0xff]
        %v299 = vld [vmem:[%s275 + $0xb8] sm:$0xff]
        %v300 = vld [vmem:[%s275 + $0xc0] sm:$0xff]
        %v301 = vld [vmem:[%s275 + $0xc8] sm:$0xff]
        %v302 = vld [vmem:[%s275 + $0xd0] sm:$0xff]
        %v303 = vld [vmem:[%s275 + $0xd8] sm:$0xff]
        %v304 = vld [vmem:[%s275 + $0xe0] sm:$0xff]
        %v305 = vld [vmem:[%s275 + $0xe8] sm:$0xff]
        %v306 = vld [vmem:[%s275 + $0xf0] sm:$0xff]
        %v307 = vld [vmem:[%s275 + $0xf8] sm:$0xff]
        %v308 = vld [vmem:[%s275 + $0x100] sm:$0xff]
        %v309 = vld [vmem:[%s275 + $0x108] sm:$0xff]
        %v310 = vld [vmem:[%s275 + $0x110] sm:$0xff]
        %v311 = vld [vmem:[%s275 + $0x118] sm:$0xff]
        %v312 = vld [vmem:[%s275 + $0x120] sm:$0xff]
        %v313 = vld [vmem:[%s275 + $0x128] sm:$0xff]
        %v314 = vld [vmem:[%s275 + $0x130] sm:$0xff]
        %v315 = vld [vmem:[%s275 + $0x138] sm:$0xff]
        %v316 = vld [vmem:[%s275 + $0x140] sm:$0xff]
        %v317 = vld [vmem:[%s275 + $0x148] sm:$0xff]
        %v318 = vld [vmem:[%s275 + $0x150] sm:$0xff]
        %v319 = vld [vmem:[%s275 + $0x158] sm:$0xff]
        %v320 = vld [vmem:[%s275 + $0x160] sm:$0xff]
        %v321 = vld [vmem:[%s275 + $0x168] sm:$0xff]
        %v322 = vld [vmem:[%s275 + $0x170] sm:$0xff]
        %v323 = vld [vmem:[%s275 + $0x178] sm:$0xff]
        %v324 = vld [vmem:[%s275 + $0x180] sm:$0xff]
        %v325 = vld [vmem:[%s275 + $0x188] sm:$0xff]
        %v326 = vld [vmem:[%s275 + $0x190] sm:$0xff]
        %v327 = vld [vmem:[%s275 + $0x198] sm:$0xff]
        %v328 = vld [vmem:[%s275 + $0x1a0] sm:$0xff]
        %v329 = vld [vmem:[%s275 + $0x1a8] sm:$0xff]
        %v330 = vld [vmem:[%s275 + $0x1b0] sm:$0xff]
        %v331 = vld [vmem:[%s275 + $0x1b8] sm:$0xff]
        %v332 = vld [vmem:[%s275 + $0x1c0] sm:$0xff]
        %v333 = vld [vmem:[%s275 + $0x1c8] sm:$0xff]
        %v334 = vld [vmem:[%s275 + $0x1d0] sm:$0xff]
        %v335 = vld [vmem:[%s275 + $0x1d8] sm:$0xff]
        %v336 = vld [vmem:[%s275 + $0x1e0] sm:$0xff]
        %v337 = vld [vmem:[%s275 + $0x1e8] sm:$0xff]
        %v338 = vld [vmem:[%s275 + $0x1f0] sm:$0xff]
        %v339 = vld [vmem:[%s275 + $0x1f8] sm:$0xff]
        %v343 = vunpack.c.l.b16 %v272
        %v344 = vunpack.c.l.b16 %v273
        %v345 = vunpack.c.l.b16 %v274
        %v346 = vpack.c.b16 %v344, %v343
        %v347 = vpack.c.b16 %v345, %v345
        %vm348 = vsmask.f32 7424
        %v350 = vshrl.u32 %v346, 16
        %v352 = vshll.u32 %v346, 16
        %v354 = vrot.slane %v352, 1
        %v355 = vor.u32 %v350, %v354
        %v357 = vshll.u32 %v347, 16
        %v359 = vrot.slane %v357, 1
        %v360 = vsel %vm348, %v355, %v359
        %v426 = vunpack.c.l.b16 %v276
        %v427 = vunpack.c.h.b16 %v276
        %v428 = vunpack.c.l.b16 %v277
        %v429 = vunpack.c.h.b16 %v277
        %v430 = vunpack.c.l.b16 %v278
        %v431 = vunpack.c.h.b16 %v278
        %v432 = vunpack.c.l.b16 %v279
        %v433 = vunpack.c.h.b16 %v279
        %v434 = vunpack.c.l.b16 %v280
        %v435 = vunpack.c.h.b16 %v280
        %v436 = vunpack.c.l.b16 %v281
        %v437 = vunpack.c.h.b16 %v281
        %v438 = vunpack.c.l.b16 %v282
        %v439 = vunpack.c.h.b16 %v282
        %v440 = vunpack.c.l.b16 %v283
        %v441 = vunpack.c.h.b16 %v283
        %v442 = vunpack.c.l.b16 %v284
        %v443 = vunpack.c.h.b16 %v284
        %v444 = vunpack.c.l.b16 %v285
        %v445 = vunpack.c.h.b16 %v285
        %v446 = vunpack.c.l.b16 %v286
        %v447 = vunpack.c.h.b16 %v286
        %v448 = vunpack.c.l.b16 %v287
        %v449 = vunpack.c.h.b16 %v287
        %v450 = vunpack.c.l.b16 %v288
        %v451 = vunpack.c.h.b16 %v288
        %v452 = vunpack.c.l.b16 %v289
        %v453 = vunpack.c.h.b16 %v289
        %v454 = vunpack.c.l.b16 %v290
        %v455 = vunpack.c.h.b16 %v290
        %v456 = vunpack.c.l.b16 %v291
        %v457 = vunpack.c.h.b16 %v291
        %v458 = vunpack.c.l.b16 %v292
        %v459 = vunpack.c.h.b16 %v292
        %v460 = vunpack.c.l.b16 %v293
        %v461 = vunpack.c.h.b16 %v293
        %v462 = vunpack.c.l.b16 %v294
        %v463 = vunpack.c.h.b16 %v294
        %v464 = vunpack.c.l.b16 %v295
        %v465 = vunpack.c.h.b16 %v295
        %v466 = vunpack.c.l.b16 %v296
        %v467 = vunpack.c.h.b16 %v296
        %v468 = vunpack.c.l.b16 %v297
        %v469 = vunpack.c.h.b16 %v297
        %v470 = vunpack.c.l.b16 %v298
        %v471 = vunpack.c.h.b16 %v298
        %v472 = vunpack.c.l.b16 %v299
        %v473 = vunpack.c.h.b16 %v299
        %v474 = vunpack.c.l.b16 %v300
        %v475 = vunpack.c.h.b16 %v300
        %v476 = vunpack.c.l.b16 %v301
        %v477 = vunpack.c.h.b16 %v301
        %v478 = vunpack.c.l.b16 %v302
        %v479 = vunpack.c.h.b16 %v302
        %v480 = vunpack.c.l.b16 %v303
        %v481 = vunpack.c.h.b16 %v303
        %v482 = vunpack.c.l.b16 %v304
        %v483 = vunpack.c.h.b16 %v304
        %v484 = vunpack.c.l.b16 %v305
        %v485 = vunpack.c.h.b16 %v305
        %v486 = vunpack.c.l.b16 %v306
        %v487 = vunpack.c.h.b16 %v306
        %v488 = vunpack.c.l.b16 %v307
        %v489 = vunpack.c.h.b16 %v307
        %v490 = vunpack.c.l.b16 %v308
        %v491 = vunpack.c.h.b16 %v308
        %v492 = vunpack.c.l.b16 %v309
        %v493 = vunpack.c.h.b16 %v309
        %v494 = vunpack.c.l.b16 %v310
        %v495 = vunpack.c.h.b16 %v310
        %v496 = vunpack.c.l.b16 %v311
        %v497 = vunpack.c.h.b16 %v311
        %v498 = vunpack.c.l.b16 %v312
        %v499 = vunpack.c.h.b16 %v312
        %v500 = vunpack.c.l.b16 %v313
        %v501 = vunpack.c.h.b16 %v313
        %v502 = vunpack.c.l.b16 %v314
        %v503 = vunpack.c.h.b16 %v314
        %v504 = vunpack.c.l.b16 %v315
        %v505 = vunpack.c.h.b16 %v315
        %v506 = vunpack.c.l.b16 %v316
        %v507 = vunpack.c.h.b16 %v316
        %v508 = vunpack.c.l.b16 %v317
        %v509 = vunpack.c.h.b16 %v317
        %v510 = vunpack.c.l.b16 %v318
        %v511 = vunpack.c.h.b16 %v318
        %v512 = vunpack.c.l.b16 %v319
        %v513 = vunpack.c.h.b16 %v319
        %v514 = vunpack.c.l.b16 %v320
        %v515 = vunpack.c.h.b16 %v320
        %v516 = vunpack.c.l.b16 %v321
        %v517 = vunpack.c.h.b16 %v321
        %v518 = vunpack.c.l.b16 %v322
        %v519 = vunpack.c.h.b16 %v322
        %v520 = vunpack.c.l.b16 %v323
        %v521 = vunpack.c.h.b16 %v323
        %v522 = vunpack.c.l.b16 %v324
        %v523 = vunpack.c.h.b16 %v324
        %v524 = vunpack.c.l.b16 %v325
        %v525 = vunpack.c.h.b16 %v325
        %v526 = vunpack.c.l.b16 %v326
        %v527 = vunpack.c.h.b16 %v326
        %v528 = vunpack.c.l.b16 %v327
        %v529 = vunpack.c.h.b16 %v327
        %v530 = vunpack.c.l.b16 %v328
        %v531 = vunpack.c.h.b16 %v328
        %v532 = vunpack.c.l.b16 %v329
        %v533 = vunpack.c.h.b16 %v329
        %v534 = vunpack.c.l.b16 %v330
        %v535 = vunpack.c.h.b16 %v330
        %v536 = vunpack.c.l.b16 %v331
        %v537 = vunpack.c.h.b16 %v331
        %v538 = vunpack.c.l.b16 %v332
        %v539 = vunpack.c.h.b16 %v332
        %v540 = vunpack.c.l.b16 %v333
        %v541 = vunpack.c.h.b16 %v333
        %v542 = vunpack.c.l.b16 %v334
        %v543 = vunpack.c.h.b16 %v334
        %v544 = vunpack.c.l.b16 %v335
        %v545 = vunpack.c.h.b16 %v335
        %v546 = vunpack.c.l.b16 %v336
        %v547 = vunpack.c.h.b16 %v336
        %v548 = vunpack.c.l.b16 %v337
        %v549 = vunpack.c.h.b16 %v337
        %v550 = vunpack.c.l.b16 %v338
        %v551 = vunpack.c.h.b16 %v338
        %v552 = vunpack.c.l.b16 %v339
        %v553 = vunpack.c.h.b16 %v339
        %v554 = vpack.c.b16 %v434, %v426
        %v555 = vpack.c.b16 %v435, %v427
        %v556 = vpack.c.b16 %v436, %v428
        %v557 = vpack.c.b16 %v437, %v429
        %v558 = vpack.c.b16 %v438, %v430
        %v559 = vpack.c.b16 %v439, %v431
        %v560 = vpack.c.b16 %v440, %v432
        %v561 = vpack.c.b16 %v441, %v433
        %v562 = vpack.c.b16 %v450, %v442
        %v563 = vpack.c.b16 %v451, %v443
        %v564 = vpack.c.b16 %v452, %v444
        %v565 = vpack.c.b16 %v453, %v445
        %v566 = vpack.c.b16 %v454, %v446
        %v567 = vpack.c.b16 %v455, %v447
        %v568 = vpack.c.b16 %v456, %v448
        %v569 = vpack.c.b16 %v457, %v449
        %v570 = vpack.c.b16 %v466, %v458
        %v571 = vpack.c.b16 %v467, %v459
        %v572 = vpack.c.b16 %v468, %v460
        %v573 = vpack.c.b16 %v469, %v461
        %v574 = vpack.c.b16 %v470, %v462
        %v575 = vpack.c.b16 %v471, %v463
        %v576 = vpack.c.b16 %v472, %v464
        %v577 = vpack.c.b16 %v473, %v465
        %v578 = vpack.c.b16 %v482, %v474
        %v579 = vpack.c.b16 %v483, %v475
        %v580 = vpack.c.b16 %v484, %v476
        %v581 = vpack.c.b16 %v485, %v477
        %v582 = vpack.c.b16 %v486, %v478
        %v583 = vpack.c.b16 %v487, %v479
        %v584 = vpack.c.b16 %v488, %v480
        %v585 = vpack.c.b16 %v489, %v481
        %v586 = vpack.c.b16 %v498, %v490
        %v587 = vpack.c.b16 %v499, %v491
        %v588 = vpack.c.b16 %v500, %v492
        %v589 = vpack.c.b16 %v501, %v493
        %v590 = vpack.c.b16 %v502, %v494
        %v591 = vpack.c.b16 %v503, %v495
        %v592 = vpack.c.b16 %v504, %v496
        %v593 = vpack.c.b16 %v505, %v497
        %v594 = vpack.c.b16 %v514, %v506
        %v595 = vpack.c.b16 %v515, %v507
        %v596 = vpack.c.b16 %v516, %v508
        %v597 = vpack.c.b16 %v517, %v509
        %v598 = vpack.c.b16 %v518, %v510
        %v599 = vpack.c.b16 %v519, %v511
        %v600 = vpack.c.b16 %v520, %v512
        %v601 = vpack.c.b16 %v521, %v513
        %v602 = vpack.c.b16 %v530, %v522
        %v603 = vpack.c.b16 %v531, %v523
        %v604 = vpack.c.b16 %v532, %v524
        %v605 = vpack.c.b16 %v533, %v525
        %v606 = vpack.c.b16 %v534, %v526
        %v607 = vpack.c.b16 %v535, %v527
        %v608 = vpack.c.b16 %v536, %v528
        %v609 = vpack.c.b16 %v537, %v529
        %v610 = vpack.c.b16 %v546, %v538
        %v611 = vpack.c.b16 %v547, %v539
        %v612 = vpack.c.b16 %v548, %v540
        %v613 = vpack.c.b16 %v549, %v541
        %v614 = vpack.c.b16 %v550, %v542
        %v615 = vpack.c.b16 %v551, %v543
        %v616 = vpack.c.b16 %v552, %v544
        %v617 = vpack.c.b16 %v553, %v545
        %682 = vmatpush.bf16.msra.mxu0 %v610
        %683 = vmatpush.bf16.msra.mxu0 %v602
        %684 = vmatpush.bf16.msra.mxu0 %v594
        %685 = vmatpush.bf16.msra.mxu0 %v586
        %686 = vmatpush.bf16.msra.mxu0 %v578
        %687 = vmatpush.bf16.msra.mxu0 %v570
        %688 = vmatpush.bf16.msra.mxu0 %v562
        %689 = vmatpush.bf16.msra.mxu0 %v554
        %690 = vmatmul.bf16.gmra.mxu0 %v360
        %v691 = vpop.f32.mrf.mxu0
        %v692 = vadd.f32 0.0, %v691
        %v693 = vpop.f32.mrf.mxu0
        %v694 = vadd.f32 0.0, %v693
        %695 = vdwg.mxu0
        %696 = vmatpush.bf16.msra.mxu0 %v611
        %697 = vmatpush.bf16.msra.mxu0 %v603
        %698 = vmatpush.bf16.msra.mxu0 %v595
        %699 = vmatpush.bf16.msra.mxu0 %v587
        %700 = vmatpush.bf16.msra.mxu0 %v579
        %701 = vmatpush.bf16.msra.mxu0 %v571
        %702 = vmatpush.bf16.msra.mxu0 %v563
        %703 = vmatpush.bf16.msra.mxu0 %v555
        %704 = vmatmul.bf16.gmra.mxu0 %v360
        %v705 = vpop.f32.mrf.mxu0
        %v706 = vadd.f32 0.0, %v705
        %v707 = vpop.f32.mrf.mxu0
        %v708 = vadd.f32 0.0, %v707
        %709 = vdwg.mxu0
        %710 = vmatpush.bf16.msra.mxu0 %v612
        %711 = vmatpush.bf16.msra.mxu0 %v604
        %712 = vmatpush.bf16.msra.mxu0 %v596
        %713 = vmatpush.bf16.msra.mxu0 %v588
        %714 = vmatpush.bf16.msra.mxu0 %v580
        %715 = vmatpush.bf16.msra.mxu0 %v572
        %716 = vmatpush.bf16.msra.mxu0 %v564
        %717 = vmatpush.bf16.msra.mxu0 %v556
        %718 = vmatmul.bf16.gmra.mxu0 %v360
        %v719 = vpop.f32.mrf.mxu0
        %v720 = vadd.f32 0.0, %v719
        %v721 = vpop.f32.mrf.mxu0
        %v722 = vadd.f32 0.0, %v721
        %723 = vdwg.mxu0
        %724 = vmatpush.bf16.msra.mxu0 %v613
        %725 = vmatpush.bf16.msra.mxu0 %v605
        %726 = vmatpush.bf16.msra.mxu0 %v597
        %727 = vmatpush.bf16.msra.mxu0 %v589
        %728 = vmatpush.bf16.msra.mxu0 %v581
        %729 = vmatpush.bf16.msra.mxu0 %v573
        %730 = vmatpush.bf16.msra.mxu0 %v565
        %731 = vmatpush.bf16.msra.mxu0 %v557
        %732 = vmatmul.bf16.gmra.mxu0 %v360
        %v733 = vpop.f32.mrf.mxu0
        %v734 = vadd.f32 0.0, %v733
        %v735 = vpop.f32.mrf.mxu0
        %v736 = vadd.f32 0.0, %v735
        %737 = vdwg.mxu0
        %738 = vmatpush.bf16.msra.mxu0 %v614
        %739 = vmatpush.bf16.msra.mxu0 %v606
        %740 = vmatpush.bf16.msra.mxu0 %v598
        %741 = vmatpush.bf16.msra.mxu0 %v590
        %742 = vmatpush.bf16.msra.mxu0 %v582
        %743 = vmatpush.bf16.msra.mxu0 %v574
        %744 = vmatpush.bf16.msra.mxu0 %v566
        %745 = vmatpush.bf16.msra.mxu0 %v558
        %746 = vmatmul.bf16.gmra.mxu0 %v360
        %v747 = vpop.f32.mrf.mxu0
        %v748 = vadd.f32 0.0, %v747
        %v749 = vpop.f32.mrf.mxu0
        %v750 = vadd.f32 0.0, %v749
        %751 = vdwg.mxu0
        %752 = vmatpush.bf16.msra.mxu0 %v615
        %753 = vmatpush.bf16.msra.mxu0 %v607
        %754 = vmatpush.bf16.msra.mxu0 %v599
        %755 = vmatpush.bf16.msra.mxu0 %v591
        %756 = vmatpush.bf16.msra.mxu0 %v583
        %757 = vmatpush.bf16.msra.mxu0 %v575
        %758 = vmatpush.bf16.msra.mxu0 %v567
        %759 = vmatpush.bf16.msra.mxu0 %v559
        %760 = vmatmul.bf16.gmra.mxu0 %v360
        %v761 = vpop.f32.mrf.mxu0
        %v762 = vadd.f32 0.0, %v761
        %v763 = vpop.f32.mrf.mxu0
        %v764 = vadd.f32 0.0, %v763
        %765 = vdwg.mxu0
        %766 = vmatpush.bf16.msra.mxu0 %v616
        %767 = vmatpush.bf16.msra.mxu0 %v608
        %768 = vmatpush.bf16.msra.mxu0 %v600
        %769 = vmatpush.bf16.msra.mxu0 %v592
        %770 = vmatpush.bf16.msra.mxu0 %v584
        %771 = vmatpush.bf16.msra.mxu0 %v576
        %772 = vmatpush.bf16.msra.mxu0 %v568
        %773 = vmatpush.bf16.msra.mxu0 %v560
        %774 = vmatmul.bf16.gmra.mxu0 %v360
        %v775 = vpop.f32.mrf.mxu0
        %v776 = vadd.f32 0.0, %v775
        %v777 = vpop.f32.mrf.mxu0
        %v778 = vadd.f32 0.0, %v777
        %779 = vdwg.mxu0
        %780 = vmatpush.bf16.msra.mxu0 %v617
        %781 = vmatpush.bf16.msra.mxu0 %v609
        %782 = vmatpush.bf16.msra.mxu0 %v601
        %783 = vmatpush.bf16.msra.mxu0 %v593
        %784 = vmatpush.bf16.msra.mxu0 %v585
        %785 = vmatpush.bf16.msra.mxu0 %v577
        %786 = vmatpush.bf16.msra.mxu0 %v569
        %787 = vmatpush.bf16.msra.mxu0 %v561
        %788 = vmatmul.bf16.gmra.mxu0 %v360
        %v789 = vpop.f32.mrf.mxu0
        %v790 = vadd.f32 0.0, %v789
        %v791 = vpop.f32.mrf.mxu0
        %v792 = vadd.f32 0.0, %v791
        %793 = vdwg.mxu0
        %v796 = vunpack.c.l.b16 %v206
        %v797 = vunpack.c.l.b16 %v207
        %v798 = vpack.c.b16 %v797, %v796
        %v864 = vunpack.c.l.b16 %v208
        %v865 = vunpack.c.h.b16 %v208
        %v866 = vunpack.c.l.b16 %v209
        %v867 = vunpack.c.h.b16 %v209
        %v868 = vunpack.c.l.b16 %v210
        %v869 = vunpack.c.h.b16 %v210
        %v870 = vunpack.c.l.b16 %v211
        %v871 = vunpack.c.h.b16 %v211
        %v872 = vunpack.c.l.b16 %v212
        %v873 = vunpack.c.h.b16 %v212
        %v874 = vunpack.c.l.b16 %v213
        %v875 = vunpack.c.h.b16 %v213
        %v876 = vunpack.c.l.b16 %v214
        %v877 = vunpack.c.h.b16 %v214
        %v878 = vunpack.c.l.b16 %v215
        %v879 = vunpack.c.h.b16 %v215
        %v880 = vunpack.c.l.b16 %v216
        %v881 = vunpack.c.h.b16 %v216
        %v882 = vunpack.c.l.b16 %v217
        %v883 = vunpack.c.h.b16 %v217
        %v884 = vunpack.c.l.b16 %v218
        %v885 = vunpack.c.h.b16 %v218
        %v886 = vunpack.c.l.b16 %v219
        %v887 = vunpack.c.h.b16 %v219
        %v888 = vunpack.c.l.b16 %v220
        %v889 = vunpack.c.h.b16 %v220
        %v890 = vunpack.c.l.b16 %v221
        %v891 = vunpack.c.h.b16 %v221
        %v892 = vunpack.c.l.b16 %v222
        %v893 = vunpack.c.h.b16 %v222
        %v894 = vunpack.c.l.b16 %v223
        %v895 = vunpack.c.h.b16 %v223
        %v896 = vunpack.c.l.b16 %v224
        %v897 = vunpack.c.h.b16 %v224
        %v898 = vunpack.c.l.b16 %v225
        %v899 = vunpack.c.h.b16 %v225
        %v900 = vunpack.c.l.b16 %v226
        %v901 = vunpack.c.h.b16 %v226
        %v902 = vunpack.c.l.b16 %v227
        %v903 = vunpack.c.h.b16 %v227
        %v904 = vunpack.c.l.b16 %v228
        %v905 = vunpack.c.h.b16 %v228
        %v906 = vunpack.c.l.b16 %v229
        %v907 = vunpack.c.h.b16 %v229
        %v908 = vunpack.c.l.b16 %v230
        %v909 = vunpack.c.h.b16 %v230
        %v910 = vunpack.c.l.b16 %v231
        %v911 = vunpack.c.h.b16 %v231
        %v912 = vunpack.c.l.b16 %v232
        %v913 = vunpack.c.h.b16 %v232
        %v914 = vunpack.c.l.b16 %v233
        %v915 = vunpack.c.h.b16 %v233
        %v916 = vunpack.c.l.b16 %v234
        %v917 = vunpack.c.h.b16 %v234
        %v918 = vunpack.c.l.b16 %v235
        %v919 = vunpack.c.h.b16 %v235
        %v920 = vunpack.c.l.b16 %v236
        %v921 = vunpack.c.h.b16 %v236
        %v922 = vunpack.c.l.b16 %v237
        %v923 = vunpack.c.h.b16 %v237
        %v924 = vunpack.c.l.b16 %v238
        %v925 = vunpack.c.h.b16 %v238
        %v926 = vunpack.c.l.b16 %v239
        %v927 = vunpack.c.h.b16 %v239
        %v928 = vunpack.c.l.b16 %v240
        %v929 = vunpack.c.h.b16 %v240
        %v930 = vunpack.c.l.b16 %v241
        %v931 = vunpack.c.h.b16 %v241
        %v932 = vunpack.c.l.b16 %v242
        %v933 = vunpack.c.h.b16 %v242
        %v934 = vunpack.c.l.b16 %v243
        %v935 = vunpack.c.h.b16 %v243
        %v936 = vunpack.c.l.b16 %v244
        %v937 = vunpack.c.h.b16 %v244
        %v938 = vunpack.c.l.b16 %v245
        %v939 = vunpack.c.h.b16 %v245
        %v940 = vunpack.c.l.b16 %v246
        %v941 = vunpack.c.h.b16 %v246
        %v942 = vunpack.c.l.b16 %v247
        %v943 = vunpack.c.h.b16 %v247
        %v944 = vunpack.c.l.b16 %v248
        %v945 = vunpack.c.h.b16 %v248
        %v946 = vunpack.c.l.b16 %v249
        %v947 = vunpack.c.h.b16 %v249
        %v948 = vunpack.c.l.b16 %v250
        %v949 = vunpack.c.h.b16 %v250
        %v950 = vunpack.c.l.b16 %v251
        %v951 = vunpack.c.h.b16 %v251
        %v952 = vunpack.c.l.b16 %v252
        %v953 = vunpack.c.h.b16 %v252
        %v954 = vunpack.c.l.b16 %v253
        %v955 = vunpack.c.h.b16 %v253
        %v956 = vunpack.c.l.b16 %v254
        %v957 = vunpack.c.h.b16 %v254
        %v958 = vunpack.c.l.b16 %v255
        %v959 = vunpack.c.h.b16 %v255
        %v960 = vunpack.c.l.b16 %v256
        %v961 = vunpack.c.h.b16 %v256
        %v962 = vunpack.c.l.b16 %v257
        %v963 = vunpack.c.h.b16 %v257
        %v964 = vunpack.c.l.b16 %v258
        %v965 = vunpack.c.h.b16 %v258
        %v966 = vunpack.c.l.b16 %v259
        %v967 = vunpack.c.h.b16 %v259
        %v968 = vunpack.c.l.b16 %v260
        %v969 = vunpack.c.h.b16 %v260
        %v970 = vunpack.c.l.b16 %v261
        %v971 = vunpack.c.h.b16 %v261
        %v972 = vunpack.c.l.b16 %v262
        %v973 = vunpack.c.h.b16 %v262
        %v974 = vunpack.c.l.b16 %v263
        %v975 = vunpack.c.h.b16 %v263
        %v976 = vunpack.c.l.b16 %v264
        %v977 = vunpack.c.h.b16 %v264
        %v978 = vunpack.c.l.b16 %v265
        %v979 = vunpack.c.h.b16 %v265
        %v980 = vunpack.c.l.b16 %v266
        %v981 = vunpack.c.h.b16 %v266
        %v982 = vunpack.c.l.b16 %v267
        %v983 = vunpack.c.h.b16 %v267
        %v984 = vunpack.c.l.b16 %v268
        %v985 = vunpack.c.h.b16 %v268
        %v986 = vunpack.c.l.b16 %v269
        %v987 = vunpack.c.h.b16 %v269
        %v988 = vunpack.c.l.b16 %v270
        %v989 = vunpack.c.h.b16 %v270
        %v990 = vunpack.c.l.b16 %v271
        %v991 = vunpack.c.h.b16 %v271
        %v992 = vpack.c.b16 %v872, %v864
        %v993 = vpack.c.b16 %v873, %v865
        %v994 = vpack.c.b16 %v874, %v866
        %v995 = vpack.c.b16 %v875, %v867
        %v996 = vpack.c.b16 %v876, %v868
        %v997 = vpack.c.b16 %v877, %v869
        %v998 = vpack.c.b16 %v878, %v870
        %v999 = vpack.c.b16 %v879, %v871
        %v1000 = vpack.c.b16 %v888, %v880
        %v1001 = vpack.c.b16 %v889, %v881
        %v1002 = vpack.c.b16 %v890, %v882
        %v1003 = vpack.c.b16 %v891, %v883
        %v1004 = vpack.c.b16 %v892, %v884
        %v1005 = vpack.c.b16 %v893, %v885
        %v1006 = vpack.c.b16 %v894, %v886
        %v1007 = vpack.c.b16 %v895, %v887
        %v1008 = vpack.c.b16 %v904, %v896
        %v1009 = vpack.c.b16 %v905, %v897
        %v1010 = vpack.c.b16 %v906, %v898
        %v1011 = vpack.c.b16 %v907, %v899
        %v1012 = vpack.c.b16 %v908, %v900
        %v1013 = vpack.c.b16 %v909, %v901
        %v1014 = vpack.c.b16 %v910, %v902
        %v1015 = vpack.c.b16 %v911, %v903
        %v1016 = vpack.c.b16 %v920, %v912
        %v1017 = vpack.c.b16 %v921, %v913
        %v1018 = vpack.c.b16 %v922, %v914
        %v1019 = vpack.c.b16 %v923, %v915
        %v1020 = vpack.c.b16 %v924, %v916
        %v1021 = vpack.c.b16 %v925, %v917
        %v1022 = vpack.c.b16 %v926, %v918
        %v1023 = vpack.c.b16 %v927, %v919
        %v1024 = vpack.c.b16 %v936, %v928
        %v1025 = vpack.c.b16 %v937, %v929
        %v1026 = vpack.c.b16 %v938, %v930
        %v1027 = vpack.c.b16 %v939, %v931
        %v1028 = vpack.c.b16 %v940, %v932
        %v1029 = vpack.c.b16 %v941, %v933
        %v1030 = vpack.c.b16 %v942, %v934
        %v1031 = vpack.c.b16 %v943, %v935
        %v1032 = vpack.c.b16 %v952, %v944
        %v1033 = vpack.c.b16 %v953, %v945
        %v1034 = vpack.c.b16 %v954, %v946
        %v1035 = vpack.c.b16 %v955, %v947
        %v1036 = vpack.c.b16 %v956, %v948
        %v1037 = vpack.c.b16 %v957, %v949
        %v1038 = vpack.c.b16 %v958, %v950
        %v1039 = vpack.c.b16 %v959, %v951
        %v1040 = vpack.c.b16 %v968, %v960
        %v1041 = vpack.c.b16 %v969, %v961
        %v1042 = vpack.c.b16 %v970, %v962
        %v1043 = vpack.c.b16 %v971, %v963
        %v1044 = vpack.c.b16 %v972, %v964
        %v1045 = vpack.c.b16 %v973, %v965
        %v1046 = vpack.c.b16 %v974, %v966
        %v1047 = vpack.c.b16 %v975, %v967
        %v1048 = vpack.c.b16 %v984, %v976
        %v1049 = vpack.c.b16 %v985, %v977
        %v1050 = vpack.c.b16 %v986, %v978
        %v1051 = vpack.c.b16 %v987, %v979
        %v1052 = vpack.c.b16 %v988, %v980
        %v1053 = vpack.c.b16 %v989, %v981
        %v1054 = vpack.c.b16 %v990, %v982
        %v1055 = vpack.c.b16 %v991, %v983
        %1120 = vmatpush.bf16.msra.mxu0 %v1048
        %1121 = vmatpush.bf16.msra.mxu0 %v1040
        %1122 = vmatpush.bf16.msra.mxu0 %v1032
        %1123 = vmatpush.bf16.msra.mxu0 %v1024
        %1124 = vmatpush.bf16.msra.mxu0 %v1016
        %1125 = vmatpush.bf16.msra.mxu0 %v1008
        %1126 = vmatpush.bf16.msra.mxu0 %v1000
        %1127 = vmatpush.bf16.msra.mxu0 %v992
        %1128 = vmatmul.bf16.gmra.mxu0 %v798
        %v1129 = vpop.f32.mrf.mxu0
        %v1130 = vadd.f32 %v692, %v1129
        %v1131 = vpop.f32.mrf.mxu0
        %v1132 = vadd.f32 %v694, %v1131
        %1133 = vdwg.mxu0
        %1134 = vmatpush.bf16.msra.mxu0 %v1049
        %1135 = vmatpush.bf16.msra.mxu0 %v1041
        %1136 = vmatpush.bf16.msra.mxu0 %v1033
        %1137 = vmatpush.bf16.msra.mxu0 %v1025
        %1138 = vmatpush.bf16.msra.mxu0 %v1017
        %1139 = vmatpush.bf16.msra.mxu0 %v1009
        %1140 = vmatpush.bf16.msra.mxu0 %v1001
        %1141 = vmatpush.bf16.msra.mxu0 %v993
        %1142 = vmatmul.bf16.gmra.mxu0 %v798
        %v1143 = vpop.f32.mrf.mxu0
        %v1144 = vadd.f32 %v706, %v1143
        %v1145 = vpop.f32.mrf.mxu0
        %v1146 = vadd.f32 %v708, %v1145
        %1147 = vdwg.mxu0
        %1148 = vmatpush.bf16.msra.mxu0 %v1050
        %1149 = vmatpush.bf16.msra.mxu0 %v1042
        %1150 = vmatpush.bf16.msra.mxu0 %v1034
        %1151 = vmatpush.bf16.msra.mxu0 %v1026
        %1152 = vmatpush.bf16.msra.mxu0 %v1018
        %1153 = vmatpush.bf16.msra.mxu0 %v1010
        %1154 = vmatpush.bf16.msra.mxu0 %v1002
        %1155 = vmatpush.bf16.msra.mxu0 %v994
        %1156 = vmatmul.bf16.gmra.mxu0 %v798
        %v1157 = vpop.f32.mrf.mxu0
        %v1158 = vadd.f32 %v720, %v1157
        %v1159 = vpop.f32.mrf.mxu0
        %v1160 = vadd.f32 %v722, %v1159
        %1161 = vdwg.mxu0
        %1162 = vmatpush.bf16.msra.mxu0 %v1051
        %1163 = vmatpush.bf16.msra.mxu0 %v1043
        %1164 = vmatpush.bf16.msra.mxu0 %v1035
        %1165 = vmatpush.bf16.msra.mxu0 %v1027
        %1166 = vmatpush.bf16.msra.mxu0 %v1019
        %1167 = vmatpush.bf16.msra.mxu0 %v1011
        %1168 = vmatpush.bf16.msra.mxu0 %v1003
        %1169 = vmatpush.bf16.msra.mxu0 %v995
        %1170 = vmatmul.bf16.gmra.mxu0 %v798
        %v1171 = vpop.f32.mrf.mxu0
        %v1172 = vadd.f32 %v734, %v1171
        %v1173 = vpop.f32.mrf.mxu0
        %v1174 = vadd.f32 %v736, %v1173
        %1175 = vdwg.mxu0
        %1176 = vmatpush.bf16.msra.mxu0 %v1052
        %1177 = vmatpush.bf16.msra.mxu0 %v1044
        %1178 = vmatpush.bf16.msra.mxu0 %v1036
        %1179 = vmatpush.bf16.msra.mxu0 %v1028
        %1180 = vmatpush.bf16.msra.mxu0 %v1020
        %1181 = vmatpush.bf16.msra.mxu0 %v1012
        %1182 = vmatpush.bf16.msra.mxu0 %v1004
        %1183 = vmatpush.bf16.msra.mxu0 %v996
        %1184 = vmatmul.bf16.gmra.mxu0 %v798
        %v1185 = vpop.f32.mrf.mxu0
        %v1186 = vadd.f32 %v748, %v1185
        %v1187 = vpop.f32.mrf.mxu0
        %v1188 = vadd.f32 %v750, %v1187
        %1189 = vdwg.mxu0
        %1190 = vmatpush.bf16.msra.mxu0 %v1053
        %1191 = vmatpush.bf16.msra.mxu0 %v1045
        %1192 = vmatpush.bf16.msra.mxu0 %v1037
        %1193 = vmatpush.bf16.msra.mxu0 %v1029
        %1194 = vmatpush.bf16.msra.mxu0 %v1021
        %1195 = vmatpush.bf16.msra.mxu0 %v1013
        %1196 = vmatpush.bf16.msra.mxu0 %v1005
        %1197 = vmatpush.bf16.msra.mxu0 %v997
        %1198 = vmatmul.bf16.gmra.mxu0 %v798
        %v1199 = vpop.f32.mrf.mxu0
        %v1200 = vadd.f32 %v762, %v1199
        %v1201 = vpop.f32.mrf.mxu0
        %v1202 = vadd.f32 %v764, %v1201
        %1203 = vdwg.mxu0
        %1204 = vmatpush.bf16.msra.mxu0 %v1054
        %1205 = vmatpush.bf16.msra.mxu0 %v1046
        %1206 = vmatpush.bf16.msra.mxu0 %v1038
        %1207 = vmatpush.bf16.msra.mxu0 %v1030
        %1208 = vmatpush.bf16.msra.mxu0 %v1022
        %1209 = vmatpush.bf16.msra.mxu0 %v1014
        %1210 = vmatpush.bf16.msra.mxu0 %v1006
        %1211 = vmatpush.bf16.msra.mxu0 %v998
        %1212 = vmatmul.bf16.gmra.mxu0 %v798
        %v1213 = vpop.f32.mrf.mxu0
        %v1214 = vadd.f32 %v776, %v1213
        %v1215 = vpop.f32.mrf.mxu0
        %v1216 = vadd.f32 %v778, %v1215
        %1217 = vdwg.mxu0
        %1218 = vmatpush.bf16.msra.mxu0 %v1055
        %1219 = vmatpush.bf16.msra.mxu0 %v1047
        %1220 = vmatpush.bf16.msra.mxu0 %v1039
        %1221 = vmatpush.bf16.msra.mxu0 %v1031
        %1222 = vmatpush.bf16.msra.mxu0 %v1023
        %1223 = vmatpush.bf16.msra.mxu0 %v1015
        %1224 = vmatpush.bf16.msra.mxu0 %v1007
        %1225 = vmatpush.bf16.msra.mxu0 %v999
        %1226 = vmatmul.bf16.gmra.mxu0 %v798
        %v1227 = vpop.f32.mrf.mxu0
        %v1228 = vadd.f32 %v790, %v1227
        %v1229 = vpop.f32.mrf.mxu0
        %v1230 = vadd.f32 %v792, %v1229
        %1231 = vdwg.mxu0
        %v1232 = vld [vmem:[%s202] sm:$0xe]
        %s1233 = scalar_lea.vmem %s1, 1024
        %v1234 = vld [vmem:[%s1233] sm:$0xff]
        %v1235 = vld [vmem:[%s1233 + $0x8] sm:$0xff]
        %v1236 = vld [vmem:[%s1233 + $0x10] sm:$0xff]
        %v1237 = vld [vmem:[%s1233 + $0x18] sm:$0xff]
        %v1238 = vld [vmem:[%s1233 + $0x20] sm:$0xff]
        %v1239 = vld [vmem:[%s1233 + $0x28] sm:$0xff]
        %v1240 = vld [vmem:[%s1233 + $0x30] sm:$0xff]
        %v1241 = vld [vmem:[%s1233 + $0x38] sm:$0xff]
        %v1242 = vld [vmem:[%s1233 + $0x40] sm:$0xff]
        %v1243 = vld [vmem:[%s1233 + $0x48] sm:$0xff]
        %v1244 = vld [vmem:[%s1233 + $0x50] sm:$0xff]
        %v1245 = vld [vmem:[%s1233 + $0x58] sm:$0xff]
        %v1246 = vld [vmem:[%s1233 + $0x60] sm:$0xff]
        %v1247 = vld [vmem:[%s1233 + $0x68] sm:$0xff]
        %v1248 = vld [vmem:[%s1233 + $0x70] sm:$0xff]
        %v1249 = vld [vmem:[%s1233 + $0x78] sm:$0xff]
        %v1250 = vld [vmem:[%s1233 + $0x80] sm:$0xff]
        %v1251 = vld [vmem:[%s1233 + $0x88] sm:$0xff]
        %v1252 = vld [vmem:[%s1233 + $0x90] sm:$0xff]
        %v1253 = vld [vmem:[%s1233 + $0x98] sm:$0xff]
        %v1254 = vld [vmem:[%s1233 + $0xa0] sm:$0xff]
        %v1255 = vld [vmem:[%s1233 + $0xa8] sm:$0xff]
        %v1256 = vld [vmem:[%s1233 + $0xb0] sm:$0xff]
        %v1257 = vld [vmem:[%s1233 + $0xb8] sm:$0xff]
        %v1258 = vld [vmem:[%s1233 + $0xc0] sm:$0xff]
        %v1259 = vld [vmem:[%s1233 + $0xc8] sm:$0xff]
        %v1260 = vld [vmem:[%s1233 + $0xd0] sm:$0xff]
        %v1261 = vld [vmem:[%s1233 + $0xd8] sm:$0xff]
        %v1262 = vld [vmem:[%s1233 + $0xe0] sm:$0xff]
        %v1263 = vld [vmem:[%s1233 + $0xe8] sm:$0xff]
        %v1264 = vld [vmem:[%s1233 + $0xf0] sm:$0xff]
        %v1265 = vld [vmem:[%s1233 + $0xf8] sm:$0xff]
        %v1266 = vld [vmem:[%s1233 + $0x100] sm:$0xff]
        %v1267 = vld [vmem:[%s1233 + $0x108] sm:$0xff]
        %v1268 = vld [vmem:[%s1233 + $0x110] sm:$0xff]
        %v1269 = vld [vmem:[%s1233 + $0x118] sm:$0xff]
        %v1270 = vld [vmem:[%s1233 + $0x120] sm:$0xff]
        %v1271 = vld [vmem:[%s1233 + $0x128] sm:$0xff]
        %v1272 = vld [vmem:[%s1233 + $0x130] sm:$0xff]
        %v1273 = vld [vmem:[%s1233 + $0x138] sm:$0xff]
        %v1274 = vld [vmem:[%s1233 + $0x140] sm:$0xff]
        %v1275 = vld [vmem:[%s1233 + $0x148] sm:$0xff]
        %v1276 = vld [vmem:[%s1233 + $0x150] sm:$0xff]
        %v1277 = vld [vmem:[%s1233 + $0x158] sm:$0xff]
        %v1278 = vld [vmem:[%s1233 + $0x160] sm:$0xff]
        %v1279 = vld [vmem:[%s1233 + $0x168] sm:$0xff]
        %v1280 = vld [vmem:[%s1233 + $0x170] sm:$0xff]
        %v1281 = vld [vmem:[%s1233 + $0x178] sm:$0xff]
        %v1282 = vld [vmem:[%s1233 + $0x180] sm:$0xff]
        %v1283 = vld [vmem:[%s1233 + $0x188] sm:$0xff]
        %v1284 = vld [vmem:[%s1233 + $0x190] sm:$0xff]
        %v1285 = vld [vmem:[%s1233 + $0x198] sm:$0xff]
        %v1286 = vld [vmem:[%s1233 + $0x1a0] sm:$0xff]
        %v1287 = vld [vmem:[%s1233 + $0x1a8] sm:$0xff]
        %v1288 = vld [vmem:[%s1233 + $0x1b0] sm:$0xff]
        %v1289 = vld [vmem:[%s1233 + $0x1b8] sm:$0xff]
        %v1290 = vld [vmem:[%s1233 + $0x1c0] sm:$0xff]
        %v1291 = vld [vmem:[%s1233 + $0x1c8] sm:$0xff]
        %v1292 = vld [vmem:[%s1233 + $0x1d0] sm:$0xff]
        %v1293 = vld [vmem:[%s1233 + $0x1d8] sm:$0xff]
        %v1294 = vld [vmem:[%s1233 + $0x1e0] sm:$0xff]
        %v1295 = vld [vmem:[%s1233 + $0x1e8] sm:$0xff]
        %v1296 = vld [vmem:[%s1233 + $0x1f0] sm:$0xff]
        %v1297 = vld [vmem:[%s1233 + $0x1f8] sm:$0xff]
        %v1299 = vunpack.c.l.b16 %v1232
        %v1300 = vpack.c.b16 %v344, %v1299
        %vm1301 = vcmask 1046528
        %v1302 = vrot.slane %v1300, 1
        %v1303 = vrot.slane %v347, 1
        %v1304 = vsel %vm1301, %v1302, %v1303
        %v1370 = vunpack.c.l.b16 %v1234
        %v1371 = vunpack.c.h.b16 %v1234
        %v1372 = vunpack.c.l.b16 %v1235
        %v1373 = vunpack.c.h.b16 %v1235
        %v1374 = vunpack.c.l.b16 %v1236
        %v1375 = vunpack.c.h.b16 %v1236
        %v1376 = vunpack.c.l.b16 %v1237
        %v1377 = vunpack.c.h.b16 %v1237
        %v1378 = vunpack.c.l.b16 %v1238
        %v1379 = vunpack.c.h.b16 %v1238
        %v1380 = vunpack.c.l.b16 %v1239
        %v1381 = vunpack.c.h.b16 %v1239
        %v1382 = vunpack.c.l.b16 %v1240
        %v1383 = vunpack.c.h.b16 %v1240
        %v1384 = vunpack.c.l.b16 %v1241
        %v1385 = vunpack.c.h.b16 %v1241
        %v1386 = vunpack.c.l.b16 %v1242
        %v1387 = vunpack.c.h.b16 %v1242
        %v1388 = vunpack.c.l.b16 %v1243
        %v1389 = vunpack.c.h.b16 %v1243
        %v1390 = vunpack.c.l.b16 %v1244
        %v1391 = vunpack.c.h.b16 %v1244
        %v1392 = vunpack.c.l.b16 %v1245
        %v1393 = vunpack.c.h.b16 %v1245
        %v1394 = vunpack.c.l.b16 %v1246
        %v1395 = vunpack.c.h.b16 %v1246
        %v1396 = vunpack.c.l.b16 %v1247
        %v1397 = vunpack.c.h.b16 %v1247
        %v1398 = vunpack.c.l.b16 %v1248
        %v1399 = vunpack.c.h.b16 %v1248
        %v1400 = vunpack.c.l.b16 %v1249
        %v1401 = vunpack.c.h.b16 %v1249
        %v1402 = vunpack.c.l.b16 %v1250
        %v1403 = vunpack.c.h.b16 %v1250
        %v1404 = vunpack.c.l.b16 %v1251
        %v1405 = vunpack.c.h.b16 %v1251
        %v1406 = vunpack.c.l.b16 %v1252
        %v1407 = vunpack.c.h.b16 %v1252
        %v1408 = vunpack.c.l.b16 %v1253
        %v1409 = vunpack.c.h.b16 %v1253
        %v1410 = vunpack.c.l.b16 %v1254
        %v1411 = vunpack.c.h.b16 %v1254
        %v1412 = vunpack.c.l.b16 %v1255
        %v1413 = vunpack.c.h.b16 %v1255
        %v1414 = vunpack.c.l.b16 %v1256
        %v1415 = vunpack.c.h.b16 %v1256
        %v1416 = vunpack.c.l.b16 %v1257
        %v1417 = vunpack.c.h.b16 %v1257
        %v1418 = vunpack.c.l.b16 %v1258
        %v1419 = vunpack.c.h.b16 %v1258
        %v1420 = vunpack.c.l.b16 %v1259
        %v1421 = vunpack.c.h.b16 %v1259
        %v1422 = vunpack.c.l.b16 %v1260
        %v1423 = vunpack.c.h.b16 %v1260
        %v1424 = vunpack.c.l.b16 %v1261
        %v1425 = vunpack.c.h.b16 %v1261
        %v1426 = vunpack.c.l.b16 %v1262
        %v1427 = vunpack.c.h.b16 %v1262
        %v1428 = vunpack.c.l.b16 %v1263
        %v1429 = vunpack.c.h.b16 %v1263
        %v1430 = vunpack.c.l.b16 %v1264
        %v1431 = vunpack.c.h.b16 %v1264
        %v1432 = vunpack.c.l.b16 %v1265
        %v1433 = vunpack.c.h.b16 %v1265
        %v1434 = vunpack.c.l.b16 %v1266
        %v1435 = vunpack.c.h.b16 %v1266
        %v1436 = vunpack.c.l.b16 %v1267
        %v1437 = vunpack.c.h.b16 %v1267
        %v1438 = vunpack.c.l.b16 %v1268
        %v1439 = vunpack.c.h.b16 %v1268
        %v1440 = vunpack.c.l.b16 %v1269
        %v1441 = vunpack.c.h.b16 %v1269
        %v1442 = vunpack.c.l.b16 %v1270
        %v1443 = vunpack.c.h.b16 %v1270
        %v1444 = vunpack.c.l.b16 %v1271
        %v1445 = vunpack.c.h.b16 %v1271
        %v1446 = vunpack.c.l.b16 %v1272
        %v1447 = vunpack.c.h.b16 %v1272
        %v1448 = vunpack.c.l.b16 %v1273
        %v1449 = vunpack.c.h.b16 %v1273
        %v1450 = vunpack.c.l.b16 %v1274
        %v1451 = vunpack.c.h.b16 %v1274
        %v1452 = vunpack.c.l.b16 %v1275
        %v1453 = vunpack.c.h.b16 %v1275
        %v1454 = vunpack.c.l.b16 %v1276
        %v1455 = vunpack.c.h.b16 %v1276
        %v1456 = vunpack.c.l.b16 %v1277
        %v1457 = vunpack.c.h.b16 %v1277
        %v1458 = vunpack.c.l.b16 %v1278
        %v1459 = vunpack.c.h.b16 %v1278
        %v1460 = vunpack.c.l.b16 %v1279
        %v1461 = vunpack.c.h.b16 %v1279
        %v1462 = vunpack.c.l.b16 %v1280
        %v1463 = vunpack.c.h.b16 %v1280
        %v1464 = vunpack.c.l.b16 %v1281
        %v1465 = vunpack.c.h.b16 %v1281
        %v1466 = vunpack.c.l.b16 %v1282
        %v1467 = vunpack.c.h.b16 %v1282
        %v1468 = vunpack.c.l.b16 %v1283
        %v1469 = vunpack.c.h.b16 %v1283
        %v1470 = vunpack.c.l.b16 %v1284
        %v1471 = vunpack.c.h.b16 %v1284
        %v1472 = vunpack.c.l.b16 %v1285
        %v1473 = vunpack.c.h.b16 %v1285
        %v1474 = vunpack.c.l.b16 %v1286
        %v1475 = vunpack.c.h.b16 %v1286
        %v1476 = vunpack.c.l.b16 %v1287
        %v1477 = vunpack.c.h.b16 %v1287
        %v1478 = vunpack.c.l.b16 %v1288
        %v1479 = vunpack.c.h.b16 %v1288
        %v1480 = vunpack.c.l.b16 %v1289
        %v1481 = vunpack.c.h.b16 %v1289
        %v1482 = vunpack.c.l.b16 %v1290
        %v1483 = vunpack.c.h.b16 %v1290
        %v1484 = vunpack.c.l.b16 %v1291
        %v1485 = vunpack.c.h.b16 %v1291
        %v1486 = vunpack.c.l.b16 %v1292
        %v1487 = vunpack.c.h.b16 %v1292
        %v1488 = vunpack.c.l.b16 %v1293
        %v1489 = vunpack.c.h.b16 %v1293
        %v1490 = vunpack.c.l.b16 %v1294
        %v1491 = vunpack.c.h.b16 %v1294
        %v1492 = vunpack.c.l.b16 %v1295
        %v1493 = vunpack.c.h.b16 %v1295
        %v1494 = vunpack.c.l.b16 %v1296
        %v1495 = vunpack.c.h.b16 %v1296
        %v1496 = vunpack.c.l.b16 %v1297
        %v1497 = vunpack.c.h.b16 %v1297
        %v1498 = vpack.c.b16 %v1378, %v1370
        %v1499 = vpack.c.b16 %v1379, %v1371
        %v1500 = vpack.c.b16 %v1380, %v1372
        %v1501 = vpack.c.b16 %v1381, %v1373
        %v1502 = vpack.c.b16 %v1382, %v1374
        %v1503 = vpack.c.b16 %v1383, %v1375
        %v1504 = vpack.c.b16 %v1384, %v1376
        %v1505 = vpack.c.b16 %v1385, %v1377
        %v1506 = vpack.c.b16 %v1394, %v1386
        %v1507 = vpack.c.b16 %v1395, %v1387
        %v1508 = vpack.c.b16 %v1396, %v1388
        %v1509 = vpack.c.b16 %v1397, %v1389
        %v1510 = vpack.c.b16 %v1398, %v1390
        %v1511 = vpack.c.b16 %v1399, %v1391
        %v1512 = vpack.c.b16 %v1400, %v1392
        %v1513 = vpack.c.b16 %v1401, %v1393
        %v1514 = vpack.c.b16 %v1410, %v1402
        %v1515 = vpack.c.b16 %v1411, %v1403
        %v1516 = vpack.c.b16 %v1412, %v1404
        %v1517 = vpack.c.b16 %v1413, %v1405
        %v1518 = vpack.c.b16 %v1414, %v1406
        %v1519 = vpack.c.b16 %v1415, %v1407
        %v1520 = vpack.c.b16 %v1416, %v1408
        %v1521 = vpack.c.b16 %v1417, %v1409
        %v1522 = vpack.c.b16 %v1426, %v1418
        %v1523 = vpack.c.b16 %v1427, %v1419
        %v1524 = vpack.c.b16 %v1428, %v1420
        %v1525 = vpack.c.b16 %v1429, %v1421
        %v1526 = vpack.c.b16 %v1430, %v1422
        %v1527 = vpack.c.b16 %v1431, %v1423
        %v1528 = vpack.c.b16 %v1432, %v1424
        %v1529 = vpack.c.b16 %v1433, %v1425
        %v1530 = vpack.c.b16 %v1442, %v1434
        %v1531 = vpack.c.b16 %v1443, %v1435
        %v1532 = vpack.c.b16 %v1444, %v1436
        %v1533 = vpack.c.b16 %v1445, %v1437
        %v1534 = vpack.c.b16 %v1446, %v1438
        %v1535 = vpack.c.b16 %v1447, %v1439
        %v1536 = vpack.c.b16 %v1448, %v1440
        %v1537 = vpack.c.b16 %v1449, %v1441
        %v1538 = vpack.c.b16 %v1458, %v1450
        %v1539 = vpack.c.b16 %v1459, %v1451
        %v1540 = vpack.c.b16 %v1460, %v1452
        %v1541 = vpack.c.b16 %v1461, %v1453
        %v1542 = vpack.c.b16 %v1462, %v1454
        %v1543 = vpack.c.b16 %v1463, %v1455
        %v1544 = vpack.c.b16 %v1464, %v1456
        %v1545 = vpack.c.b16 %v1465, %v1457
        %v1546 = vpack.c.b16 %v1474, %v1466
        %v1547 = vpack.c.b16 %v1475, %v1467
        %v1548 = vpack.c.b16 %v1476, %v1468
        %v1549 = vpack.c.b16 %v1477, %v1469
        %v1550 = vpack.c.b16 %v1478, %v1470
        %v1551 = vpack.c.b16 %v1479, %v1471
        %v1552 = vpack.c.b16 %v1480, %v1472
        %v1553 = vpack.c.b16 %v1481, %v1473
        %v1554 = vpack.c.b16 %v1490, %v1482
        %v1555 = vpack.c.b16 %v1491, %v1483
        %v1556 = vpack.c.b16 %v1492, %v1484
        %v1557 = vpack.c.b16 %v1493, %v1485
        %v1558 = vpack.c.b16 %v1494, %v1486
        %v1559 = vpack.c.b16 %v1495, %v1487
        %v1560 = vpack.c.b16 %v1496, %v1488
        %v1561 = vpack.c.b16 %v1497, %v1489
        %1626 = vmatpush.bf16.msra.mxu0 %v1554
        %1627 = vmatpush.bf16.msra.mxu0 %v1546
        %1628 = vmatpush.bf16.msra.mxu0 %v1538
        %1629 = vmatpush.bf16.msra.mxu0 %v1530
        %1630 = vmatpush.bf16.msra.mxu0 %v1522
        %1631 = vmatpush.bf16.msra.mxu0 %v1514
        %1632 = vmatpush.bf16.msra.mxu0 %v1506
        %1633 = vmatpush.bf16.msra.mxu0 %v1498
        %1634 = vmatmul.bf16.gmra.mxu0 %v1304
        %v1635 = vpop.f32.mrf.mxu0
        %v1636 = vadd.f32 0.0, %v1635
        %v1637 = vpop.f32.mrf.mxu0
        %v1638 = vadd.f32 0.0, %v1637
        %1639 = vdwg.mxu0
        %1640 = vmatpush.bf16.msra.mxu0 %v1555
        %1641 = vmatpush.bf16.msra.mxu0 %v1547
        %1642 = vmatpush.bf16.msra.mxu0 %v1539
        %1643 = vmatpush.bf16.msra.mxu0 %v1531
        %1644 = vmatpush.bf16.msra.mxu0 %v1523
        %1645 = vmatpush.bf16.msra.mxu0 %v1515
        %1646 = vmatpush.bf16.msra.mxu0 %v1507
        %1647 = vmatpush.bf16.msra.mxu0 %v1499
        %1648 = vmatmul.bf16.gmra.mxu0 %v1304
        %v1649 = vpop.f32.mrf.mxu0
        %v1650 = vadd.f32 0.0, %v1649
        %v1651 = vpop.f32.mrf.mxu0
        %v1652 = vadd.f32 0.0, %v1651
        %1653 = vdwg.mxu0
        %1654 = vmatpush.bf16.msra.mxu0 %v1556
        %1655 = vmatpush.bf16.msra.mxu0 %v1548
        %1656 = vmatpush.bf16.msra.mxu0 %v1540
        %1657 = vmatpush.bf16.msra.mxu0 %v1532
        %1658 = vmatpush.bf16.msra.mxu0 %v1524
        %1659 = vmatpush.bf16.msra.mxu0 %v1516
        %1660 = vmatpush.bf16.msra.mxu0 %v1508
        %1661 = vmatpush.bf16.msra.mxu0 %v1500
        %1662 = vmatmul.bf16.gmra.mxu0 %v1304
        %v1663 = vpop.f32.mrf.mxu0
        %v1664 = vadd.f32 0.0, %v1663
        %v1665 = vpop.f32.mrf.mxu0
        %v1666 = vadd.f32 0.0, %v1665
        %1667 = vdwg.mxu0
        %1668 = vmatpush.bf16.msra.mxu0 %v1557
        %1669 = vmatpush.bf16.msra.mxu0 %v1549
        %1670 = vmatpush.bf16.msra.mxu0 %v1541
        %1671 = vmatpush.bf16.msra.mxu0 %v1533
        %1672 = vmatpush.bf16.msra.mxu0 %v1525
        %1673 = vmatpush.bf16.msra.mxu0 %v1517
        %1674 = vmatpush.bf16.msra.mxu0 %v1509
        %1675 = vmatpush.bf16.msra.mxu0 %v1501
        %1676 = vmatmul.bf16.gmra.mxu0 %v1304
        %v1677 = vpop.f32.mrf.mxu0
        %v1678 = vadd.f32 0.0, %v1677
        %v1679 = vpop.f32.mrf.mxu0
        %v1680 = vadd.f32 0.0, %v1679
        %1681 = vdwg.mxu0
        %1682 = vmatpush.bf16.msra.mxu0 %v1558
        %1683 = vmatpush.bf16.msra.mxu0 %v1550
        %1684 = vmatpush.bf16.msra.mxu0 %v1542
        %1685 = vmatpush.bf16.msra.mxu0 %v1534
        %1686 = vmatpush.bf16.msra.mxu0 %v1526
        %1687 = vmatpush.bf16.msra.mxu0 %v1518
        %1688 = vmatpush.bf16.msra.mxu0 %v1510
        %1689 = vmatpush.bf16.msra.mxu0 %v1502
        %1690 = vmatmul.bf16.gmra.mxu0 %v1304
        %v1691 = vpop.f32.mrf.mxu0
        %v1692 = vadd.f32 0.0, %v1691
        %v1693 = vpop.f32.mrf.mxu0
        %v1694 = vadd.f32 0.0, %v1693
        %1695 = vdwg.mxu0
        %1696 = vmatpush.bf16.msra.mxu0 %v1559
        %1697 = vmatpush.bf16.msra.mxu0 %v1551
        %1698 = vmatpush.bf16.msra.mxu0 %v1543
        %1699 = vmatpush.bf16.msra.mxu0 %v1535
        %1700 = vmatpush.bf16.msra.mxu0 %v1527
        %1701 = vmatpush.bf16.msra.mxu0 %v1519
        %1702 = vmatpush.bf16.msra.mxu0 %v1511
        %1703 = vmatpush.bf16.msra.mxu0 %v1503
        %1704 = vmatmul.bf16.gmra.mxu0 %v1304
        %v1705 = vpop.f32.mrf.mxu0
        %v1706 = vadd.f32 0.0, %v1705
        %v1707 = vpop.f32.mrf.mxu0
        %v1708 = vadd.f32 0.0, %v1707
        %1709 = vdwg.mxu0
        %1710 = vmatpush.bf16.msra.mxu0 %v1560
        %1711 = vmatpush.bf16.msra.mxu0 %v1552
        %1712 = vmatpush.bf16.msra.mxu0 %v1544
        %1713 = vmatpush.bf16.msra.mxu0 %v1536
        %1714 = vmatpush.bf16.msra.mxu0 %v1528
        %1715 = vmatpush.bf16.msra.mxu0 %v1520
        %1716 = vmatpush.bf16.msra.mxu0 %v1512
        %1717 = vmatpush.bf16.msra.mxu0 %v1504
        %1718 = vmatmul.bf16.gmra.mxu0 %v1304
        %v1719 = vpop.f32.mrf.mxu0
        %v1720 = vadd.f32 0.0, %v1719
        %v1721 = vpop.f32.mrf.mxu0
        %v1722 = vadd.f32 0.0, %v1721
        %1723 = vdwg.mxu0
        %1724 = vmatpush.bf16.msra.mxu0 %v1561
        %1725 = vmatpush.bf16.msra.mxu0 %v1553
        %1726 = vmatpush.bf16.msra.mxu0 %v1545
        %1727 = vmatpush.bf16.msra.mxu0 %v1537
        %1728 = vmatpush.bf16.msra.mxu0 %v1529
        %1729 = vmatpush.bf16.msra.mxu0 %v1521
        %1730 = vmatpush.bf16.msra.mxu0 %v1513
        %1731 = vmatpush.bf16.msra.mxu0 %v1505
        %1732 = vmatmul.bf16.gmra.mxu0 %v1304
        %v1733 = vpop.f32.mrf.mxu0
        %v1734 = vadd.f32 0.0, %v1733
        %v1735 = vpop.f32.mrf.mxu0
        %v1736 = vadd.f32 0.0, %v1735
        %1737 = vdwg.mxu0
        %v1738 = vadd.f32 %v1130, %v1636
        %v1739 = vadd.f32 %v1144, %v1650
        %v1740 = vadd.f32 %v1158, %v1664
        %v1741 = vadd.f32 %v1172, %v1678
        %v1742 = vadd.f32 %v1186, %v1692
        %v1743 = vadd.f32 %v1200, %v1706
        %v1744 = vadd.f32 %v1214, %v1720
        %v1745 = vadd.f32 %v1228, %v1734
        %v1746 = vadd.f32 %v1132, %v1638
        %v1747 = vadd.f32 %v1146, %v1652
        %v1748 = vadd.f32 %v1160, %v1666
        %v1749 = vadd.f32 %v1174, %v1680
        %v1750 = vadd.f32 %v1188, %v1694
        %v1751 = vadd.f32 %v1202, %v1708
        %v1752 = vadd.f32 %v1216, %v1722
        %v1753 = vadd.f32 %v1230, %v1736
        %v1754 = vld [vmem:[%s202 + $0x8] sm:$0x3]
        %s1755 = scalar_lea.vmem %s1, 1536
        %v1756 = vld [vmem:[%s1755] sm:$0xff]
        %v1757 = vld [vmem:[%s1755 + $0x8] sm:$0xff]
        %v1758 = vld [vmem:[%s1755 + $0x10] sm:$0xff]
        %v1759 = vld [vmem:[%s1755 + $0x18] sm:$0xff]
        %v1760 = vld [vmem:[%s1755 + $0x20] sm:$0xff]
        %v1761 = vld [vmem:[%s1755 + $0x28] sm:$0xff]
        %v1762 = vld [vmem:[%s1755 + $0x30] sm:$0xff]
        %v1763 = vld [vmem:[%s1755 + $0x38] sm:$0xff]
        %v1764 = vld [vmem:[%s1755 + $0x40] sm:$0xff]
        %v1765 = vld [vmem:[%s1755 + $0x48] sm:$0xff]
        %v1766 = vld [vmem:[%s1755 + $0x50] sm:$0xff]
        %v1767 = vld [vmem:[%s1755 + $0x58] sm:$0xff]
        %v1768 = vld [vmem:[%s1755 + $0x60] sm:$0xff]
        %v1769 = vld [vmem:[%s1755 + $0x68] sm:$0xff]
        %v1770 = vld [vmem:[%s1755 + $0x70] sm:$0xff]
        %v1771 = vld [vmem:[%s1755 + $0x78] sm:$0xff]
        %v1772 = vld [vmem:[%s1755 + $0x80] sm:$0xff]
        %v1773 = vld [vmem:[%s1755 + $0x88] sm:$0xff]
        %v1774 = vld [vmem:[%s1755 + $0x90] sm:$0xff]
        %v1775 = vld [vmem:[%s1755 + $0x98] sm:$0xff]
        %v1776 = vld [vmem:[%s1755 + $0xa0] sm:$0xff]
        %v1777 = vld [vmem:[%s1755 + $0xa8] sm:$0xff]
        %v1778 = vld [vmem:[%s1755 + $0xb0] sm:$0xff]
        %v1779 = vld [vmem:[%s1755 + $0xb8] sm:$0xff]
        %v1780 = vld [vmem:[%s1755 + $0xc0] sm:$0xff]
        %v1781 = vld [vmem:[%s1755 + $0xc8] sm:$0xff]
        %v1782 = vld [vmem:[%s1755 + $0xd0] sm:$0xff]
        %v1783 = vld [vmem:[%s1755 + $0xd8] sm:$0xff]
        %v1784 = vld [vmem:[%s1755 + $0xe0] sm:$0xff]
        %v1785 = vld [vmem:[%s1755 + $0xe8] sm:$0xff]
        %v1786 = vld [vmem:[%s1755 + $0xf0] sm:$0xff]
        %v1787 = vld [vmem:[%s1755 + $0xf8] sm:$0xff]
        %v1788 = vld [vmem:[%s1755 + $0x100] sm:$0xff]
        %v1789 = vld [vmem:[%s1755 + $0x108] sm:$0xff]
        %v1790 = vld [vmem:[%s1755 + $0x110] sm:$0xff]
        %v1791 = vld [vmem:[%s1755 + $0x118] sm:$0xff]
        %v1792 = vld [vmem:[%s1755 + $0x120] sm:$0xff]
        %v1793 = vld [vmem:[%s1755 + $0x128] sm:$0xff]
        %v1794 = vld [vmem:[%s1755 + $0x130] sm:$0xff]
        %v1795 = vld [vmem:[%s1755 + $0x138] sm:$0xff]
        %v1796 = vld [vmem:[%s1755 + $0x140] sm:$0xff]
        %v1797 = vld [vmem:[%s1755 + $0x148] sm:$0xff]
        %v1798 = vld [vmem:[%s1755 + $0x150] sm:$0xff]
        %v1799 = vld [vmem:[%s1755 + $0x158] sm:$0xff]
        %v1800 = vld [vmem:[%s1755 + $0x160] sm:$0xff]
        %v1801 = vld [vmem:[%s1755 + $0x168] sm:$0xff]
        %v1802 = vld [vmem:[%s1755 + $0x170] sm:$0xff]
        %v1803 = vld [vmem:[%s1755 + $0x178] sm:$0xff]
        %v1804 = vld [vmem:[%s1755 + $0x180] sm:$0xff]
        %v1805 = vld [vmem:[%s1755 + $0x188] sm:$0xff]
        %v1806 = vld [vmem:[%s1755 + $0x190] sm:$0xff]
        %v1807 = vld [vmem:[%s1755 + $0x198] sm:$0xff]
        %v1808 = vld [vmem:[%s1755 + $0x1a0] sm:$0xff]
        %v1809 = vld [vmem:[%s1755 + $0x1a8] sm:$0xff]
        %v1810 = vld [vmem:[%s1755 + $0x1b0] sm:$0xff]
        %v1811 = vld [vmem:[%s1755 + $0x1b8] sm:$0xff]
        %v1812 = vld [vmem:[%s1755 + $0x1c0] sm:$0xff]
        %v1813 = vld [vmem:[%s1755 + $0x1c8] sm:$0xff]
        %v1814 = vld [vmem:[%s1755 + $0x1d0] sm:$0xff]
        %v1815 = vld [vmem:[%s1755 + $0x1d8] sm:$0xff]
        %v1816 = vld [vmem:[%s1755 + $0x1e0] sm:$0xff]
        %v1817 = vld [vmem:[%s1755 + $0x1e8] sm:$0xff]
        %v1818 = vld [vmem:[%s1755 + $0x1f0] sm:$0xff]
        %v1819 = vld [vmem:[%s1755 + $0x1f8] sm:$0xff]
        %v1821 = vunpack.c.l.b16 %v1754
        %v1822 = vpack.c.b16 %v1821, %v1821
        %vm1823 = vsmask.f32 6400
        %v1825 = vshrl.u32 %v1300, 16
        %v1827 = vrot.slane %v1825, 1
        %v1828 = vshll.u32 %v1300, 16
        %v1830 = vrot.slane %v1828, 2
        %v1831 = vor.u32 %v1827, %v1830
        %v1833 = vshrl.u32 %v1822, 16
        %v1835 = vrot.slane %v1833, 1
        %v1836 = vshll.u32 %v1822, 16
        %v1838 = vrot.slane %v1836, 2
        %v1839 = vor.u32 %v1835, %v1838
        %v1840 = vsel %vm1823, %v1831, %v1839
        %v1906 = vunpack.c.l.b16 %v1756
        %v1907 = vunpack.c.h.b16 %v1756
        %v1908 = vunpack.c.l.b16 %v1757
        %v1909 = vunpack.c.h.b16 %v1757
        %v1910 = vunpack.c.l.b16 %v1758
        %v1911 = vunpack.c.h.b16 %v1758
        %v1912 = vunpack.c.l.b16 %v1759
        %v1913 = vunpack.c.h.b16 %v1759
        %v1914 = vunpack.c.l.b16 %v1760
        %v1915 = vunpack.c.h.b16 %v1760
        %v1916 = vunpack.c.l.b16 %v1761
        %v1917 = vunpack.c.h.b16 %v1761
        %v1918 = vunpack.c.l.b16 %v1762
        %v1919 = vunpack.c.h.b16 %v1762
        %v1920 = vunpack.c.l.b16 %v1763
        %v1921 = vunpack.c.h.b16 %v1763
        %v1922 = vunpack.c.l.b16 %v1764
        %v1923 = vunpack.c.h.b16 %v1764
        %v1924 = vunpack.c.l.b16 %v1765
        %v1925 = vunpack.c.h.b16 %v1765
        %v1926 = vunpack.c.l.b16 %v1766
        %v1927 = vunpack.c.h.b16 %v1766
        %v1928 = vunpack.c.l.b16 %v1767
        %v1929 = vunpack.c.h.b16 %v1767
        %v1930 = vunpack.c.l.b16 %v1768
        %v1931 = vunpack.c.h.b16 %v1768
        %v1932 = vunpack.c.l.b16 %v1769
        %v1933 = vunpack.c.h.b16 %v1769
        %v1934 = vunpack.c.l.b16 %v1770
        %v1935 = vunpack.c.h.b16 %v1770
        %v1936 = vunpack.c.l.b16 %v1771
        %v1937 = vunpack.c.h.b16 %v1771
        %v1938 = vunpack.c.l.b16 %v1772
        %v1939 = vunpack.c.h.b16 %v1772
        %v1940 = vunpack.c.l.b16 %v1773
        %v1941 = vunpack.c.h.b16 %v1773
        %v1942 = vunpack.c.l.b16 %v1774
        %v1943 = vunpack.c.h.b16 %v1774
        %v1944 = vunpack.c.l.b16 %v1775
        %v1945 = vunpack.c.h.b16 %v1775
        %v1946 = vunpack.c.l.b16 %v1776
        %v1947 = vunpack.c.h.b16 %v1776
        %v1948 = vunpack.c.l.b16 %v1777
        %v1949 = vunpack.c.h.b16 %v1777
        %v1950 = vunpack.c.l.b16 %v1778
        %v1951 = vunpack.c.h.b16 %v1778
        %v1952 = vunpack.c.l.b16 %v1779
        %v1953 = vunpack.c.h.b16 %v1779
        %v1954 = vunpack.c.l.b16 %v1780
        %v1955 = vunpack.c.h.b16 %v1780
        %v1956 = vunpack.c.l.b16 %v1781
        %v1957 = vunpack.c.h.b16 %v1781
        %v1958 = vunpack.c.l.b16 %v1782
        %v1959 = vunpack.c.h.b16 %v1782
        %v1960 = vunpack.c.l.b16 %v1783
        %v1961 = vunpack.c.h.b16 %v1783
        %v1962 = vunpack.c.l.b16 %v1784
        %v1963 = vunpack.c.h.b16 %v1784
        %v1964 = vunpack.c.l.b16 %v1785
        %v1965 = vunpack.c.h.b16 %v1785
        %v1966 = vunpack.c.l.b16 %v1786
        %v1967 = vunpack.c.h.b16 %v1786
        %v1968 = vunpack.c.l.b16 %v1787
        %v1969 = vunpack.c.h.b16 %v1787
        %v1970 = vunpack.c.l.b16 %v1788
        %v1971 = vunpack.c.h.b16 %v1788
        %v1972 = vunpack.c.l.b16 %v1789
        %v1973 = vunpack.c.h.b16 %v1789
        %v1974 = vunpack.c.l.b16 %v1790
        %v1975 = vunpack.c.h.b16 %v1790
        %v1976 = vunpack.c.l.b16 %v1791
        %v1977 = vunpack.c.h.b16 %v1791
        %v1978 = vunpack.c.l.b16 %v1792
        %v1979 = vunpack.c.h.b16 %v1792
        %v1980 = vunpack.c.l.b16 %v1793
        %v1981 = vunpack.c.h.b16 %v1793
        %v1982 = vunpack.c.l.b16 %v1794
        %v1983 = vunpack.c.h.b16 %v1794
        %v1984 = vunpack.c.l.b16 %v1795
        %v1985 = vunpack.c.h.b16 %v1795
        %v1986 = vunpack.c.l.b16 %v1796
        %v1987 = vunpack.c.h.b16 %v1796
        %v1988 = vunpack.c.l.b16 %v1797
        %v1989 = vunpack.c.h.b16 %v1797
        %v1990 = vunpack.c.l.b16 %v1798
        %v1991 = vunpack.c.h.b16 %v1798
        %v1992 = vunpack.c.l.b16 %v1799
        %v1993 = vunpack.c.h.b16 %v1799
        %v1994 = vunpack.c.l.b16 %v1800
        %v1995 = vunpack.c.h.b16 %v1800
        %v1996 = vunpack.c.l.b16 %v1801
        %v1997 = vunpack.c.h.b16 %v1801
        %v1998 = vunpack.c.l.b16 %v1802
        %v1999 = vunpack.c.h.b16 %v1802
        %v2000 = vunpack.c.l.b16 %v1803
        %v2001 = vunpack.c.h.b16 %v1803
        %v2002 = vunpack.c.l.b16 %v1804
        %v2003 = vunpack.c.h.b16 %v1804
        %v2004 = vunpack.c.l.b16 %v1805
        %v2005 = vunpack.c.h.b16 %v1805
        %v2006 = vunpack.c.l.b16 %v1806
        %v2007 = vunpack.c.h.b16 %v1806
        %v2008 = vunpack.c.l.b16 %v1807
        %v2009 = vunpack.c.h.b16 %v1807
        %v2010 = vunpack.c.l.b16 %v1808
        %v2011 = vunpack.c.h.b16 %v1808
        %v2012 = vunpack.c.l.b16 %v1809
        %v2013 = vunpack.c.h.b16 %v1809
        %v2014 = vunpack.c.l.b16 %v1810
        %v2015 = vunpack.c.h.b16 %v1810
        %v2016 = vunpack.c.l.b16 %v1811
        %v2017 = vunpack.c.h.b16 %v1811
        %v2018 = vunpack.c.l.b16 %v1812
        %v2019 = vunpack.c.h.b16 %v1812
        %v2020 = vunpack.c.l.b16 %v1813
        %v2021 = vunpack.c.h.b16 %v1813
        %v2022 = vunpack.c.l.b16 %v1814
        %v2023 = vunpack.c.h.b16 %v1814
        %v2024 = vunpack.c.l.b16 %v1815
        %v2025 = vunpack.c.h.b16 %v1815
        %v2026 = vunpack.c.l.b16 %v1816
        %v2027 = vunpack.c.h.b16 %v1816
        %v2028 = vunpack.c.l.b16 %v1817
        %v2029 = vunpack.c.h.b16 %v1817
        %v2030 = vunpack.c.l.b16 %v1818
        %v2031 = vunpack.c.h.b16 %v1818
        %v2032 = vunpack.c.l.b16 %v1819
        %v2033 = vunpack.c.h.b16 %v1819
        %v2034 = vpack.c.b16 %v1914, %v1906
        %v2035 = vpack.c.b16 %v1915, %v1907
        %v2036 = vpack.c.b16 %v1916, %v1908
        %v2037 = vpack.c.b16 %v1917, %v1909
        %v2038 = vpack.c.b16 %v1918, %v1910
        %v2039 = vpack.c.b16 %v1919, %v1911
        %v2040 = vpack.c.b16 %v1920, %v1912
        %v2041 = vpack.c.b16 %v1921, %v1913
        %v2042 = vpack.c.b16 %v1930, %v1922
        %v2043 = vpack.c.b16 %v1931, %v1923
        %v2044 = vpack.c.b16 %v1932, %v1924
        %v2045 = vpack.c.b16 %v1933, %v1925
        %v2046 = vpack.c.b16 %v1934, %v1926
        %v2047 = vpack.c.b16 %v1935, %v1927
        %v2048 = vpack.c.b16 %v1936, %v1928
        %v2049 = vpack.c.b16 %v1937, %v1929
        %v2050 = vpack.c.b16 %v1946, %v1938
        %v2051 = vpack.c.b16 %v1947, %v1939
        %v2052 = vpack.c.b16 %v1948, %v1940
        %v2053 = vpack.c.b16 %v1949, %v1941
        %v2054 = vpack.c.b16 %v1950, %v1942
        %v2055 = vpack.c.b16 %v1951, %v1943
        %v2056 = vpack.c.b16 %v1952, %v1944
        %v2057 = vpack.c.b16 %v1953, %v1945
        %v2058 = vpack.c.b16 %v1962, %v1954
        %v2059 = vpack.c.b16 %v1963, %v1955
        %v2060 = vpack.c.b16 %v1964, %v1956
        %v2061 = vpack.c.b16 %v1965, %v1957
        %v2062 = vpack.c.b16 %v1966, %v1958
        %v2063 = vpack.c.b16 %v1967, %v1959
        %v2064 = vpack.c.b16 %v1968, %v1960
        %v2065 = vpack.c.b16 %v1969, %v1961
        %v2066 = vpack.c.b16 %v1978, %v1970
        %v2067 = vpack.c.b16 %v1979, %v1971
        %v2068 = vpack.c.b16 %v1980, %v1972
        %v2069 = vpack.c.b16 %v1981, %v1973
        %v2070 = vpack.c.b16 %v1982, %v1974
        %v2071 = vpack.c.b16 %v1983, %v1975
        %v2072 = vpack.c.b16 %v1984, %v1976
        %v2073 = vpack.c.b16 %v1985, %v1977
        %v2074 = vpack.c.b16 %v1994, %v1986
        %v2075 = vpack.c.b16 %v1995, %v1987
        %v2076 = vpack.c.b16 %v1996, %v1988
        %v2077 = vpack.c.b16 %v1997, %v1989
        %v2078 = vpack.c.b16 %v1998, %v1990
        %v2079 = vpack.c.b16 %v1999, %v1991
        %v2080 = vpack.c.b16 %v2000, %v1992
        %v2081 = vpack.c.b16 %v2001, %v1993
        %v2082 = vpack.c.b16 %v2010, %v2002
        %v2083 = vpack.c.b16 %v2011, %v2003
        %v2084 = vpack.c.b16 %v2012, %v2004
        %v2085 = vpack.c.b16 %v2013, %v2005
        %v2086 = vpack.c.b16 %v2014, %v2006
        %v2087 = vpack.c.b16 %v2015, %v2007
        %v2088 = vpack.c.b16 %v2016, %v2008
        %v2089 = vpack.c.b16 %v2017, %v2009
        %v2090 = vpack.c.b16 %v2026, %v2018
        %v2091 = vpack.c.b16 %v2027, %v2019
        %v2092 = vpack.c.b16 %v2028, %v2020
        %v2093 = vpack.c.b16 %v2029, %v2021
        %v2094 = vpack.c.b16 %v2030, %v2022
        %v2095 = vpack.c.b16 %v2031, %v2023
        %v2096 = vpack.c.b16 %v2032, %v2024
        %v2097 = vpack.c.b16 %v2033, %v2025
        %2162 = vmatpush.bf16.msra.mxu0 %v2090
        %2163 = vmatpush.bf16.msra.mxu0 %v2082
        %2164 = vmatpush.bf16.msra.mxu0 %v2074
        %2165 = vmatpush.bf16.msra.mxu0 %v2066
        %2166 = vmatpush.bf16.msra.mxu0 %v2058
        %2167 = vmatpush.bf16.msra.mxu0 %v2050
        %2168 = vmatpush.bf16.msra.mxu0 %v2042
        %2169 = vmatpush.bf16.msra.mxu0 %v2034
        %2170 = vmatmul.bf16.gmra.mxu0 %v1840
        %v2171 = vpop.f32.mrf.mxu0
        %v2172 = vadd.f32 0.0, %v2171
        %v2173 = vpop.f32.mrf.mxu0
        %v2174 = vadd.f32 0.0, %v2173
        %2175 = vdwg.mxu0
        %2176 = vmatpush.bf16.msra.mxu0 %v2091
        %2177 = vmatpush.bf16.msra.mxu0 %v2083
        %2178 = vmatpush.bf16.msra.mxu0 %v2075
        %2179 = vmatpush.bf16.msra.mxu0 %v2067
        %2180 = vmatpush.bf16.msra.mxu0 %v2059
        %2181 = vmatpush.bf16.msra.mxu0 %v2051
        %2182 = vmatpush.bf16.msra.mxu0 %v2043
        %2183 = vmatpush.bf16.msra.mxu0 %v2035
        %2184 = vmatmul.bf16.gmra.mxu0 %v1840
        %v2185 = vpop.f32.mrf.mxu0
        %v2186 = vadd.f32 0.0, %v2185
        %v2187 = vpop.f32.mrf.mxu0
        %v2188 = vadd.f32 0.0, %v2187
        %2189 = vdwg.mxu0
        %2190 = vmatpush.bf16.msra.mxu0 %v2092
        %2191 = vmatpush.bf16.msra.mxu0 %v2084
        %2192 = vmatpush.bf16.msra.mxu0 %v2076
        %2193 = vmatpush.bf16.msra.mxu0 %v2068
        %2194 = vmatpush.bf16.msra.mxu0 %v2060
        %2195 = vmatpush.bf16.msra.mxu0 %v2052
        %2196 = vmatpush.bf16.msra.mxu0 %v2044
        %2197 = vmatpush.bf16.msra.mxu0 %v2036
        %2198 = vmatmul.bf16.gmra.mxu0 %v1840
        %v2199 = vpop.f32.mrf.mxu0
        %v2200 = vadd.f32 0.0, %v2199
        %v2201 = vpop.f32.mrf.mxu0
        %v2202 = vadd.f32 0.0, %v2201
        %2203 = vdwg.mxu0
        %2204 = vmatpush.bf16.msra.mxu0 %v2093
        %2205 = vmatpush.bf16.msra.mxu0 %v2085
        %2206 = vmatpush.bf16.msra.mxu0 %v2077
        %2207 = vmatpush.bf16.msra.mxu0 %v2069
        %2208 = vmatpush.bf16.msra.mxu0 %v2061
        %2209 = vmatpush.bf16.msra.mxu0 %v2053
        %2210 = vmatpush.bf16.msra.mxu0 %v2045
        %2211 = vmatpush.bf16.msra.mxu0 %v2037
        %2212 = vmatmul.bf16.gmra.mxu0 %v1840
        %v2213 = vpop.f32.mrf.mxu0
        %v2214 = vadd.f32 0.0, %v2213
        %v2215 = vpop.f32.mrf.mxu0
        %v2216 = vadd.f32 0.0, %v2215
        %2217 = vdwg.mxu0
        %2218 = vmatpush.bf16.msra.mxu0 %v2094
        %2219 = vmatpush.bf16.msra.mxu0 %v2086
        %2220 = vmatpush.bf16.msra.mxu0 %v2078
        %2221 = vmatpush.bf16.msra.mxu0 %v2070
        %2222 = vmatpush.bf16.msra.mxu0 %v2062
        %2223 = vmatpush.bf16.msra.mxu0 %v2054
        %2224 = vmatpush.bf16.msra.mxu0 %v2046
        %2225 = vmatpush.bf16.msra.mxu0 %v2038
        %2226 = vmatmul.bf16.gmra.mxu0 %v1840
        %v2227 = vpop.f32.mrf.mxu0
        %v2228 = vadd.f32 0.0, %v2227
        %v2229 = vpop.f32.mrf.mxu0
        %v2230 = vadd.f32 0.0, %v2229
        %2231 = vdwg.mxu0
        %2232 = vmatpush.bf16.msra.mxu0 %v2095
        %2233 = vmatpush.bf16.msra.mxu0 %v2087
        %2234 = vmatpush.bf16.msra.mxu0 %v2079
        %2235 = vmatpush.bf16.msra.mxu0 %v2071
        %2236 = vmatpush.bf16.msra.mxu0 %v2063
        %2237 = vmatpush.bf16.msra.mxu0 %v2055
        %2238 = vmatpush.bf16.msra.mxu0 %v2047
        %2239 = vmatpush.bf16.msra.mxu0 %v2039
        %2240 = vmatmul.bf16.gmra.mxu0 %v1840
        %v2241 = vpop.f32.mrf.mxu0
        %v2242 = vadd.f32 0.0, %v2241
        %v2243 = vpop.f32.mrf.mxu0
        %v2244 = vadd.f32 0.0, %v2243
        %2245 = vdwg.mxu0
        %2246 = vmatpush.bf16.msra.mxu0 %v2096
        %2247 = vmatpush.bf16.msra.mxu0 %v2088
        %2248 = vmatpush.bf16.msra.mxu0 %v2080
        %2249 = vmatpush.bf16.msra.mxu0 %v2072
        %2250 = vmatpush.bf16.msra.mxu0 %v2064
        %2251 = vmatpush.bf16.msra.mxu0 %v2056
        %2252 = vmatpush.bf16.msra.mxu0 %v2048
        %2253 = vmatpush.bf16.msra.mxu0 %v2040
        %2254 = vmatmul.bf16.gmra.mxu0 %v1840
        %v2255 = vpop.f32.mrf.mxu0
        %v2256 = vadd.f32 0.0, %v2255
        %v2257 = vpop.f32.mrf.mxu0
        %v2258 = vadd.f32 0.0, %v2257
        %2259 = vdwg.mxu0
        %2260 = vmatpush.bf16.msra.mxu0 %v2097
        %2261 = vmatpush.bf16.msra.mxu0 %v2089
        %2262 = vmatpush.bf16.msra.mxu0 %v2081
        %2263 = vmatpush.bf16.msra.mxu0 %v2073
        %2264 = vmatpush.bf16.msra.mxu0 %v2065
        %2265 = vmatpush.bf16.msra.mxu0 %v2057
        %2266 = vmatpush.bf16.msra.mxu0 %v2049
        %2267 = vmatpush.bf16.msra.mxu0 %v2041
        %2268 = vmatmul.bf16.gmra.mxu0 %v1840
        %v2269 = vpop.f32.mrf.mxu0
        %v2270 = vadd.f32 0.0, %v2269
        %v2271 = vpop.f32.mrf.mxu0
        %v2272 = vadd.f32 0.0, %v2271
        %2273 = vdwg.mxu0
        %v2274 = vadd.f32 %v1738, %v2172
        %v2275 = vadd.f32 %v1739, %v2186
        %v2276 = vadd.f32 %v1740, %v2200
        %v2277 = vadd.f32 %v1741, %v2214
        %v2278 = vadd.f32 %v1742, %v2228
        %v2279 = vadd.f32 %v1743, %v2242
        %v2280 = vadd.f32 %v1744, %v2256
        %v2281 = vadd.f32 %v1745, %v2270
        %v2282 = vadd.f32 %v1746, %v2174
        %v2283 = vadd.f32 %v1747, %v2188
        %v2284 = vadd.f32 %v1748, %v2202
        %v2285 = vadd.f32 %v1749, %v2216
        %v2286 = vadd.f32 %v1750, %v2230
        %v2287 = vadd.f32 %v1751, %v2244
        %v2288 = vadd.f32 %v1752, %v2258
        %v2289 = vadd.f32 %v1753, %v2272
        %v2290 = vld [vmem:[%s202] sm:$0xc]
        %s2291 = scalar_lea.vmem %s1, 2048
        %v2292 = vld [vmem:[%s2291] sm:$0xff]
        %v2293 = vld [vmem:[%s2291 + $0x8] sm:$0xff]
        %v2294 = vld [vmem:[%s2291 + $0x10] sm:$0xff]
        %v2295 = vld [vmem:[%s2291 + $0x18] sm:$0xff]
        %v2296 = vld [vmem:[%s2291 + $0x20] sm:$0xff]
        %v2297 = vld [vmem:[%s2291 + $0x28] sm:$0xff]
        %v2298 = vld [vmem:[%s2291 + $0x30] sm:$0xff]
        %v2299 = vld [vmem:[%s2291 + $0x38] sm:$0xff]
        %v2300 = vld [vmem:[%s2291 + $0x40] sm:$0xff]
        %v2301 = vld [vmem:[%s2291 + $0x48] sm:$0xff]
        %v2302 = vld [vmem:[%s2291 + $0x50] sm:$0xff]
        %v2303 = vld [vmem:[%s2291 + $0x58] sm:$0xff]
        %v2304 = vld [vmem:[%s2291 + $0x60] sm:$0xff]
        %v2305 = vld [vmem:[%s2291 + $0x68] sm:$0xff]
        %v2306 = vld [vmem:[%s2291 + $0x70] sm:$0xff]
        %v2307 = vld [vmem:[%s2291 + $0x78] sm:$0xff]
        %v2308 = vld [vmem:[%s2291 + $0x80] sm:$0xff]
        %v2309 = vld [vmem:[%s2291 + $0x88] sm:$0xff]
        %v2310 = vld [vmem:[%s2291 + $0x90] sm:$0xff]
        %v2311 = vld [vmem:[%s2291 + $0x98] sm:$0xff]
        %v2312 = vld [vmem:[%s2291 + $0xa0] sm:$0xff]
        %v2313 = vld [vmem:[%s2291 + $0xa8] sm:$0xff]
        %v2314 = vld [vmem:[%s2291 + $0xb0] sm:$0xff]
        %v2315 = vld [vmem:[%s2291 + $0xb8] sm:$0xff]
        %v2316 = vld [vmem:[%s2291 + $0xc0] sm:$0xff]
        %v2317 = vld [vmem:[%s2291 + $0xc8] sm:$0xff]
        %v2318 = vld [vmem:[%s2291 + $0xd0] sm:$0xff]
        %v2319 = vld [vmem:[%s2291 + $0xd8] sm:$0xff]
        %v2320 = vld [vmem:[%s2291 + $0xe0] sm:$0xff]
        %v2321 = vld [vmem:[%s2291 + $0xe8] sm:$0xff]
        %v2322 = vld [vmem:[%s2291 + $0xf0] sm:$0xff]
        %v2323 = vld [vmem:[%s2291 + $0xf8] sm:$0xff]
        %v2324 = vld [vmem:[%s2291 + $0x100] sm:$0xff]
        %v2325 = vld [vmem:[%s2291 + $0x108] sm:$0xff]
        %v2326 = vld [vmem:[%s2291 + $0x110] sm:$0xff]
        %v2327 = vld [vmem:[%s2291 + $0x118] sm:$0xff]
        %v2328 = vld [vmem:[%s2291 + $0x120] sm:$0xff]
        %v2329 = vld [vmem:[%s2291 + $0x128] sm:$0xff]
        %v2330 = vld [vmem:[%s2291 + $0x130] sm:$0xff]
        %v2331 = vld [vmem:[%s2291 + $0x138] sm:$0xff]
        %v2332 = vld [vmem:[%s2291 + $0x140] sm:$0xff]
        %v2333 = vld [vmem:[%s2291 + $0x148] sm:$0xff]
        %v2334 = vld [vmem:[%s2291 + $0x150] sm:$0xff]
        %v2335 = vld [vmem:[%s2291 + $0x158] sm:$0xff]
        %v2336 = vld [vmem:[%s2291 + $0x160] sm:$0xff]
        %v2337 = vld [vmem:[%s2291 + $0x168] sm:$0xff]
        %v2338 = vld [vmem:[%s2291 + $0x170] sm:$0xff]
        %v2339 = vld [vmem:[%s2291 + $0x178] sm:$0xff]
        %v2340 = vld [vmem:[%s2291 + $0x180] sm:$0xff]
        %v2341 = vld [vmem:[%s2291 + $0x188] sm:$0xff]
        %v2342 = vld [vmem:[%s2291 + $0x190] sm:$0xff]
        %v2343 = vld [vmem:[%s2291 + $0x198] sm:$0xff]
        %v2344 = vld [vmem:[%s2291 + $0x1a0] sm:$0xff]
        %v2345 = vld [vmem:[%s2291 + $0x1a8] sm:$0xff]
        %v2346 = vld [vmem:[%s2291 + $0x1b0] sm:$0xff]
        %v2347 = vld [vmem:[%s2291 + $0x1b8] sm:$0xff]
        %v2348 = vld [vmem:[%s2291 + $0x1c0] sm:$0xff]
        %v2349 = vld [vmem:[%s2291 + $0x1c8] sm:$0xff]
        %v2350 = vld [vmem:[%s2291 + $0x1d0] sm:$0xff]
        %v2351 = vld [vmem:[%s2291 + $0x1d8] sm:$0xff]
        %v2352 = vld [vmem:[%s2291 + $0x1e0] sm:$0xff]
        %v2353 = vld [vmem:[%s2291 + $0x1e8] sm:$0xff]
        %v2354 = vld [vmem:[%s2291 + $0x1f0] sm:$0xff]
        %v2355 = vld [vmem:[%s2291 + $0x1f8] sm:$0xff]
        %v2357 = vunpack.c.l.b16 %v2290
        %v2358 = vpack.c.b16 %v344, %v2357
        %vm2359 = vcmask 1045504
        %v2360 = vrot.slane %v2358, 2
        %v2361 = vrot.slane %v1822, 2
        %v2362 = vsel %vm2359, %v2360, %v2361
        %v2428 = vunpack.c.l.b16 %v2292
        %v2429 = vunpack.c.h.b16 %v2292
        %v2430 = vunpack.c.l.b16 %v2293
        %v2431 = vunpack.c.h.b16 %v2293
        %v2432 = vunpack.c.l.b16 %v2294
        %v2433 = vunpack.c.h.b16 %v2294
        %v2434 = vunpack.c.l.b16 %v2295
        %v2435 = vunpack.c.h.b16 %v2295
        %v2436 = vunpack.c.l.b16 %v2296
        %v2437 = vunpack.c.h.b16 %v2296
        %v2438 = vunpack.c.l.b16 %v2297
        %v2439 = vunpack.c.h.b16 %v2297
        %v2440 = vunpack.c.l.b16 %v2298
        %v2441 = vunpack.c.h.b16 %v2298
        %v2442 = vunpack.c.l.b16 %v2299
        %v2443 = vunpack.c.h.b16 %v2299
        %v2444 = vunpack.c.l.b16 %v2300
        %v2445 = vunpack.c.h.b16 %v2300
        %v2446 = vunpack.c.l.b16 %v2301
        %v2447 = vunpack.c.h.b16 %v2301
        %v2448 = vunpack.c.l.b16 %v2302
        %v2449 = vunpack.c.h.b16 %v2302
        %v2450 = vunpack.c.l.b16 %v2303
        %v2451 = vunpack.c.h.b16 %v2303
        %v2452 = vunpack.c.l.b16 %v2304
        %v2453 = vunpack.c.h.b16 %v2304
        %v2454 = vunpack.c.l.b16 %v2305
        %v2455 = vunpack.c.h.b16 %v2305
        %v2456 = vunpack.c.l.b16 %v2306
        %v2457 = vunpack.c.h.b16 %v2306
        %v2458 = vunpack.c.l.b16 %v2307
        %v2459 = vunpack.c.h.b16 %v2307
        %v2460 = vunpack.c.l.b16 %v2308
        %v2461 = vunpack.c.h.b16 %v2308
        %v2462 = vunpack.c.l.b16 %v2309
        %v2463 = vunpack.c.h.b16 %v2309
        %v2464 = vunpack.c.l.b16 %v2310
        %v2465 = vunpack.c.h.b16 %v2310
        %v2466 = vunpack.c.l.b16 %v2311
        %v2467 = vunpack.c.h.b16 %v2311
        %v2468 = vunpack.c.l.b16 %v2312
        %v2469 = vunpack.c.h.b16 %v2312
        %v2470 = vunpack.c.l.b16 %v2313
        %v2471 = vunpack.c.h.b16 %v2313
        %v2472 = vunpack.c.l.b16 %v2314
        %v2473 = vunpack.c.h.b16 %v2314
        %v2474 = vunpack.c.l.b16 %v2315
        %v2475 = vunpack.c.h.b16 %v2315
        %v2476 = vunpack.c.l.b16 %v2316
        %v2477 = vunpack.c.h.b16 %v2316
        %v2478 = vunpack.c.l.b16 %v2317
        %v2479 = vunpack.c.h.b16 %v2317
        %v2480 = vunpack.c.l.b16 %v2318
        %v2481 = vunpack.c.h.b16 %v2318
        %v2482 = vunpack.c.l.b16 %v2319
        %v2483 = vunpack.c.h.b16 %v2319
        %v2484 = vunpack.c.l.b16 %v2320
        %v2485 = vunpack.c.h.b16 %v2320
        %v2486 = vunpack.c.l.b16 %v2321
        %v2487 = vunpack.c.h.b16 %v2321
        %v2488 = vunpack.c.l.b16 %v2322
        %v2489 = vunpack.c.h.b16 %v2322
        %v2490 = vunpack.c.l.b16 %v2323
        %v2491 = vunpack.c.h.b16 %v2323
        %v2492 = vunpack.c.l.b16 %v2324
        %v2493 = vunpack.c.h.b16 %v2324
        %v2494 = vunpack.c.l.b16 %v2325
        %v2495 = vunpack.c.h.b16 %v2325
        %v2496 = vunpack.c.l.b16 %v2326
        %v2497 = vunpack.c.h.b16 %v2326
        %v2498 = vunpack.c.l.b16 %v2327
        %v2499 = vunpack.c.h.b16 %v2327
        %v2500 = vunpack.c.l.b16 %v2328
        %v2501 = vunpack.c.h.b16 %v2328
        %v2502 = vunpack.c.l.b16 %v2329
        %v2503 = vunpack.c.h.b16 %v2329
        %v2504 = vunpack.c.l.b16 %v2330
        %v2505 = vunpack.c.h.b16 %v2330
        %v2506 = vunpack.c.l.b16 %v2331
        %v2507 = vunpack.c.h.b16 %v2331
        %v2508 = vunpack.c.l.b16 %v2332
        %v2509 = vunpack.c.h.b16 %v2332
        %v2510 = vunpack.c.l.b16 %v2333
        %v2511 = vunpack.c.h.b16 %v2333
        %v2512 = vunpack.c.l.b16 %v2334
        %v2513 = vunpack.c.h.b16 %v2334
        %v2514 = vunpack.c.l.b16 %v2335
        %v2515 = vunpack.c.h.b16 %v2335
        %v2516 = vunpack.c.l.b16 %v2336
        %v2517 = vunpack.c.h.b16 %v2336
        %v2518 = vunpack.c.l.b16 %v2337
        %v2519 = vunpack.c.h.b16 %v2337
        %v2520 = vunpack.c.l.b16 %v2338
        %v2521 = vunpack.c.h.b16 %v2338
        %v2522 = vunpack.c.l.b16 %v2339
        %v2523 = vunpack.c.h.b16 %v2339
        %v2524 = vunpack.c.l.b16 %v2340
        %v2525 = vunpack.c.h.b16 %v2340
        %v2526 = vunpack.c.l.b16 %v2341
        %v2527 = vunpack.c.h.b16 %v2341
        %v2528 = vunpack.c.l.b16 %v2342
        %v2529 = vunpack.c.h.b16 %v2342
        %v2530 = vunpack.c.l.b16 %v2343
        %v2531 = vunpack.c.h.b16 %v2343
        %v2532 = vunpack.c.l.b16 %v2344
        %v2533 = vunpack.c.h.b16 %v2344
        %v2534 = vunpack.c.l.b16 %v2345
        %v2535 = vunpack.c.h.b16 %v2345
        %v2536 = vunpack.c.l.b16 %v2346
        %v2537 = vunpack.c.h.b16 %v2346
        %v2538 = vunpack.c.l.b16 %v2347
        %v2539 = vunpack.c.h.b16 %v2347
        %v2540 = vunpack.c.l.b16 %v2348
        %v2541 = vunpack.c.h.b16 %v2348
        %v2542 = vunpack.c.l.b16 %v2349
        %v2543 = vunpack.c.h.b16 %v2349
        %v2544 = vunpack.c.l.b16 %v2350
        %v2545 = vunpack.c.h.b16 %v2350
        %v2546 = vunpack.c.l.b16 %v2351
        %v2547 = vunpack.c.h.b16 %v2351
        %v2548 = vunpack.c.l.b16 %v2352
        %v2549 = vunpack.c.h.b16 %v2352
        %v2550 = vunpack.c.l.b16 %v2353
        %v2551 = vunpack.c.h.b16 %v2353
        %v2552 = vunpack.c.l.b16 %v2354
        %v2553 = vunpack.c.h.b16 %v2354
        %v2554 = vunpack.c.l.b16 %v2355
        %v2555 = vunpack.c.h.b16 %v2355
        %v2556 = vpack.c.b16 %v2436, %v2428
        %v2557 = vpack.c.b16 %v2437, %v2429
        %v2558 = vpack.c.b16 %v2438, %v2430
        %v2559 = vpack.c.b16 %v2439, %v2431
        %v2560 = vpack.c.b16 %v2440, %v2432
        %v2561 = vpack.c.b16 %v2441, %v2433
        %v2562 = vpack.c.b16 %v2442, %v2434
        %v2563 = vpack.c.b16 %v2443, %v2435
        %v2564 = vpack.c.b16 %v2452, %v2444
        %v2565 = vpack.c.b16 %v2453, %v2445
        %v2566 = vpack.c.b16 %v2454, %v2446
        %v2567 = vpack.c.b16 %v2455, %v2447
        %v2568 = vpack.c.b16 %v2456, %v2448
        %v2569 = vpack.c.b16 %v2457, %v2449
        %v2570 = vpack.c.b16 %v2458, %v2450
        %v2571 = vpack.c.b16 %v2459, %v2451
        %v2572 = vpack.c.b16 %v2468, %v2460
        %v2573 = vpack.c.b16 %v2469, %v2461
        %v2574 = vpack.c.b16 %v2470, %v2462
        %v2575 = vpack.c.b16 %v2471, %v2463
        %v2576 = vpack.c.b16 %v2472, %v2464
        %v2577 = vpack.c.b16 %v2473, %v2465
        %v2578 = vpack.c.b16 %v2474, %v2466
        %v2579 = vpack.c.b16 %v2475, %v2467
        %v2580 = vpack.c.b16 %v2484, %v2476
        %v2581 = vpack.c.b16 %v2485, %v2477
        %v2582 = vpack.c.b16 %v2486, %v2478
        %v2583 = vpack.c.b16 %v2487, %v2479
        %v2584 = vpack.c.b16 %v2488, %v2480
        %v2585 = vpack.c.b16 %v2489, %v2481
        %v2586 = vpack.c.b16 %v2490, %v2482
        %v2587 = vpack.c.b16 %v2491, %v2483
        %v2588 = vpack.c.b16 %v2500, %v2492
        %v2589 = vpack.c.b16 %v2501, %v2493
        %v2590 = vpack.c.b16 %v2502, %v2494
        %v2591 = vpack.c.b16 %v2503, %v2495
        %v2592 = vpack.c.b16 %v2504, %v2496
        %v2593 = vpack.c.b16 %v2505, %v2497
        %v2594 = vpack.c.b16 %v2506, %v2498
        %v2595 = vpack.c.b16 %v2507, %v2499
        %v2596 = vpack.c.b16 %v2516, %v2508
        %v2597 = vpack.c.b16 %v2517, %v2509
        %v2598 = vpack.c.b16 %v2518, %v2510
        %v2599 = vpack.c.b16 %v2519, %v2511
        %v2600 = vpack.c.b16 %v2520, %v2512
        %v2601 = vpack.c.b16 %v2521, %v2513
        %v2602 = vpack.c.b16 %v2522, %v2514
        %v2603 = vpack.c.b16 %v2523, %v2515
        %v2604 = vpack.c.b16 %v2532, %v2524
        %v2605 = vpack.c.b16 %v2533, %v2525
        %v2606 = vpack.c.b16 %v2534, %v2526
        %v2607 = vpack.c.b16 %v2535, %v2527
        %v2608 = vpack.c.b16 %v2536, %v2528
        %v2609 = vpack.c.b16 %v2537, %v2529
        %v2610 = vpack.c.b16 %v2538, %v2530
        %v2611 = vpack.c.b16 %v2539, %v2531
        %v2612 = vpack.c.b16 %v2548, %v2540
        %v2613 = vpack.c.b16 %v2549, %v2541
        %v2614 = vpack.c.b16 %v2550, %v2542
        %v2615 = vpack.c.b16 %v2551, %v2543
        %v2616 = vpack.c.b16 %v2552, %v2544
        %v2617 = vpack.c.b16 %v2553, %v2545
        %v2618 = vpack.c.b16 %v2554, %v2546
        %v2619 = vpack.c.b16 %v2555, %v2547
        %2684 = vmatpush.bf16.msra.mxu0 %v2612
        %2685 = vmatpush.bf16.msra.mxu0 %v2604
        %2686 = vmatpush.bf16.msra.mxu0 %v2596
        %2687 = vmatpush.bf16.msra.mxu0 %v2588
        %2688 = vmatpush.bf16.msra.mxu0 %v2580
        %2689 = vmatpush.bf16.msra.mxu0 %v2572
        %2690 = vmatpush.bf16.msra.mxu0 %v2564
        %2691 = vmatpush.bf16.msra.mxu0 %v2556
        %2692 = vmatmul.bf16.gmra.mxu0 %v2362
        %v2693 = vpop.f32.mrf.mxu0
        %v2694 = vadd.f32 0.0, %v2693
        %v2695 = vpop.f32.mrf.mxu0
        %v2696 = vadd.f32 0.0, %v2695
        %2697 = vdwg.mxu0
        %2698 = vmatpush.bf16.msra.mxu0 %v2613
        %2699 = vmatpush.bf16.msra.mxu0 %v2605
        %2700 = vmatpush.bf16.msra.mxu0 %v2597
        %2701 = vmatpush.bf16.msra.mxu0 %v2589
        %2702 = vmatpush.bf16.msra.mxu0 %v2581
        %2703 = vmatpush.bf16.msra.mxu0 %v2573
        %2704 = vmatpush.bf16.msra.mxu0 %v2565
        %2705 = vmatpush.bf16.msra.mxu0 %v2557
        %2706 = vmatmul.bf16.gmra.mxu0 %v2362
        %v2707 = vpop.f32.mrf.mxu0
        %v2708 = vadd.f32 0.0, %v2707
        %v2709 = vpop.f32.mrf.mxu0
        %v2710 = vadd.f32 0.0, %v2709
        %2711 = vdwg.mxu0
        %2712 = vmatpush.bf16.msra.mxu0 %v2614
        %2713 = vmatpush.bf16.msra.mxu0 %v2606
        %2714 = vmatpush.bf16.msra.mxu0 %v2598
        %2715 = vmatpush.bf16.msra.mxu0 %v2590
        %2716 = vmatpush.bf16.msra.mxu0 %v2582
        %2717 = vmatpush.bf16.msra.mxu0 %v2574
        %2718 = vmatpush.bf16.msra.mxu0 %v2566
        %2719 = vmatpush.bf16.msra.mxu0 %v2558
        %2720 = vmatmul.bf16.gmra.mxu0 %v2362
        %v2721 = vpop.f32.mrf.mxu0
        %v2722 = vadd.f32 0.0, %v2721
        %v2723 = vpop.f32.mrf.mxu0
        %v2724 = vadd.f32 0.0, %v2723
        %2725 = vdwg.mxu0
        %2726 = vmatpush.bf16.msra.mxu0 %v2615
        %2727 = vmatpush.bf16.msra.mxu0 %v2607
        %2728 = vmatpush.bf16.msra.mxu0 %v2599
        %2729 = vmatpush.bf16.msra.mxu0 %v2591
        %2730 = vmatpush.bf16.msra.mxu0 %v2583
        %2731 = vmatpush.bf16.msra.mxu0 %v2575
        %2732 = vmatpush.bf16.msra.mxu0 %v2567
        %2733 = vmatpush.bf16.msra.mxu0 %v2559
        %2734 = vmatmul.bf16.gmra.mxu0 %v2362
        %v2735 = vpop.f32.mrf.mxu0
        %v2736 = vadd.f32 0.0, %v2735
        %v2737 = vpop.f32.mrf.mxu0
        %v2738 = vadd.f32 0.0, %v2737
        %2739 = vdwg.mxu0
        %2740 = vmatpush.bf16.msra.mxu0 %v2616
        %2741 = vmatpush.bf16.msra.mxu0 %v2608
        %2742 = vmatpush.bf16.msra.mxu0 %v2600
        %2743 = vmatpush.bf16.msra.mxu0 %v2592
        %2744 = vmatpush.bf16.msra.mxu0 %v2584
        %2745 = vmatpush.bf16.msra.mxu0 %v2576
        %2746 = vmatpush.bf16.msra.mxu0 %v2568
        %2747 = vmatpush.bf16.msra.mxu0 %v2560
        %2748 = vmatmul.bf16.gmra.mxu0 %v2362
        %v2749 = vpop.f32.mrf.mxu0
        %v2750 = vadd.f32 0.0, %v2749
        %v2751 = vpop.f32.mrf.mxu0
        %v2752 = vadd.f32 0.0, %v2751
        %2753 = vdwg.mxu0
        %2754 = vmatpush.bf16.msra.mxu0 %v2617
        %2755 = vmatpush.bf16.msra.mxu0 %v2609
        %2756 = vmatpush.bf16.msra.mxu0 %v2601
        %2757 = vmatpush.bf16.msra.mxu0 %v2593
        %2758 = vmatpush.bf16.msra.mxu0 %v2585
        %2759 = vmatpush.bf16.msra.mxu0 %v2577
        %2760 = vmatpush.bf16.msra.mxu0 %v2569
        %2761 = vmatpush.bf16.msra.mxu0 %v2561
        %2762 = vmatmul.bf16.gmra.mxu0 %v2362
        %v2763 = vpop.f32.mrf.mxu0
        %v2764 = vadd.f32 0.0, %v2763
        %v2765 = vpop.f32.mrf.mxu0
        %v2766 = vadd.f32 0.0, %v2765
        %2767 = vdwg.mxu0
        %2768 = vmatpush.bf16.msra.mxu0 %v2618
        %2769 = vmatpush.bf16.msra.mxu0 %v2610
        %2770 = vmatpush.bf16.msra.mxu0 %v2602
        %2771 = vmatpush.bf16.msra.mxu0 %v2594
        %2772 = vmatpush.bf16.msra.mxu0 %v2586
        %2773 = vmatpush.bf16.msra.mxu0 %v2578
        %2774 = vmatpush.bf16.msra.mxu0 %v2570
        %2775 = vmatpush.bf16.msra.mxu0 %v2562
        %2776 = vmatmul.bf16.gmra.mxu0 %v2362
        %v2777 = vpop.f32.mrf.mxu0
        %v2778 = vadd.f32 0.0, %v2777
        %v2779 = vpop.f32.mrf.mxu0
        %v2780 = vadd.f32 0.0, %v2779
        %2781 = vdwg.mxu0
        %2782 = vmatpush.bf16.msra.mxu0 %v2619
        %2783 = vmatpush.bf16.msra.mxu0 %v2611
        %2784 = vmatpush.bf16.msra.mxu0 %v2603
        %2785 = vmatpush.bf16.msra.mxu0 %v2595
        %2786 = vmatpush.bf16.msra.mxu0 %v2587
        %2787 = vmatpush.bf16.msra.mxu0 %v2579
        %2788 = vmatpush.bf16.msra.mxu0 %v2571
        %2789 = vmatpush.bf16.msra.mxu0 %v2563
        %2790 = vmatmul.bf16.gmra.mxu0 %v2362
        %v2791 = vpop.f32.mrf.mxu0
        %v2792 = vadd.f32 0.0, %v2791
        %v2793 = vpop.f32.mrf.mxu0
        %v2794 = vadd.f32 0.0, %v2793
        %2795 = vdwg.mxu0
        %v2796 = vadd.f32 %v2274, %v2694
        %v2797 = vadd.f32 %v2275, %v2708
        %v2798 = vadd.f32 %v2276, %v2722
        %v2799 = vadd.f32 %v2277, %v2736
        %v2800 = vadd.f32 %v2278, %v2750
        %v2801 = vadd.f32 %v2279, %v2764
        %v2802 = vadd.f32 %v2280, %v2778
        %v2803 = vadd.f32 %v2281, %v2792
        %v2804 = vadd.f32 %v2282, %v2696
        %v2805 = vadd.f32 %v2283, %v2710
        %v2806 = vadd.f32 %v2284, %v2724
        %v2807 = vadd.f32 %v2285, %v2738
        %v2808 = vadd.f32 %v2286, %v2752
        %v2809 = vadd.f32 %v2287, %v2766
        %v2810 = vadd.f32 %v2288, %v2780
        %v2811 = vadd.f32 %v2289, %v2794
        %v2812 = vld [vmem:[%s202 + $0x8] sm:$0x7]
        %s2813 = scalar_lea.vmem %s1, 2560
        %v2814 = vld [vmem:[%s2813] sm:$0xff]
        %v2815 = vld [vmem:[%s2813 + $0x8] sm:$0xff]
        %v2816 = vld [vmem:[%s2813 + $0x10] sm:$0xff]
        %v2817 = vld [vmem:[%s2813 + $0x18] sm:$0xff]
        %v2818 = vld [vmem:[%s2813 + $0x20] sm:$0xff]
        %v2819 = vld [vmem:[%s2813 + $0x28] sm:$0xff]
        %v2820 = vld [vmem:[%s2813 + $0x30] sm:$0xff]
        %v2821 = vld [vmem:[%s2813 + $0x38] sm:$0xff]
        %v2822 = vld [vmem:[%s2813 + $0x40] sm:$0xff]
        %v2823 = vld [vmem:[%s2813 + $0x48] sm:$0xff]
        %v2824 = vld [vmem:[%s2813 + $0x50] sm:$0xff]
        %v2825 = vld [vmem:[%s2813 + $0x58] sm:$0xff]
        %v2826 = vld [vmem:[%s2813 + $0x60] sm:$0xff]
        %v2827 = vld [vmem:[%s2813 + $0x68] sm:$0xff]
        %v2828 = vld [vmem:[%s2813 + $0x70] sm:$0xff]
        %v2829 = vld [vmem:[%s2813 + $0x78] sm:$0xff]
        %v2830 = vld [vmem:[%s2813 + $0x80] sm:$0xff]
        %v2831 = vld [vmem:[%s2813 + $0x88] sm:$0xff]
        %v2832 = vld [vmem:[%s2813 + $0x90] sm:$0xff]
        %v2833 = vld [vmem:[%s2813 + $0x98] sm:$0xff]
        %v2834 = vld [vmem:[%s2813 + $0xa0] sm:$0xff]
        %v2835 = vld [vmem:[%s2813 + $0xa8] sm:$0xff]
        %v2836 = vld [vmem:[%s2813 + $0xb0] sm:$0xff]
        %v2837 = vld [vmem:[%s2813 + $0xb8] sm:$0xff]
        %v2838 = vld [vmem:[%s2813 + $0xc0] sm:$0xff]
        %v2839 = vld [vmem:[%s2813 + $0xc8] sm:$0xff]
        %v2840 = vld [vmem:[%s2813 + $0xd0] sm:$0xff]
        %v2841 = vld [vmem:[%s2813 + $0xd8] sm:$0xff]
        %v2842 = vld [vmem:[%s2813 + $0xe0] sm:$0xff]
        %v2843 = vld [vmem:[%s2813 + $0xe8] sm:$0xff]
        %v2844 = vld [vmem:[%s2813 + $0xf0] sm:$0xff]
        %v2845 = vld [vmem:[%s2813 + $0xf8] sm:$0xff]
        %v2846 = vld [vmem:[%s2813 + $0x100] sm:$0xff]
        %v2847 = vld [vmem:[%s2813 + $0x108] sm:$0xff]
        %v2848 = vld [vmem:[%s2813 + $0x110] sm:$0xff]
        %v2849 = vld [vmem:[%s2813 + $0x118] sm:$0xff]
        %v2850 = vld [vmem:[%s2813 + $0x120] sm:$0xff]
        %v2851 = vld [vmem:[%s2813 + $0x128] sm:$0xff]
        %v2852 = vld [vmem:[%s2813 + $0x130] sm:$0xff]
        %v2853 = vld [vmem:[%s2813 + $0x138] sm:$0xff]
        %v2854 = vld [vmem:[%s2813 + $0x140] sm:$0xff]
        %v2855 = vld [vmem:[%s2813 + $0x148] sm:$0xff]
        %v2856 = vld [vmem:[%s2813 + $0x150] sm:$0xff]
        %v2857 = vld [vmem:[%s2813 + $0x158] sm:$0xff]
        %v2858 = vld [vmem:[%s2813 + $0x160] sm:$0xff]
        %v2859 = vld [vmem:[%s2813 + $0x168] sm:$0xff]
        %v2860 = vld [vmem:[%s2813 + $0x170] sm:$0xff]
        %v2861 = vld [vmem:[%s2813 + $0x178] sm:$0xff]
        %v2862 = vld [vmem:[%s2813 + $0x180] sm:$0xff]
        %v2863 = vld [vmem:[%s2813 + $0x188] sm:$0xff]
        %v2864 = vld [vmem:[%s2813 + $0x190] sm:$0xff]
        %v2865 = vld [vmem:[%s2813 + $0x198] sm:$0xff]
        %v2866 = vld [vmem:[%s2813 + $0x1a0] sm:$0xff]
        %v2867 = vld [vmem:[%s2813 + $0x1a8] sm:$0xff]
        %v2868 = vld [vmem:[%s2813 + $0x1b0] sm:$0xff]
        %v2869 = vld [vmem:[%s2813 + $0x1b8] sm:$0xff]
        %v2870 = vld [vmem:[%s2813 + $0x1c0] sm:$0xff]
        %v2871 = vld [vmem:[%s2813 + $0x1c8] sm:$0xff]
        %v2872 = vld [vmem:[%s2813 + $0x1d0] sm:$0xff]
        %v2873 = vld [vmem:[%s2813 + $0x1d8] sm:$0xff]
        %v2874 = vld [vmem:[%s2813 + $0x1e0] sm:$0xff]
        %v2875 = vld [vmem:[%s2813 + $0x1e8] sm:$0xff]
        %v2876 = vld [vmem:[%s2813 + $0x1f0] sm:$0xff]
        %v2877 = vld [vmem:[%s2813 + $0x1f8] sm:$0xff]
        %v2879 = vunpack.c.l.b16 %v2812
        %v2880 = vpack.c.b16 %v2879, %v2879
        %vm2881 = vsmask.f32 5376
        %v2883 = vshrl.u32 %v2358, 16
        %v2885 = vrot.slane %v2883, 2
        %v2886 = vshll.u32 %v2358, 16
        %v2888 = vrot.slane %v2886, 3
        %v2889 = vor.u32 %v2885, %v2888
        %v2891 = vshrl.u32 %v2880, 16
        %v2893 = vrot.slane %v2891, 2
        %v2894 = vshll.u32 %v2880, 16
        %v2896 = vrot.slane %v2894, 3
        %v2897 = vor.u32 %v2893, %v2896
        %v2898 = vsel %vm2881, %v2889, %v2897
        %v2964 = vunpack.c.l.b16 %v2814
        %v2965 = vunpack.c.h.b16 %v2814
        %v2966 = vunpack.c.l.b16 %v2815
        %v2967 = vunpack.c.h.b16 %v2815
        %v2968 = vunpack.c.l.b16 %v2816
        %v2969 = vunpack.c.h.b16 %v2816
        %v2970 = vunpack.c.l.b16 %v2817
        %v2971 = vunpack.c.h.b16 %v2817
        %v2972 = vunpack.c.l.b16 %v2818
        %v2973 = vunpack.c.h.b16 %v2818
        %v2974 = vunpack.c.l.b16 %v2819
        %v2975 = vunpack.c.h.b16 %v2819
        %v2976 = vunpack.c.l.b16 %v2820
        %v2977 = vunpack.c.h.b16 %v2820
        %v2978 = vunpack.c.l.b16 %v2821
        %v2979 = vunpack.c.h.b16 %v2821
        %v2980 = vunpack.c.l.b16 %v2822
        %v2981 = vunpack.c.h.b16 %v2822
        %v2982 = vunpack.c.l.b16 %v2823
        %v2983 = vunpack.c.h.b16 %v2823
        %v2984 = vunpack.c.l.b16 %v2824
        %v2985 = vunpack.c.h.b16 %v2824
        %v2986 = vunpack.c.l.b16 %v2825
        %v2987 = vunpack.c.h.b16 %v2825
        %v2988 = vunpack.c.l.b16 %v2826
        %v2989 = vunpack.c.h.b16 %v2826
        %v2990 = vunpack.c.l.b16 %v2827
        %v2991 = vunpack.c.h.b16 %v2827
        %v2992 = vunpack.c.l.b16 %v2828
        %v2993 = vunpack.c.h.b16 %v2828
        %v2994 = vunpack.c.l.b16 %v2829
        %v2995 = vunpack.c.h.b16 %v2829
        %v2996 = vunpack.c.l.b16 %v2830
        %v2997 = vunpack.c.h.b16 %v2830
        %v2998 = vunpack.c.l.b16 %v2831
        %v2999 = vunpack.c.h.b16 %v2831
        %v3000 = vunpack.c.l.b16 %v2832
        %v3001 = vunpack.c.h.b16 %v2832
        %v3002 = vunpack.c.l.b16 %v2833
        %v3003 = vunpack.c.h.b16 %v2833
        %v3004 = vunpack.c.l.b16 %v2834
        %v3005 = vunpack.c.h.b16 %v2834
        %v3006 = vunpack.c.l.b16 %v2835
        %v3007 = vunpack.c.h.b16 %v2835
        %v3008 = vunpack.c.l.b16 %v2836
        %v3009 = vunpack.c.h.b16 %v2836
        %v3010 = vunpack.c.l.b16 %v2837
        %v3011 = vunpack.c.h.b16 %v2837
        %v3012 = vunpack.c.l.b16 %v2838
        %v3013 = vunpack.c.h.b16 %v2838
        %v3014 = vunpack.c.l.b16 %v2839
        %v3015 = vunpack.c.h.b16 %v2839
        %v3016 = vunpack.c.l.b16 %v2840
        %v3017 = vunpack.c.h.b16 %v2840
        %v3018 = vunpack.c.l.b16 %v2841
        %v3019 = vunpack.c.h.b16 %v2841
        %v3020 = vunpack.c.l.b16 %v2842
        %v3021 = vunpack.c.h.b16 %v2842
        %v3022 = vunpack.c.l.b16 %v2843
        %v3023 = vunpack.c.h.b16 %v2843
        %v3024 = vunpack.c.l.b16 %v2844
        %v3025 = vunpack.c.h.b16 %v2844
        %v3026 = vunpack.c.l.b16 %v2845
        %v3027 = vunpack.c.h.b16 %v2845
        %v3028 = vunpack.c.l.b16 %v2846
        %v3029 = vunpack.c.h.b16 %v2846
        %v3030 = vunpack.c.l.b16 %v2847
        %v3031 = vunpack.c.h.b16 %v2847
        %v3032 = vunpack.c.l.b16 %v2848
        %v3033 = vunpack.c.h.b16 %v2848
        %v3034 = vunpack.c.l.b16 %v2849
        %v3035 = vunpack.c.h.b16 %v2849
        %v3036 = vunpack.c.l.b16 %v2850
        %v3037 = vunpack.c.h.b16 %v2850
        %v3038 = vunpack.c.l.b16 %v2851
        %v3039 = vunpack.c.h.b16 %v2851
        %v3040 = vunpack.c.l.b16 %v2852
        %v3041 = vunpack.c.h.b16 %v2852
        %v3042 = vunpack.c.l.b16 %v2853
        %v3043 = vunpack.c.h.b16 %v2853
        %v3044 = vunpack.c.l.b16 %v2854
        %v3045 = vunpack.c.h.b16 %v2854
        %v3046 = vunpack.c.l.b16 %v2855
        %v3047 = vunpack.c.h.b16 %v2855
        %v3048 = vunpack.c.l.b16 %v2856
        %v3049 = vunpack.c.h.b16 %v2856
        %v3050 = vunpack.c.l.b16 %v2857
        %v3051 = vunpack.c.h.b16 %v2857
        %v3052 = vunpack.c.l.b16 %v2858
        %v3053 = vunpack.c.h.b16 %v2858
        %v3054 = vunpack.c.l.b16 %v2859
        %v3055 = vunpack.c.h.b16 %v2859
        %v3056 = vunpack.c.l.b16 %v2860
        %v3057 = vunpack.c.h.b16 %v2860
        %v3058 = vunpack.c.l.b16 %v2861
        %v3059 = vunpack.c.h.b16 %v2861
        %v3060 = vunpack.c.l.b16 %v2862
        %v3061 = vunpack.c.h.b16 %v2862
        %v3062 = vunpack.c.l.b16 %v2863
        %v3063 = vunpack.c.h.b16 %v2863
        %v3064 = vunpack.c.l.b16 %v2864
        %v3065 = vunpack.c.h.b16 %v2864
        %v3066 = vunpack.c.l.b16 %v2865
        %v3067 = vunpack.c.h.b16 %v2865
        %v3068 = vunpack.c.l.b16 %v2866
        %v3069 = vunpack.c.h.b16 %v2866
        %v3070 = vunpack.c.l.b16 %v2867
        %v3071 = vunpack.c.h.b16 %v2867
        %v3072 = vunpack.c.l.b16 %v2868
        %v3073 = vunpack.c.h.b16 %v2868
        %v3074 = vunpack.c.l.b16 %v2869
        %v3075 = vunpack.c.h.b16 %v2869
        %v3076 = vunpack.c.l.b16 %v2870
        %v3077 = vunpack.c.h.b16 %v2870
        %v3078 = vunpack.c.l.b16 %v2871
        %v3079 = vunpack.c.h.b16 %v2871
        %v3080 = vunpack.c.l.b16 %v2872
        %v3081 = vunpack.c.h.b16 %v2872
        %v3082 = vunpack.c.l.b16 %v2873
        %v3083 = vunpack.c.h.b16 %v2873
        %v3084 = vunpack.c.l.b16 %v2874
        %v3085 = vunpack.c.h.b16 %v2874
        %v3086 = vunpack.c.l.b16 %v2875
        %v3087 = vunpack.c.h.b16 %v2875
        %v3088 = vunpack.c.l.b16 %v2876
        %v3089 = vunpack.c.h.b16 %v2876
        %v3090 = vunpack.c.l.b16 %v2877
        %v3091 = vunpack.c.h.b16 %v2877
        %v3092 = vpack.c.b16 %v2972, %v2964
        %v3093 = vpack.c.b16 %v2973, %v2965
        %v3094 = vpack.c.b16 %v2974, %v2966
        %v3095 = vpack.c.b16 %v2975, %v2967
        %v3096 = vpack.c.b16 %v2976, %v2968
        %v3097 = vpack.c.b16 %v2977, %v2969
        %v3098 = vpack.c.b16 %v2978, %v2970
        %v3099 = vpack.c.b16 %v2979, %v2971
        %v3100 = vpack.c.b16 %v2988, %v2980
        %v3101 = vpack.c.b16 %v2989, %v2981
        %v3102 = vpack.c.b16 %v2990, %v2982
        %v3103 = vpack.c.b16 %v2991, %v2983
        %v3104 = vpack.c.b16 %v2992, %v2984
        %v3105 = vpack.c.b16 %v2993, %v2985
        %v3106 = vpack.c.b16 %v2994, %v2986
        %v3107 = vpack.c.b16 %v2995, %v2987
        %v3108 = vpack.c.b16 %v3004, %v2996
        %v3109 = vpack.c.b16 %v3005, %v2997
        %v3110 = vpack.c.b16 %v3006, %v2998
        %v3111 = vpack.c.b16 %v3007, %v2999
        %v3112 = vpack.c.b16 %v3008, %v3000
        %v3113 = vpack.c.b16 %v3009, %v3001
        %v3114 = vpack.c.b16 %v3010, %v3002
        %v3115 = vpack.c.b16 %v3011, %v3003
        %v3116 = vpack.c.b16 %v3020, %v3012
        %v3117 = vpack.c.b16 %v3021, %v3013
        %v3118 = vpack.c.b16 %v3022, %v3014
        %v3119 = vpack.c.b16 %v3023, %v3015
        %v3120 = vpack.c.b16 %v3024, %v3016
        %v3121 = vpack.c.b16 %v3025, %v3017
        %v3122 = vpack.c.b16 %v3026, %v3018
        %v3123 = vpack.c.b16 %v3027, %v3019
        %v3124 = vpack.c.b16 %v3036, %v3028
        %v3125 = vpack.c.b16 %v3037, %v3029
        %v3126 = vpack.c.b16 %v3038, %v3030
        %v3127 = vpack.c.b16 %v3039, %v3031
        %v3128 = vpack.c.b16 %v3040, %v3032
        %v3129 = vpack.c.b16 %v3041, %v3033
        %v3130 = vpack.c.b16 %v3042, %v3034
        %v3131 = vpack.c.b16 %v3043, %v3035
        %v3132 = vpack.c.b16 %v3052, %v3044
        %v3133 = vpack.c.b16 %v3053, %v3045
        %v3134 = vpack.c.b16 %v3054, %v3046
        %v3135 = vpack.c.b16 %v3055, %v3047
        %v3136 = vpack.c.b16 %v3056, %v3048
        %v3137 = vpack.c.b16 %v3057, %v3049
        %v3138 = vpack.c.b16 %v3058, %v3050
        %v3139 = vpack.c.b16 %v3059, %v3051
        %v3140 = vpack.c.b16 %v3068, %v3060
        %v3141 = vpack.c.b16 %v3069, %v3061
        %v3142 = vpack.c.b16 %v3070, %v3062
        %v3143 = vpack.c.b16 %v3071, %v3063
        %v3144 = vpack.c.b16 %v3072, %v3064
        %v3145 = vpack.c.b16 %v3073, %v3065
        %v3146 = vpack.c.b16 %v3074, %v3066
        %v3147 = vpack.c.b16 %v3075, %v3067
        %v3148 = vpack.c.b16 %v3084, %v3076
        %v3149 = vpack.c.b16 %v3085, %v3077
        %v3150 = vpack.c.b16 %v3086, %v3078
        %v3151 = vpack.c.b16 %v3087, %v3079
        %v3152 = vpack.c.b16 %v3088, %v3080
        %v3153 = vpack.c.b16 %v3089, %v3081
        %v3154 = vpack.c.b16 %v3090, %v3082
        %v3155 = vpack.c.b16 %v3091, %v3083
        %3220 = vmatpush.bf16.msra.mxu0 %v3148
        %3221 = vmatpush.bf16.msra.mxu0 %v3140
        %3222 = vmatpush.bf16.msra.mxu0 %v3132
        %3223 = vmatpush.bf16.msra.mxu0 %v3124
        %3224 = vmatpush.bf16.msra.mxu0 %v3116
        %3225 = vmatpush.bf16.msra.mxu0 %v3108
        %3226 = vmatpush.bf16.msra.mxu0 %v3100
        %3227 = vmatpush.bf16.msra.mxu0 %v3092
        %3228 = vmatmul.bf16.gmra.mxu0 %v2898
        %v3229 = vpop.f32.mrf.mxu0
        %v3230 = vadd.f32 0.0, %v3229
        %v3231 = vpop.f32.mrf.mxu0
        %v3232 = vadd.f32 0.0, %v3231
        %3233 = vdwg.mxu0
        %3234 = vmatpush.bf16.msra.mxu0 %v3149
        %3235 = vmatpush.bf16.msra.mxu0 %v3141
        %3236 = vmatpush.bf16.msra.mxu0 %v3133
        %3237 = vmatpush.bf16.msra.mxu0 %v3125
        %3238 = vmatpush.bf16.msra.mxu0 %v3117
        %3239 = vmatpush.bf16.msra.mxu0 %v3109
        %3240 = vmatpush.bf16.msra.mxu0 %v3101
        %3241 = vmatpush.bf16.msra.mxu0 %v3093
        %3242 = vmatmul.bf16.gmra.mxu0 %v2898
        %v3243 = vpop.f32.mrf.mxu0
        %v3244 = vadd.f32 0.0, %v3243
        %v3245 = vpop.f32.mrf.mxu0
        %v3246 = vadd.f32 0.0, %v3245
        %3247 = vdwg.mxu0
        %3248 = vmatpush.bf16.msra.mxu0 %v3150
        %3249 = vmatpush.bf16.msra.mxu0 %v3142
        %3250 = vmatpush.bf16.msra.mxu0 %v3134
        %3251 = vmatpush.bf16.msra.mxu0 %v3126
        %3252 = vmatpush.bf16.msra.mxu0 %v3118
        %3253 = vmatpush.bf16.msra.mxu0 %v3110
        %3254 = vmatpush.bf16.msra.mxu0 %v3102
        %3255 = vmatpush.bf16.msra.mxu0 %v3094
        %3256 = vmatmul.bf16.gmra.mxu0 %v2898
        %v3257 = vpop.f32.mrf.mxu0
        %v3258 = vadd.f32 0.0, %v3257
        %v3259 = vpop.f32.mrf.mxu0
        %v3260 = vadd.f32 0.0, %v3259
        %3261 = vdwg.mxu0
        %3262 = vmatpush.bf16.msra.mxu0 %v3151
        %3263 = vmatpush.bf16.msra.mxu0 %v3143
        %3264 = vmatpush.bf16.msra.mxu0 %v3135
        %3265 = vmatpush.bf16.msra.mxu0 %v3127
        %3266 = vmatpush.bf16.msra.mxu0 %v3119
        %3267 = vmatpush.bf16.msra.mxu0 %v3111
        %3268 = vmatpush.bf16.msra.mxu0 %v3103
        %3269 = vmatpush.bf16.msra.mxu0 %v3095
        %3270 = vmatmul.bf16.gmra.mxu0 %v2898
        %v3271 = vpop.f32.mrf.mxu0
        %v3272 = vadd.f32 0.0, %v3271
        %v3273 = vpop.f32.mrf.mxu0
        %v3274 = vadd.f32 0.0, %v3273
        %3275 = vdwg.mxu0
        %3276 = vmatpush.bf16.msra.mxu0 %v3152
        %3277 = vmatpush.bf16.msra.mxu0 %v3144
        %3278 = vmatpush.bf16.msra.mxu0 %v3136
        %3279 = vmatpush.bf16.msra.mxu0 %v3128
        %3280 = vmatpush.bf16.msra.mxu0 %v3120
        %3281 = vmatpush.bf16.msra.mxu0 %v3112
        %3282 = vmatpush.bf16.msra.mxu0 %v3104
        %3283 = vmatpush.bf16.msra.mxu0 %v3096
        %3284 = vmatmul.bf16.gmra.mxu0 %v2898
        %v3285 = vpop.f32.mrf.mxu0
        %v3286 = vadd.f32 0.0, %v3285
        %v3287 = vpop.f32.mrf.mxu0
        %v3288 = vadd.f32 0.0, %v3287
        %3289 = vdwg.mxu0
        %3290 = vmatpush.bf16.msra.mxu0 %v3153
        %3291 = vmatpush.bf16.msra.mxu0 %v3145
        %3292 = vmatpush.bf16.msra.mxu0 %v3137
        %3293 = vmatpush.bf16.msra.mxu0 %v3129
        %3294 = vmatpush.bf16.msra.mxu0 %v3121
        %3295 = vmatpush.bf16.msra.mxu0 %v3113
        %3296 = vmatpush.bf16.msra.mxu0 %v3105
        %3297 = vmatpush.bf16.msra.mxu0 %v3097
        %3298 = vmatmul.bf16.gmra.mxu0 %v2898
        %v3299 = vpop.f32.mrf.mxu0
        %v3300 = vadd.f32 0.0, %v3299
        %v3301 = vpop.f32.mrf.mxu0
        %v3302 = vadd.f32 0.0, %v3301
        %3303 = vdwg.mxu0
        %3304 = vmatpush.bf16.msra.mxu0 %v3154
        %3305 = vmatpush.bf16.msra.mxu0 %v3146
        %3306 = vmatpush.bf16.msra.mxu0 %v3138
        %3307 = vmatpush.bf16.msra.mxu0 %v3130
        %3308 = vmatpush.bf16.msra.mxu0 %v3122
        %3309 = vmatpush.bf16.msra.mxu0 %v3114
        %3310 = vmatpush.bf16.msra.mxu0 %v3106
        %3311 = vmatpush.bf16.msra.mxu0 %v3098
        %3312 = vmatmul.bf16.gmra.mxu0 %v2898
        %v3313 = vpop.f32.mrf.mxu0
        %v3314 = vadd.f32 0.0, %v3313
        %v3315 = vpop.f32.mrf.mxu0
        %v3316 = vadd.f32 0.0, %v3315
        %3317 = vdwg.mxu0
        %3318 = vmatpush.bf16.msra.mxu0 %v3155
        %3319 = vmatpush.bf16.msra.mxu0 %v3147
        %3320 = vmatpush.bf16.msra.mxu0 %v3139
        %3321 = vmatpush.bf16.msra.mxu0 %v3131
        %3322 = vmatpush.bf16.msra.mxu0 %v3123
        %3323 = vmatpush.bf16.msra.mxu0 %v3115
        %3324 = vmatpush.bf16.msra.mxu0 %v3107
        %3325 = vmatpush.bf16.msra.mxu0 %v3099
        %3326 = vmatmul.bf16.gmra.mxu0 %v2898
        %v3327 = vpop.f32.mrf.mxu0
        %v3328 = vadd.f32 0.0, %v3327
        %v3329 = vpop.f32.mrf.mxu0
        %v3330 = vadd.f32 0.0, %v3329
        %3331 = vdwg.mxu0
        %v3332 = vadd.f32 %v2796, %v3230
        %v3333 = vadd.f32 %v2797, %v3244
        %v3334 = vadd.f32 %v2798, %v3258
        %v3335 = vadd.f32 %v2799, %v3272
        %v3336 = vadd.f32 %v2800, %v3286
        %v3337 = vadd.f32 %v2801, %v3300
        %v3338 = vadd.f32 %v2802, %v3314
        %v3339 = vadd.f32 %v2803, %v3328
        %v3340 = vadd.f32 %v2804, %v3232
        %v3341 = vadd.f32 %v2805, %v3246
        %v3342 = vadd.f32 %v2806, %v3260
        %v3343 = vadd.f32 %v2807, %v3274
        %v3344 = vadd.f32 %v2808, %v3288
        %v3345 = vadd.f32 %v2809, %v3302
        %v3346 = vadd.f32 %v2810, %v3316
        %v3347 = vadd.f32 %v2811, %v3330
        %v3348 = vld [vmem:[%s202] sm:$0x8]
        %s3349 = scalar_lea.vmem %s1, 3072
        %v3350 = vld [vmem:[%s3349] sm:$0xff]
        %v3351 = vld [vmem:[%s3349 + $0x8] sm:$0xff]
        %v3352 = vld [vmem:[%s3349 + $0x10] sm:$0xff]
        %v3353 = vld [vmem:[%s3349 + $0x18] sm:$0xff]
        %v3354 = vld [vmem:[%s3349 + $0x20] sm:$0xff]
        %v3355 = vld [vmem:[%s3349 + $0x28] sm:$0xff]
        %v3356 = vld [vmem:[%s3349 + $0x30] sm:$0xff]
        %v3357 = vld [vmem:[%s3349 + $0x38] sm:$0xff]
        %v3358 = vld [vmem:[%s3349 + $0x40] sm:$0xff]
        %v3359 = vld [vmem:[%s3349 + $0x48] sm:$0xff]
        %v3360 = vld [vmem:[%s3349 + $0x50] sm:$0xff]
        %v3361 = vld [vmem:[%s3349 + $0x58] sm:$0xff]
        %v3362 = vld [vmem:[%s3349 + $0x60] sm:$0xff]
        %v3363 = vld [vmem:[%s3349 + $0x68] sm:$0xff]
        %v3364 = vld [vmem:[%s3349 + $0x70] sm:$0xff]
        %v3365 = vld [vmem:[%s3349 + $0x78] sm:$0xff]
        %v3366 = vld [vmem:[%s3349 + $0x80] sm:$0xff]
        %v3367 = vld [vmem:[%s3349 + $0x88] sm:$0xff]
        %v3368 = vld [vmem:[%s3349 + $0x90] sm:$0xff]
        %v3369 = vld [vmem:[%s3349 + $0x98] sm:$0xff]
        %v3370 = vld [vmem:[%s3349 + $0xa0] sm:$0xff]
        %v3371 = vld [vmem:[%s3349 + $0xa8] sm:$0xff]
        %v3372 = vld [vmem:[%s3349 + $0xb0] sm:$0xff]
        %v3373 = vld [vmem:[%s3349 + $0xb8] sm:$0xff]
        %v3374 = vld [vmem:[%s3349 + $0xc0] sm:$0xff]
        %v3375 = vld [vmem:[%s3349 + $0xc8] sm:$0xff]
        %v3376 = vld [vmem:[%s3349 + $0xd0] sm:$0xff]
        %v3377 = vld [vmem:[%s3349 + $0xd8] sm:$0xff]
        %v3378 = vld [vmem:[%s3349 + $0xe0] sm:$0xff]
        %v3379 = vld [vmem:[%s3349 + $0xe8] sm:$0xff]
        %v3380 = vld [vmem:[%s3349 + $0xf0] sm:$0xff]
        %v3381 = vld [vmem:[%s3349 + $0xf8] sm:$0xff]
        %v3382 = vld [vmem:[%s3349 + $0x100] sm:$0xff]
        %v3383 = vld [vmem:[%s3349 + $0x108] sm:$0xff]
        %v3384 = vld [vmem:[%s3349 + $0x110] sm:$0xff]
        %v3385 = vld [vmem:[%s3349 + $0x118] sm:$0xff]
        %v3386 = vld [vmem:[%s3349 + $0x120] sm:$0xff]
        %v3387 = vld [vmem:[%s3349 + $0x128] sm:$0xff]
        %v3388 = vld [vmem:[%s3349 + $0x130] sm:$0xff]
        %v3389 = vld [vmem:[%s3349 + $0x138] sm:$0xff]
        %v3390 = vld [vmem:[%s3349 + $0x140] sm:$0xff]
        %v3391 = vld [vmem:[%s3349 + $0x148] sm:$0xff]
        %v3392 = vld [vmem:[%s3349 + $0x150] sm:$0xff]
        %v3393 = vld [vmem:[%s3349 + $0x158] sm:$0xff]
        %v3394 = vld [vmem:[%s3349 + $0x160] sm:$0xff]
        %v3395 = vld [vmem:[%s3349 + $0x168] sm:$0xff]
        %v3396 = vld [vmem:[%s3349 + $0x170] sm:$0xff]
        %v3397 = vld [vmem:[%s3349 + $0x178] sm:$0xff]
        %v3398 = vld [vmem:[%s3349 + $0x180] sm:$0xff]
        %v3399 = vld [vmem:[%s3349 + $0x188] sm:$0xff]
        %v3400 = vld [vmem:[%s3349 + $0x190] sm:$0xff]
        %v3401 = vld [vmem:[%s3349 + $0x198] sm:$0xff]
        %v3402 = vld [vmem:[%s3349 + $0x1a0] sm:$0xff]
        %v3403 = vld [vmem:[%s3349 + $0x1a8] sm:$0xff]
        %v3404 = vld [vmem:[%s3349 + $0x1b0] sm:$0xff]
        %v3405 = vld [vmem:[%s3349 + $0x1b8] sm:$0xff]
        %v3406 = vld [vmem:[%s3349 + $0x1c0] sm:$0xff]
        %v3407 = vld [vmem:[%s3349 + $0x1c8] sm:$0xff]
        %v3408 = vld [vmem:[%s3349 + $0x1d0] sm:$0xff]
        %v3409 = vld [vmem:[%s3349 + $0x1d8] sm:$0xff]
        %v3410 = vld [vmem:[%s3349 + $0x1e0] sm:$0xff]
        %v3411 = vld [vmem:[%s3349 + $0x1e8] sm:$0xff]
        %v3412 = vld [vmem:[%s3349 + $0x1f0] sm:$0xff]
        %v3413 = vld [vmem:[%s3349 + $0x1f8] sm:$0xff]
        %v3415 = vunpack.c.l.b16 %v3348
        %v3416 = vpack.c.b16 %v344, %v3415
        %vm3417 = vcmask 1044480
        %v3418 = vrot.slane %v3416, 3
        %v3419 = vrot.slane %v2880, 3
        %v3420 = vsel %vm3417, %v3418, %v3419
        %v3486 = vunpack.c.l.b16 %v3350
        %v3487 = vunpack.c.h.b16 %v3350
        %v3488 = vunpack.c.l.b16 %v3351
        %v3489 = vunpack.c.h.b16 %v3351
        %v3490 = vunpack.c.l.b16 %v3352
        %v3491 = vunpack.c.h.b16 %v3352
        %v3492 = vunpack.c.l.b16 %v3353
        %v3493 = vunpack.c.h.b16 %v3353
        %v3494 = vunpack.c.l.b16 %v3354
        %v3495 = vunpack.c.h.b16 %v3354
        %v3496 = vunpack.c.l.b16 %v3355
        %v3497 = vunpack.c.h.b16 %v3355
        %v3498 = vunpack.c.l.b16 %v3356
        %v3499 = vunpack.c.h.b16 %v3356
        %v3500 = vunpack.c.l.b16 %v3357
        %v3501 = vunpack.c.h.b16 %v3357
        %v3502 = vunpack.c.l.b16 %v3358
        %v3503 = vunpack.c.h.b16 %v3358
        %v3504 = vunpack.c.l.b16 %v3359
        %v3505 = vunpack.c.h.b16 %v3359
        %v3506 = vunpack.c.l.b16 %v3360
        %v3507 = vunpack.c.h.b16 %v3360
        %v3508 = vunpack.c.l.b16 %v3361
        %v3509 = vunpack.c.h.b16 %v3361
        %v3510 = vunpack.c.l.b16 %v3362
        %v3511 = vunpack.c.h.b16 %v3362
        %v3512 = vunpack.c.l.b16 %v3363
        %v3513 = vunpack.c.h.b16 %v3363
        %v3514 = vunpack.c.l.b16 %v3364
        %v3515 = vunpack.c.h.b16 %v3364
        %v3516 = vunpack.c.l.b16 %v3365
        %v3517 = vunpack.c.h.b16 %v3365
        %v3518 = vunpack.c.l.b16 %v3366
        %v3519 = vunpack.c.h.b16 %v3366
        %v3520 = vunpack.c.l.b16 %v3367
        %v3521 = vunpack.c.h.b16 %v3367
        %v3522 = vunpack.c.l.b16 %v3368
        %v3523 = vunpack.c.h.b16 %v3368
        %v3524 = vunpack.c.l.b16 %v3369
        %v3525 = vunpack.c.h.b16 %v3369
        %v3526 = vunpack.c.l.b16 %v3370
        %v3527 = vunpack.c.h.b16 %v3370
        %v3528 = vunpack.c.l.b16 %v3371
        %v3529 = vunpack.c.h.b16 %v3371
        %v3530 = vunpack.c.l.b16 %v3372
        %v3531 = vunpack.c.h.b16 %v3372
        %v3532 = vunpack.c.l.b16 %v3373
        %v3533 = vunpack.c.h.b16 %v3373
        %v3534 = vunpack.c.l.b16 %v3374
        %v3535 = vunpack.c.h.b16 %v3374
        %v3536 = vunpack.c.l.b16 %v3375
        %v3537 = vunpack.c.h.b16 %v3375
        %v3538 = vunpack.c.l.b16 %v3376
        %v3539 = vunpack.c.h.b16 %v3376
        %v3540 = vunpack.c.l.b16 %v3377
        %v3541 = vunpack.c.h.b16 %v3377
        %v3542 = vunpack.c.l.b16 %v3378
        %v3543 = vunpack.c.h.b16 %v3378
        %v3544 = vunpack.c.l.b16 %v3379
        %v3545 = vunpack.c.h.b16 %v3379
        %v3546 = vunpack.c.l.b16 %v3380
        %v3547 = vunpack.c.h.b16 %v3380
        %v3548 = vunpack.c.l.b16 %v3381
        %v3549 = vunpack.c.h.b16 %v3381
        %v3550 = vunpack.c.l.b16 %v3382
        %v3551 = vunpack.c.h.b16 %v3382
        %v3552 = vunpack.c.l.b16 %v3383
        %v3553 = vunpack.c.h.b16 %v3383
        %v3554 = vunpack.c.l.b16 %v3384
        %v3555 = vunpack.c.h.b16 %v3384
        %v3556 = vunpack.c.l.b16 %v3385
        %v3557 = vunpack.c.h.b16 %v3385
        %v3558 = vunpack.c.l.b16 %v3386
        %v3559 = vunpack.c.h.b16 %v3386
        %v3560 = vunpack.c.l.b16 %v3387
        %v3561 = vunpack.c.h.b16 %v3387
        %v3562 = vunpack.c.l.b16 %v3388
        %v3563 = vunpack.c.h.b16 %v3388
        %v3564 = vunpack.c.l.b16 %v3389
        %v3565 = vunpack.c.h.b16 %v3389
        %v3566 = vunpack.c.l.b16 %v3390
        %v3567 = vunpack.c.h.b16 %v3390
        %v3568 = vunpack.c.l.b16 %v3391
        %v3569 = vunpack.c.h.b16 %v3391
        %v3570 = vunpack.c.l.b16 %v3392
        %v3571 = vunpack.c.h.b16 %v3392
        %v3572 = vunpack.c.l.b16 %v3393
        %v3573 = vunpack.c.h.b16 %v3393
        %v3574 = vunpack.c.l.b16 %v3394
        %v3575 = vunpack.c.h.b16 %v3394
        %v3576 = vunpack.c.l.b16 %v3395
        %v3577 = vunpack.c.h.b16 %v3395
        %v3578 = vunpack.c.l.b16 %v3396
        %v3579 = vunpack.c.h.b16 %v3396
        %v3580 = vunpack.c.l.b16 %v3397
        %v3581 = vunpack.c.h.b16 %v3397
        %v3582 = vunpack.c.l.b16 %v3398
        %v3583 = vunpack.c.h.b16 %v3398
        %v3584 = vunpack.c.l.b16 %v3399
        %v3585 = vunpack.c.h.b16 %v3399
        %v3586 = vunpack.c.l.b16 %v3400
        %v3587 = vunpack.c.h.b16 %v3400
        %v3588 = vunpack.c.l.b16 %v3401
        %v3589 = vunpack.c.h.b16 %v3401
        %v3590 = vunpack.c.l.b16 %v3402
        %v3591 = vunpack.c.h.b16 %v3402
        %v3592 = vunpack.c.l.b16 %v3403
        %v3593 = vunpack.c.h.b16 %v3403
        %v3594 = vunpack.c.l.b16 %v3404
        %v3595 = vunpack.c.h.b16 %v3404
        %v3596 = vunpack.c.l.b16 %v3405
        %v3597 = vunpack.c.h.b16 %v3405
        %v3598 = vunpack.c.l.b16 %v3406
        %v3599 = vunpack.c.h.b16 %v3406
        %v3600 = vunpack.c.l.b16 %v3407
        %v3601 = vunpack.c.h.b16 %v3407
        %v3602 = vunpack.c.l.b16 %v3408
        %v3603 = vunpack.c.h.b16 %v3408
        %v3604 = vunpack.c.l.b16 %v3409
        %v3605 = vunpack.c.h.b16 %v3409
        %v3606 = vunpack.c.l.b16 %v3410
        %v3607 = vunpack.c.h.b16 %v3410
        %v3608 = vunpack.c.l.b16 %v3411
        %v3609 = vunpack.c.h.b16 %v3411
        %v3610 = vunpack.c.l.b16 %v3412
        %v3611 = vunpack.c.h.b16 %v3412
        %v3612 = vunpack.c.l.b16 %v3413
        %v3613 = vunpack.c.h.b16 %v3413
        %v3614 = vpack.c.b16 %v3494, %v3486
        %v3615 = vpack.c.b16 %v3495, %v3487
        %v3616 = vpack.c.b16 %v3496, %v3488
        %v3617 = vpack.c.b16 %v3497, %v3489
        %v3618 = vpack.c.b16 %v3498, %v3490
        %v3619 = vpack.c.b16 %v3499, %v3491
        %v3620 = vpack.c.b16 %v3500, %v3492
        %v3621 = vpack.c.b16 %v3501, %v3493
        %v3622 = vpack.c.b16 %v3510, %v3502
        %v3623 = vpack.c.b16 %v3511, %v3503
        %v3624 = vpack.c.b16 %v3512, %v3504
        %v3625 = vpack.c.b16 %v3513, %v3505
        %v3626 = vpack.c.b16 %v3514, %v3506
        %v3627 = vpack.c.b16 %v3515, %v3507
        %v3628 = vpack.c.b16 %v3516, %v3508
        %v3629 = vpack.c.b16 %v3517, %v3509
        %v3630 = vpack.c.b16 %v3526, %v3518
        %v3631 = vpack.c.b16 %v3527, %v3519
        %v3632 = vpack.c.b16 %v3528, %v3520
        %v3633 = vpack.c.b16 %v3529, %v3521
        %v3634 = vpack.c.b16 %v3530, %v3522
        %v3635 = vpack.c.b16 %v3531, %v3523
        %v3636 = vpack.c.b16 %v3532, %v3524
        %v3637 = vpack.c.b16 %v3533, %v3525
        %v3638 = vpack.c.b16 %v3542, %v3534
        %v3639 = vpack.c.b16 %v3543, %v3535
        %v3640 = vpack.c.b16 %v3544, %v3536
        %v3641 = vpack.c.b16 %v3545, %v3537
        %v3642 = vpack.c.b16 %v3546, %v3538
        %v3643 = vpack.c.b16 %v3547, %v3539
        %v3644 = vpack.c.b16 %v3548, %v3540
        %v3645 = vpack.c.b16 %v3549, %v3541
        %v3646 = vpack.c.b16 %v3558, %v3550
        %v3647 = vpack.c.b16 %v3559, %v3551
        %v3648 = vpack.c.b16 %v3560, %v3552
        %v3649 = vpack.c.b16 %v3561, %v3553
        %v3650 = vpack.c.b16 %v3562, %v3554
        %v3651 = vpack.c.b16 %v3563, %v3555
        %v3652 = vpack.c.b16 %v3564, %v3556
        %v3653 = vpack.c.b16 %v3565, %v3557
        %v3654 = vpack.c.b16 %v3574, %v3566
        %v3655 = vpack.c.b16 %v3575, %v3567
        %v3656 = vpack.c.b16 %v3576, %v3568
        %v3657 = vpack.c.b16 %v3577, %v3569
        %v3658 = vpack.c.b16 %v3578, %v3570
        %v3659 = vpack.c.b16 %v3579, %v3571
        %v3660 = vpack.c.b16 %v3580, %v3572
        %v3661 = vpack.c.b16 %v3581, %v3573
        %v3662 = vpack.c.b16 %v3590, %v3582
        %v3663 = vpack.c.b16 %v3591, %v3583
        %v3664 = vpack.c.b16 %v3592, %v3584
        %v3665 = vpack.c.b16 %v3593, %v3585
        %v3666 = vpack.c.b16 %v3594, %v3586
        %v3667 = vpack.c.b16 %v3595, %v3587
        %v3668 = vpack.c.b16 %v3596, %v3588
        %v3669 = vpack.c.b16 %v3597, %v3589
        %v3670 = vpack.c.b16 %v3606, %v3598
        %v3671 = vpack.c.b16 %v3607, %v3599
        %v3672 = vpack.c.b16 %v3608, %v3600
        %v3673 = vpack.c.b16 %v3609, %v3601
        %v3674 = vpack.c.b16 %v3610, %v3602
        %v3675 = vpack.c.b16 %v3611, %v3603
        %v3676 = vpack.c.b16 %v3612, %v3604
        %v3677 = vpack.c.b16 %v3613, %v3605
        %3742 = vmatpush.bf16.msra.mxu0 %v3670
        %3743 = vmatpush.bf16.msra.mxu0 %v3662
        %3744 = vmatpush.bf16.msra.mxu0 %v3654
        %3745 = vmatpush.bf16.msra.mxu0 %v3646
        %3746 = vmatpush.bf16.msra.mxu0 %v3638
        %3747 = vmatpush.bf16.msra.mxu0 %v3630
        %3748 = vmatpush.bf16.msra.mxu0 %v3622
        %3749 = vmatpush.bf16.msra.mxu0 %v3614
        %3750 = vmatmul.bf16.gmra.mxu0 %v3420
        %v3751 = vpop.f32.mrf.mxu0
        %v3752 = vadd.f32 0.0, %v3751
        %v3753 = vpop.f32.mrf.mxu0
        %v3754 = vadd.f32 0.0, %v3753
        %3755 = vdwg.mxu0
        %3756 = vmatpush.bf16.msra.mxu0 %v3671
        %3757 = vmatpush.bf16.msra.mxu0 %v3663
        %3758 = vmatpush.bf16.msra.mxu0 %v3655
        %3759 = vmatpush.bf16.msra.mxu0 %v3647
        %3760 = vmatpush.bf16.msra.mxu0 %v3639
        %3761 = vmatpush.bf16.msra.mxu0 %v3631
        %3762 = vmatpush.bf16.msra.mxu0 %v3623
        %3763 = vmatpush.bf16.msra.mxu0 %v3615
        %3764 = vmatmul.bf16.gmra.mxu0 %v3420
        %v3765 = vpop.f32.mrf.mxu0
        %v3766 = vadd.f32 0.0, %v3765
        %v3767 = vpop.f32.mrf.mxu0
        %v3768 = vadd.f32 0.0, %v3767
        %3769 = vdwg.mxu0
        %3770 = vmatpush.bf16.msra.mxu0 %v3672
        %3771 = vmatpush.bf16.msra.mxu0 %v3664
        %3772 = vmatpush.bf16.msra.mxu0 %v3656
        %3773 = vmatpush.bf16.msra.mxu0 %v3648
        %3774 = vmatpush.bf16.msra.mxu0 %v3640
        %3775 = vmatpush.bf16.msra.mxu0 %v3632
        %3776 = vmatpush.bf16.msra.mxu0 %v3624
        %3777 = vmatpush.bf16.msra.mxu0 %v3616
        %3778 = vmatmul.bf16.gmra.mxu0 %v3420
        %v3779 = vpop.f32.mrf.mxu0
        %v3780 = vadd.f32 0.0, %v3779
        %v3781 = vpop.f32.mrf.mxu0
        %v3782 = vadd.f32 0.0, %v3781
        %3783 = vdwg.mxu0
        %3784 = vmatpush.bf16.msra.mxu0 %v3673
        %3785 = vmatpush.bf16.msra.mxu0 %v3665
        %3786 = vmatpush.bf16.msra.mxu0 %v3657
        %3787 = vmatpush.bf16.msra.mxu0 %v3649
        %3788 = vmatpush.bf16.msra.mxu0 %v3641
        %3789 = vmatpush.bf16.msra.mxu0 %v3633
        %3790 = vmatpush.bf16.msra.mxu0 %v3625
        %3791 = vmatpush.bf16.msra.mxu0 %v3617
        %3792 = vmatmul.bf16.gmra.mxu0 %v3420
        %v3793 = vpop.f32.mrf.mxu0
        %v3794 = vadd.f32 0.0, %v3793
        %v3795 = vpop.f32.mrf.mxu0
        %v3796 = vadd.f32 0.0, %v3795
        %3797 = vdwg.mxu0
        %3798 = vmatpush.bf16.msra.mxu0 %v3674
        %3799 = vmatpush.bf16.msra.mxu0 %v3666
        %3800 = vmatpush.bf16.msra.mxu0 %v3658
        %3801 = vmatpush.bf16.msra.mxu0 %v3650
        %3802 = vmatpush.bf16.msra.mxu0 %v3642
        %3803 = vmatpush.bf16.msra.mxu0 %v3634
        %3804 = vmatpush.bf16.msra.mxu0 %v3626
        %3805 = vmatpush.bf16.msra.mxu0 %v3618
        %3806 = vmatmul.bf16.gmra.mxu0 %v3420
        %v3807 = vpop.f32.mrf.mxu0
        %v3808 = vadd.f32 0.0, %v3807
        %v3809 = vpop.f32.mrf.mxu0
        %v3810 = vadd.f32 0.0, %v3809
        %3811 = vdwg.mxu0
        %3812 = vmatpush.bf16.msra.mxu0 %v3675
        %3813 = vmatpush.bf16.msra.mxu0 %v3667
        %3814 = vmatpush.bf16.msra.mxu0 %v3659
        %3815 = vmatpush.bf16.msra.mxu0 %v3651
        %3816 = vmatpush.bf16.msra.mxu0 %v3643
        %3817 = vmatpush.bf16.msra.mxu0 %v3635
        %3818 = vmatpush.bf16.msra.mxu0 %v3627
        %3819 = vmatpush.bf16.msra.mxu0 %v3619
        %3820 = vmatmul.bf16.gmra.mxu0 %v3420
        %v3821 = vpop.f32.mrf.mxu0
        %v3822 = vadd.f32 0.0, %v3821
        %v3823 = vpop.f32.mrf.mxu0
        %v3824 = vadd.f32 0.0, %v3823
        %3825 = vdwg.mxu0
        %3826 = vmatpush.bf16.msra.mxu0 %v3676
        %3827 = vmatpush.bf16.msra.mxu0 %v3668
        %3828 = vmatpush.bf16.msra.mxu0 %v3660
        %3829 = vmatpush.bf16.msra.mxu0 %v3652
        %3830 = vmatpush.bf16.msra.mxu0 %v3644
        %3831 = vmatpush.bf16.msra.mxu0 %v3636
        %3832 = vmatpush.bf16.msra.mxu0 %v3628
        %3833 = vmatpush.bf16.msra.mxu0 %v3620
        %3834 = vmatmul.bf16.gmra.mxu0 %v3420
        %v3835 = vpop.f32.mrf.mxu0
        %v3836 = vadd.f32 0.0, %v3835
        %v3837 = vpop.f32.mrf.mxu0
        %v3838 = vadd.f32 0.0, %v3837
        %3839 = vdwg.mxu0
        %3840 = vmatpush.bf16.msra.mxu0 %v3677
        %3841 = vmatpush.bf16.msra.mxu0 %v3669
        %3842 = vmatpush.bf16.msra.mxu0 %v3661
        %3843 = vmatpush.bf16.msra.mxu0 %v3653
        %3844 = vmatpush.bf16.msra.mxu0 %v3645
        %3845 = vmatpush.bf16.msra.mxu0 %v3637
        %3846 = vmatpush.bf16.msra.mxu0 %v3629
        %3847 = vmatpush.bf16.msra.mxu0 %v3621
        %3848 = vmatmul.bf16.gmra.mxu0 %v3420
        %v3849 = vpop.f32.mrf.mxu0
        %v3850 = vadd.f32 0.0, %v3849
        %v3851 = vpop.f32.mrf.mxu0
        %v3852 = vadd.f32 0.0, %v3851
        %3853 = vdwg.mxu0
        %v3854 = vadd.f32 %v3332, %v3752
        %v3855 = vadd.f32 %v3333, %v3766
        %v3856 = vadd.f32 %v3334, %v3780
        %v3857 = vadd.f32 %v3335, %v3794
        %v3858 = vadd.f32 %v3336, %v3808
        %v3859 = vadd.f32 %v3337, %v3822
        %v3860 = vadd.f32 %v3338, %v3836
        %v3861 = vadd.f32 %v3339, %v3850
        %v3862 = vadd.f32 %v3340, %v3754
        %v3863 = vadd.f32 %v3341, %v3768
        %v3864 = vadd.f32 %v3342, %v3782
        %v3865 = vadd.f32 %v3343, %v3796
        %v3866 = vadd.f32 %v3344, %v3810
        %v3867 = vadd.f32 %v3345, %v3824
        %v3868 = vadd.f32 %v3346, %v3838
        %v3869 = vadd.f32 %v3347, %v3852
        %v3870 = vld [vmem:[%s2] sm:$0xff]
        %v3872 = vperm.slane %v3870, 0
        %v3873 = vperm.slane %v3870, 1
        %v3874 = vperm.slane %v3870, 2
        %v3875 = vperm.slane %v3870, 3
        %v3876 = vperm.slane %v3870, 4
        %v3877 = vperm.slane %v3870, 5
        %v3878 = vperm.slane %v3870, 6
        %v3879 = vperm.slane %v3870, 7
        %v3888 = vadd.f32 %v3854, %v3872
        %v3889 = vadd.f32 %v3855, %v3873
        %v3890 = vadd.f32 %v3856, %v3874
        %v3891 = vadd.f32 %v3857, %v3875
        %v3892 = vadd.f32 %v3858, %v3876
        %v3893 = vadd.f32 %v3859, %v3877
        %v3894 = vadd.f32 %v3860, %v3878
        %v3895 = vadd.f32 %v3861, %v3879
        %v3896 = vadd.f32 %v3862, %v3872
        %v3897 = vadd.f32 %v3863, %v3873
        %v3898 = vadd.f32 %v3864, %v3874
        %v3899 = vadd.f32 %v3865, %v3875
        %v3900 = vadd.f32 %v3866, %v3876
        %v3901 = vadd.f32 %v3867, %v3877
        %v3902 = vadd.f32 %v3868, %v3878
        %v3903 = vadd.f32 %v3869, %v3879
        %p3904 = scmp.gt.s32.totalorder %s22, 0
        // Predicated region
        $region33: #{pa_forward.1} parent=31 // pred_check
          %p3905 = pneg %p3904
        $region34: #{pa_forward.1} parent=31 // pred_check_branch
          %3907 = sbr.rel (%p3905) target = $region36
        $region35: #{pa_forward.1} parent=31 // pred_region
          %v3908 = vld [vmem:[#allocation2] sm:$0xff]
          %v3909 = vld [vmem:[#allocation2 + $0x8] sm:$0xff]
          %v3910 = vld [vmem:[#allocation2 + $0x10] sm:$0xff]
          %v3911 = vld [vmem:[#allocation2 + $0x18] sm:$0xff]
          %v3912 = vld [vmem:[#allocation2 + $0x20] sm:$0xff]
          %v3913 = vld [vmem:[#allocation2 + $0x28] sm:$0xff]
          %v3914 = vld [vmem:[#allocation2 + $0x30] sm:$0xff]
          %v3915 = vld [vmem:[#allocation2 + $0x38] sm:$0xff]
          %v3916 = vld [vmem:[#allocation2 + $0x40] sm:$0xff]
          %v3917 = vld [vmem:[#allocation2 + $0x48] sm:$0xff]
          %v3918 = vld [vmem:[#allocation2 + $0x50] sm:$0xff]
          %v3919 = vld [vmem:[#allocation2 + $0x58] sm:$0xff]
          %v3920 = vld [vmem:[#allocation2 + $0x60] sm:$0xff]
          %v3921 = vld [vmem:[#allocation2 + $0x68] sm:$0xff]
          %v3922 = vld [vmem:[#allocation2 + $0x70] sm:$0xff]
          %v3923 = vld [vmem:[#allocation2 + $0x78] sm:$0xff]
          %v3924 = vsub.f32 %v3908, %v3888
          %v3925 = vsub.f32 %v3909, %v3889
          %v3926 = vsub.f32 %v3910, %v3890
          %v3927 = vsub.f32 %v3911, %v3891
          %v3928 = vsub.f32 %v3912, %v3892
          %v3929 = vsub.f32 %v3913, %v3893
          %v3930 = vsub.f32 %v3914, %v3894
          %v3931 = vsub.f32 %v3915, %v3895
          %v3932 = vsub.f32 %v3916, %v3896
          %v3933 = vsub.f32 %v3917, %v3897
          %v3934 = vsub.f32 %v3918, %v3898
          %v3935 = vsub.f32 %v3919, %v3899
          %v3936 = vsub.f32 %v3920, %v3900
          %v3937 = vsub.f32 %v3921, %v3901
          %v3938 = vsub.f32 %v3922, %v3902
          %v3939 = vsub.f32 %v3923, %v3903
          %v3940 = vadd.f32 %v3924, 1e-06
          %v3941 = vadd.f32 %v3925, 1e-06
          %v3942 = vadd.f32 %v3926, 1e-06
          %v3943 = vadd.f32 %v3927, 1e-06
          %v3944 = vadd.f32 %v3928, 1e-06
          %v3945 = vadd.f32 %v3929, 1e-06
          %v3946 = vadd.f32 %v3930, 1e-06
          %v3947 = vadd.f32 %v3931, 1e-06
          %v3948 = vadd.f32 %v3932, 1e-06
          %v3949 = vadd.f32 %v3933, 1e-06
          %v3950 = vadd.f32 %v3934, 1e-06
          %v3951 = vadd.f32 %v3935, 1e-06
          %v3952 = vadd.f32 %v3936, 1e-06
          %v3953 = vadd.f32 %v3937, 1e-06
          %v3954 = vadd.f32 %v3938, 1e-06
          %v3955 = vadd.f32 %v3939, 1e-06
          %v3956 = vmul.f32 %v3940, %v3940
          %v3957 = vmul.f32 %v3941, %v3941
          %v3958 = vmul.f32 %v3942, %v3942
          %v3959 = vmul.f32 %v3943, %v3943
          %v3960 = vmul.f32 %v3944, %v3944
          %v3961 = vmul.f32 %v3945, %v3945
          %v3962 = vmul.f32 %v3946, %v3946
          %v3963 = vmul.f32 %v3947, %v3947
          %v3964 = vmul.f32 %v3948, %v3948
          %v3965 = vmul.f32 %v3949, %v3949
          %v3966 = vmul.f32 %v3950, %v3950
          %v3967 = vmul.f32 %v3951, %v3951
          %v3968 = vmul.f32 %v3952, %v3952
          %v3969 = vmul.f32 %v3953, %v3953
          %v3970 = vmul.f32 %v3954, %v3954
          %v3971 = vmul.f32 %v3955, %v3955
          %v3972 = vadd.f32 %v3956, %v3957
          %v3973 = vadd.f32 %v3964, %v3965
          %v3974 = vadd.f32 %v3972, %v3958
          %v3975 = vadd.f32 %v3973, %v3966
          %v3976 = vadd.f32 %v3974, %v3959
          %v3977 = vadd.f32 %v3975, %v3967
          %v3978 = vadd.f32 %v3976, %v3960
          %v3979 = vadd.f32 %v3977, %v3968
          %v3980 = vadd.f32 %v3978, %v3961
          %v3981 = vadd.f32 %v3979, %v3969
          %v3982 = vadd.f32 %v3980, %v3962
          %v3983 = vadd.f32 %v3981, %v3970
          %v3984 = vadd.f32 %v3982, %v3963
          %v3985 = vadd.f32 %v3983, %v3971
          %v3986 = vrsqrt.pop %v3984
          %v3987 = vmul.f32 %v3986, %v3984
          %v3988 = vmul.f32 %v3987, %v3986
          %v3989 = vmul.f32 0.5, %v3988
          %v3990 = vsub.f32 1.5, %v3989
          %v3991 = vmul.f32 %v3986, %v3990
          %v3992 = vmul.f32 %v3984, %v3991
          %vm3993 = vcmp.eq.f32.partialorder %v3984, inf
          %v3994 = vsel %vm3993, %v3984, %v3992
          %vm3995 = vcmp.eq.f32.partialorder %v3984, 0.0
          %v3996 = vand.u32 %v3984, 2147483648
          %v3997 = vsel %vm3995, %v3996, %v3994
          %v3998 = vrsqrt.pop %v3985
          %v3999 = vmul.f32 %v3998, %v3985
          %v4000 = vmul.f32 %v3999, %v3998
          %v4001 = vmul.f32 0.5, %v4000
          %v4002 = vsub.f32 1.5, %v4001
          %v4003 = vmul.f32 %v3998, %v4002
          %v4004 = vmul.f32 %v3985, %v4003
          %vm4005 = vcmp.eq.f32.partialorder %v3985, inf
          %v4006 = vsel %vm4005, %v3985, %v4004
          %vm4007 = vcmp.eq.f32.partialorder %v3985, 0.0
          %v4008 = vand.u32 %v3985, 2147483648
          %v4009 = vsel %vm4007, %v4008, %v4006
          %4010 = vst [vmem:[%s193] sm:$0xff] %v3997
          %4011 = vst [vmem:[%s193 + $0x8] sm:$0xff] %v4009
        $region36: #{pa_forward.1} parent=31 // pred_fallthru
          _
        %4012 = vst [vmem:[#allocation2] sm:$0xff] %v3888
        %4013 = vst [vmem:[#allocation2 + $0x8] sm:$0xff] %v3889
        %4014 = vst [vmem:[#allocation2 + $0x10] sm:$0xff] %v3890
        %4015 = vst [vmem:[#allocation2 + $0x18] sm:$0xff] %v3891
        %4016 = vst [vmem:[#allocation2 + $0x20] sm:$0xff] %v3892
        %4017 = vst [vmem:[#allocation2 + $0x28] sm:$0xff] %v3893
        %4018 = vst [vmem:[#allocation2 + $0x30] sm:$0xff] %v3894
        %4019 = vst [vmem:[#allocation2 + $0x38] sm:$0xff] %v3895
        %4020 = vst [vmem:[#allocation2 + $0x40] sm:$0xff] %v3896
        %4021 = vst [vmem:[#allocation2 + $0x48] sm:$0xff] %v3897
        %4022 = vst [vmem:[#allocation2 + $0x50] sm:$0xff] %v3898
        %4023 = vst [vmem:[#allocation2 + $0x58] sm:$0xff] %v3899
        %4024 = vst [vmem:[#allocation2 + $0x60] sm:$0xff] %v3900
        %4025 = vst [vmem:[#allocation2 + $0x68] sm:$0xff] %v3901
        %4026 = vst [vmem:[#allocation2 + $0x70] sm:$0xff] %v3902
        %4027 = vst [vmem:[#allocation2 + $0x78] sm:$0xff] %v3903
        %s4028 = sand.u32 %s115, 1
        %s4029 = scalar_lea.sflag [#allocation4], %s4028
        %s4030 = sand.u32 %s115, 1
        %s4031 = smul.addr %s4030, 16
        %s4032 = scalar_lea.vmem [#allocation3], %s4031
        // Predicated region
        $region37: #{pa_forward.1} parent=31 // pred_check
          %p4033 = pneg %p125
        $region38: #{pa_forward.1} parent=31 // pred_check_branch
          %4035 = sbr.rel (%p4033) target = $region40
        $region39: #{pa_forward.1} parent=31 // pred_region
          %s4036 = ssub.s32 %s22, 1
          %p4037 = scmp.gt.s32.totalorder %s4036, 0
          %s4038 = scalar_select %p4037, %s4036, 0
          %4040 = vsyncadd %s4029, 0
          %s4041 = smul.addr %s4038, 2
          %s4042 = smul.addr %s21, 6
          %s4043 = sadd.s32 %s4041, %s4042
          %s4044 = smul.addr %s4043, 8
          %s4045 = scalar_lea.hbm %s3, %s4044
          %s4046 = sshll.u32 %s4032, 4
          %s4047 = int_to_ptr.vmem [resolvable:$true] %s4046
          %s4048 = sshll.u32 %s4045, 4
          %s4049 = int_to_ptr.hbm [resolvable:$true] %s4048
          %4054 = dma.vmem_to_hbm [thread:$0]  %s4047, 256, %s4049, %s4029, 128, 128, 8
        $region40: #{pa_forward.1} parent=31 // pred_fallthru
          _
      $region32: #{pa_forward.1} parent=5 // pred_fallthru
        _
      %p4055 = scmp.le.s32.totalorder 2, %s12
      // Predicated region
      $region41: #{pa_forward.1} parent=5 // pred_check
        %p4056 = pneg %p4055
      $region42: #{pa_forward.1} parent=5 // pred_check_branch
        %4058 = sbr.rel (%p4056) target = $region44
      $region43: #{pa_forward.1} parent=5 // pred_region
        %s4059 = ssub.s32 %s12, 2
        // Predicated region
        $region45: #{pa_forward.1} parent=43 // pred_check
          %p4060 = pneg %p131
        $region46: #{pa_forward.1} parent=43 // pred_check_branch
          %4062 = sbr.rel (%p4060) target = $region48
        $region47: #{pa_forward.1} parent=43 // pred_region
          %s4063 = sand.u32 %s116, 1
          %s4064 = scalar_lea.sflag [#allocation4], %s4063
          %s4065 = sand.u32 %s116, 1
          %s4066 = smul.addr %s4065, 16
          %s4067 = scalar_lea.vmem [#allocation3], %s4066
          %4069 = dma.done %s4064, 256
        $region48: #{pa_forward.1} parent=43 // pred_fallthru
          _
      $region44: #{pa_forward.1} parent=5 // pred_fallthru
        _
    $region6: #{pa_forward.1} parent=1 // loop_footer
      %s16 = sadd.s32 1, %s12
    $region7: #{pa_forward.1} parent=1 // loop_footer_branch
      %11 = sbr.rel target = $region3
    $region8: #{pa_forward.1} parent=1 // loop_exit
      _
    %4070 = vsyncpa [#allocation4], 1
    %s4071 = scalar_lea.sflag [#allocation4], 1
    %4072 = vsyncpa %s4071, 1

</llo_original>
